<compile_context>
chip_gen: v7x
topology: tpu7x:2x2x1
jax: 0.10.0
libtpu: 0.0.40
codegen_flags: <defaults>
</compile_context>

<pallas_src>
import jax
import jax.numpy as jnp
from jax import lax
from jax.experimental import pallas as pl
from jax.experimental.pallas import tpu as pltpu  # noqa: F401  (TPU Pallas backend)

# ----------------------------- config (small, synthetic) -----------------------------
HIDDEN_DIM = 32       # cfg.hidden_dim
OUTPUT_DIM = 32       # cfg.output_dim
BLOCKS = 4            # cfg.blocks (compatibility-feature width appended before overlap head)
VOXEL_SIZE = 0.1      # cfg.voxel_size
SIGMA_R = 0.2         # cfg.sigma_r
LOCAL_MATCHING_RADIUS = 0.3
LEAKY_SLOPE = 0.1     # UnaryBlock LeakyReLU slope
N_REF = 16            # ref coarse nodes
N_SRC = 16            # src coarse nodes (kernel assumes N_REF == N_SRC)

# ---- packed head-parameter slab layout (rows 8-aligned, 128 lanes) ----
PCOL_W1F = 0                                # rows 0:H,  cols 0:H        W1 (feats part)
PCOL_WP = HIDDEN_DIM                        # rows 0:H,  cols H:H+OUT    out_proj W
PCOL_W2 = HIDDEN_DIM + OUTPUT_DIM           # rows 0:H,  cols 64:96      W2
PCOL_W3 = PCOL_W2 + HIDDEN_DIM              # rows 0:H,  col  96         W3
PROW_W1C = HIDDEN_DIM                       # rows 32:36, cols 0:H       W1 (compat part)
PROW_B = 40                                 # row 40: [b1 | bp | b2 | b3]
PARAM_ROWS = 48
PARAM_COLS = 128

# ---- packed output slab layout ([2N, 128]; matching-chain rows live in the top N_REF) ----
SLAB_W = 128
L_FEAT = 0                                  # cols 0:OUT      out_proj feats (ref top, src bottom)
L_OVL = OUTPUT_DIM                          # col  32         sigmoid overlap score
L_GT = 64                                   # cols 64:80      gt patch overlap        (top rows)
L_SCORE = L_GT + N_SRC                      # cols 80:96      gated matching scores   (top rows)
L_MUT = L_SCORE + N_SRC                     # cols 96:112     mutual-argmax mask      (top rows)
L_W = L_MUT + N_SRC                         # col  112        SM correspondence weight(top rows)
L_XYZ = L_W + 1                             # cols 113:116    gathered src corres xyz (top rows)


# ----------------------------- the fused Pallas kernel -----------------------------
def cast_fused_kernel(x_ref, c_ref, ref_ref, srcT_ref, gt_ref, p_ref, o_ref):
    """Heads + full coarse matching chain in one kernel.

    x_ref    [2N, H]   transformer feats, ref rows then src rows
    c_ref    [2N, B]   compatibility feats, same stacking
    ref_ref  [Nr, 3]   ref coarse nodes
    srcT_ref [3, Ns]   src coarse nodes, pre-transposed
    gt_ref   [4, 4]    gt transform (rot | t)
    p_ref    [48,128]  packed head parameters
    o_ref    [2N,128]  packed output slab (see L_* layout above)
    """
    n_r = ref_ref.shape[0]
    n_s = srcT_ref.shape[1]
    H, O, B = HIDDEN_DIM, OUTPUT_DIM, BLOCKS

    # ---------------- heads: out_proj + overlap head (ref/src stacked along rows) --------
    # TODO(synk): UnaryBlock's normalization layer is omitted (weights unavailable).
    x = x_ref[...]                                                   # [2N, H]
    w_x = p_ref[0:H, 0:H + O]                                        # [H, H+O] = [W1f | Wp]
    b_x = p_ref[PROW_B:PROW_B + 1, 0:H + O]                          # [1, H+O] = [b1  | bp]
    w1c = p_ref[PROW_W1C:PROW_W1C + B, 0:H]                          # [B, H]
    w2 = p_ref[0:H, PCOL_W2:PCOL_W2 + H]                             # [H, H]
    b2 = p_ref[PROW_B:PROW_B + 1, PCOL_W2:PCOL_W2 + H]               # [1, H]
    w3 = p_ref[0:H, PCOL_W3:PCOL_W3 + 1]                             # [H, 1]
    b3 = p_ref[PROW_B:PROW_B + 1, PCOL_W3:PCOL_W3 + 1]               # [1, 1]

    xw = jnp.dot(x, w_x, preferred_element_type=jnp.float32) + b_x   # one fused x-matmul
    fc = xw[:, H:H + O]                                              # out_proj output [2N, O]
    h = xw[:, 0:H] + jnp.dot(c_ref[...], w1c, preferred_element_type=jnp.float32)
    h = jnp.maximum(h, LEAKY_SLOPE * h)
    h = jnp.dot(h, w2, preferred_element_type=jnp.float32) + b2
    h = jnp.maximum(h, LEAKY_SLOPE * h)
    ov = jax.nn.sigmoid(
        jnp.dot(h, w3, preferred_element_type=jnp.float32) + b3)     # [2N, 1]

    rf = fc[0:n_r, :]                                                # ref out_proj feats
    sf = fc[n_r:, :]                                                 # src out_proj feats
    rovl = ov[0:n_r, :]                                              # [Nr, 1]
    sovl = ov[n_r:, :]                                               # [Ns, 1]

    # ---------------- gt patch overlap: relu(1 + d^3/16 - 0.75 d), d = min(cdist/sigma, 2)
    ref = ref_ref[...]                                               # [Nr, 3]
    src_t = srcT_ref[...]                                            # [3, Ns]
    gt = gt_ref[...]
    rot = gt[0:3, 0:3]
    tcol = gt[0:3, 3:4]
    warped_t = jnp.dot(rot, src_t, preferred_element_type=jnp.float32) + tcol   # [3, Ns]
    rsq = jnp.sum(ref * ref, axis=-1, keepdims=True)                            # [Nr, 1]
    ssq = jnp.sum(warped_t * warped_t, axis=0, keepdims=True)                   # [1, Ns]
    cross = jnp.dot(ref, warped_t, preferred_element_type=jnp.float32)          # [Nr, Ns]
    d = jnp.sqrt(jnp.maximum(rsq + ssq - 2.0 * cross, 0.0))
    d = jnp.minimum(d * (1.0 / SIGMA_R), 2.0)
    gt_overlap = jnp.maximum(1.0 + d * d * d * (1.0 / 16.0) - 0.75 * d, 0.0)

    # ---------------- coarse matching scores gated by the overlap heads
    # TODO(synk): exact SpotGuidedGeoTransformer.matching_scores is unavailable;
    # GeoTransformer-style exp(-||r - s||^2) on L2-normalized features is used.
    rf_n = rf * lax.rsqrt(jnp.maximum(jnp.sum(rf * rf, -1, keepdims=True), 1e-24))
    sf_n = sf * lax.rsqrt(jnp.maximum(jnp.sum(sf * sf, -1, keepdims=True), 1e-24))
    cos = lax.dot_general(rf_n, sf_n, (((1,), (1,)), ((), ())),
                          preferred_element_type=jnp.float32)                   # [Nr, Ns]
    scores = jnp.exp(-jnp.maximum(2.0 - 2.0 * cos, 0.0))

    # eye is used (a) to turn the src-overlap column into a row without a transpose and
    # (b) once per self_dist for the row-diagonal.  Requires n_r == n_s (asserted in wrapper).
    eye = (lax.broadcasted_iota(jnp.int32, (n_s, n_s), 0) ==
           lax.broadcasted_iota(jnp.int32, (n_s, n_s), 1)).astype(jnp.float32)
    sovl_row = jnp.sum(sovl * eye, axis=0, keepdims=True)                       # [1, Ns]
    scores = scores * rovl * sovl_row

    # ---------------- mutual-max matching mask (first-occurrence argmax per row / column)
    ci = lax.broadcasted_iota(jnp.int32, (n_r, n_s), 1).astype(jnp.float32)
    ri = lax.broadcasted_iota(jnp.int32, (n_r, n_s), 0).astype(jnp.float32)
    rowmax = jnp.max(scores, axis=1, keepdims=True)
    colmax = jnp.max(scores, axis=0, keepdims=True)
    row_arg = jnp.min(jnp.where(scores >= rowmax, ci, float(n_s)), axis=1, keepdims=True)
    col_arg = jnp.min(jnp.where(scores >= colmax, ri, float(n_r)), axis=0, keepdims=True)
    row_onehot = (ci == row_arg).astype(jnp.float32)      # exactly one per row
    col_onehot = (ri == col_arg).astype(jnp.float32)      # exactly one per column
    mutual = row_onehot * col_onehot

    # ---------------- fixed-size correspondences: every ref node pairs with argmax src node
    # TODO(synk): torch picks variable-length mutual matches via nonzero(); here the SM
    # weighting below down-weights the non-mutual pairs instead.
    src_corres = lax.dot_general(row_onehot, src_t, (((1,), (1,)), ((), ())),
                                 preferred_element_type=jnp.float32)            # [Nr, 3]

    # ---------------- SM filter: SC = relu(1 - ((cdist(ref,ref) - cdist(src,src))/voxel)^2)
    def self_dist(a):                                      # no transposes, one eye reduce
        gram = lax.dot_general(a, a, (((1,), (1,)), ((), ())),
                               preferred_element_type=jnp.float32)              # [K, K]
        dcol = jnp.sum(a * a, axis=-1, keepdims=True)                           # [K, 1]
        drow = jnp.sum(gram * eye, axis=0, keepdims=True)                       # [1, K]
        return jnp.sqrt(jnp.maximum(dcol + drow - 2.0 * gram, 0.0))

    sc = self_dist(ref) - self_dist(src_corres)
    m = jnp.maximum(1.0 - jnp.square(sc * (1.0 / VOXEL_SIZE)), 0.0)             # [K, K]

    # Leading eigenvector: direction of M^10 @ 1 (== 10 normalized power-iteration steps).
    # Intermediate rescalings removed: entries in [0,1], K=16 keeps M^10 @ 1 (and its
    # squared norm) well inside f32 range; only the final rsqrt normalization remains.
    # TODO(synk): torch's allclose() early break is data-dependent and is skipped.
    m2 = jnp.dot(m, m, preferred_element_type=jnp.float32)
    m4 = jnp.dot(m2, m2, preferred_element_type=jnp.float32)
    m8 = jnp.dot(m4, m4, preferred_element_type=jnp.float32)
    v = jnp.dot(m2, jnp.ones((n_r, 1), jnp.float32), preferred_element_type=jnp.float32)
    v = jnp.dot(m8, v, preferred_element_type=jnp.float32)
    v = v * lax.rsqrt(jnp.maximum(jnp.sum(v * v), 1e-24))                       # [K, 1]

    # ---------------- pack outputs into the single lane-dense slab
    o_ref[...] = jnp.zeros_like(o_ref)
    o_ref[:, L_FEAT:L_FEAT + O] = fc
    o_ref[:, L_OVL:L_OVL + 1] = ov
    o_ref[0:n_r, L_GT:L_GT + n_s] = gt_overlap
    o_ref[0:n_r, L_SCORE:L_SCORE + n_s] = scores
    o_ref[0:n_r, L_MUT:L_MUT + n_s] = mutual
    o_ref[0:n_r, L_W:L_W + 1] = v
    o_ref[0:n_r, L_XYZ:L_XYZ + 3] = src_corres


# ----------------------------- JAX glue -----------------------------
def apply_transform(points, transform):
    r = transform[:3, :3]
    t = transform[:3, 3]
    return points @ r.T + t


def weighted_svd(src_xyz, ref_xyz, weights):
    # Covariance in plain jnp (~150 FLOPs, not worth a pallas_call); 3x3 SVD + transform
    # assembly stay in JAX.
    w = weights.reshape(-1, 1)
    wsum = jnp.maximum(jnp.sum(w), 1e-8)
    src_c = jnp.sum(w * src_xyz, axis=0, keepdims=True) / wsum   # [1,3]
    ref_c = jnp.sum(w * ref_xyz, axis=0, keepdims=True) / wsum   # [1,3]
    h = (w * (src_xyz - src_c)).T @ (ref_xyz - ref_c)            # [3,3]
    u, _, vt = jnp.linalg.svd(h)
    v = vt.T
    sgn = jnp.sign(jnp.linalg.det(v @ u.T))
    d = jnp.diag(jnp.array([1.0, 1.0, 0.0], jnp.float32)) + \
        sgn * jnp.diag(jnp.array([0.0, 0.0, 1.0], jnp.float32))
    r = v @ d @ u.T
    t = ref_c[0] - r @ src_c[0]
    return jnp.eye(4, dtype=jnp.float32).at[:3, :3].set(r).at[:3, 3].set(t)


@jax.jit
def cast_forward(ref_nodes, src_nodes, ref_feats, src_feats,
                 ref_compat, src_compat, gt_transform, params):
    out = {"gt_transform": gt_transform}
    n_ref = ref_nodes.shape[0]
    n_src = src_nodes.shape[0]
    assert n_ref == n_src, "fused kernel slab layout assumes equal coarse-node counts"
    assert n_src == N_SRC, "output-slab lane offsets are derived from N_SRC"

    # ---- single fused pallas_call: heads + matching chain, one HBM output slab
    feats_all = jnp.concatenate([ref_feats, src_feats], axis=0)      # [2N, H]
    compat_all = jnp.concatenate([ref_compat, src_compat], axis=0)   # [2N, B]
    src_nodes_t = src_nodes.T                                        # wrapper-side transpose
    slab = pl.pallas_call(
        cast_fused_kernel,
        out_shape=jax.ShapeDtypeStruct((n_ref + n_src, SLAB_W), jnp.float32),
    )(feats_all, compat_all, ref_nodes, src_nodes_t, gt_transform, params["head_slab"])

    ref_feats_c = slab[:n_ref, L_FEAT:L_FEAT + OUTPUT_DIM]
    src_feats_c = slab[n_ref:, L_FEAT:L_FEAT + OUTPUT_DIM]
    out["ref_patch_overlap"] = slab[:n_ref, L_OVL]
    out["src_patch_overlap"] = slab[n_ref:, L_OVL]
    out["ref_feats_c"] = ref_feats_c
    out["src_feats_c"] = src_feats_c

    gt_overlap = slab[:n_ref, L_GT:L_GT + n_src]
    matching_scores = slab[:n_ref, L_SCORE:L_SCORE + n_src]
    mutual_mask = slab[:n_ref, L_MUT:L_MUT + n_src]
    corr_weight = slab[:n_ref, L_W]
    src_corres_xyz = slab[:n_ref, L_XYZ:L_XYZ + 3]
    ref_corres_xyz = ref_nodes

    out["gt_patch_corr_overlaps"] = gt_overlap   # TODO(synk): dynamic nonzero() indices omitted
    out["coarse_matching_scores"] = matching_scores
    out["matching_mask"] = mutual_mask

    # ---- weighted SVD -> coarse transform
    transform = weighted_svd(src_corres_xyz, ref_corres_xyz, corr_weight)
    out["transform"] = transform

    warped = apply_transform(src_corres_xyz, transform)
    dist = jnp.linalg.norm(warped - ref_corres_xyz, axis=-1)
    corr_weight = corr_weight * (dist < LOCAL_MATCHING_RADIUS).astype(jnp.float32)

    # TODO(synk): FineMatching / descriptor heads are undefined; the refinement loop
    # reuses the coarse correspondences with a fixed 3-iteration re-weighted SVD.
    refined = weighted_svd(warped, ref_corres_xyz, corr_weight)
    for _ in range(3):
        w2 = apply_transform(warped, refined)
        l2 = jnp.linalg.norm(w2 - ref_corres_xyz, axis=-1)
        inlier = (l2 < VOXEL_SIZE * 1.5).astype(jnp.float32)
        rw = 1.0 / (1.0 + jnp.square(l2 / (VOXEL_SIZE * 1.5))) * inlier
        refined = weighted_svd(warped, ref_corres_xyz, rw)
    out["refined_transform"] = refined @ transform
    return out


# ----------------------------- parameter init (packed slab) -----------------------------
def init_params(key):
    ks = jax.random.split(key, 9)
    scale = 0.1
    w1f = scale * jax.random.normal(ks[0], (HIDDEN_DIM, HIDDEN_DIM), jnp.float32)
    w1c = scale * jax.random.normal(ks[1], (BLOCKS, HIDDEN_DIM), jnp.float32)
    b1 = scale * jax.random.normal(ks[2], (1, HIDDEN_DIM), jnp.float32)
    w2 = scale * jax.random.normal(ks[3], (HIDDEN_DIM, HIDDEN_DIM), jnp.float32)
    b2 = scale * jax.random.normal(ks[4], (1, HIDDEN_DIM), jnp.float32)
    w3 = scale * jax.random.normal(ks[5], (HIDDEN_DIM, 1), jnp.float32)
    b3 = scale * jax.random.normal(ks[6], (1, 1), jnp.float32)
    wp = scale * jax.random.normal(ks[7], (HIDDEN_DIM, OUTPUT_DIM), jnp.float32)
    bp = scale * jax.random.normal(ks[8], (1, OUTPUT_DIM), jnp.float32)

    slab = jnp.zeros((PARAM_ROWS, PARAM_COLS), jnp.float32)
    slab = slab.at[0:HIDDEN_DIM, PCOL_W1F:PCOL_W1F + HIDDEN_DIM].set(w1f)
    slab = slab.at[0:HIDDEN_DIM, PCOL_WP:PCOL_WP + OUTPUT_DIM].set(wp)
    slab = slab.at[0:HIDDEN_DIM, PCOL_W2:PCOL_W2 + HIDDEN_DIM].set(w2)
    slab = slab.at[0:HIDDEN_DIM, PCOL_W3:PCOL_W3 + 1].set(w3)
    slab = slab.at[PROW_W1C:PROW_W1C + BLOCKS, 0:HIDDEN_DIM].set(w1c)
    slab = slab.at[PROW_B, PCOL_W1F:PCOL_W1F + HIDDEN_DIM].set(b1[0])
    slab = slab.at[PROW_B, PCOL_WP:PCOL_WP + OUTPUT_DIM].set(bp[0])
    slab = slab.at[PROW_B, PCOL_W2:PCOL_W2 + HIDDEN_DIM].set(b2[0])
    slab = slab.at[PROW_B, PCOL_W3].set(b3[0, 0])
    return {"head_slab": slab}


if __name__ == "__main__":
    key = jax.random.PRNGKey(0)
    k_pts, k_feat, k_noise, k_compat, k_par = jax.random.split(key, 5)

    # synthetic coarse nodes / features (stand-ins for KPConvFPN + transformer outputs)
    ref_nodes = jax.random.uniform(k_pts, (N_REF, 3), jnp.float32)
    theta = 0.3
    rot = jnp.array([[jnp.cos(theta), -jnp.sin(theta), 0.0],
                     [jnp.sin(theta),  jnp.cos(theta), 0.0],
                     [0.0, 0.0, 1.0]], jnp.float32)
    trans = jnp.array([0.05, -0.03, 0.02], jnp.float32)
    gt_transform = jnp.eye(4, dtype=jnp.float32).at[:3, :3].set(rot).at[:3, 3].set(trans)
    # gt_transform maps src -> ref, so build src = R^T (ref - t)
    src_nodes = (ref_nodes - trans) @ rot

    ref_feats = jax.random.normal(k_feat, (N_REF, HIDDEN_DIM), jnp.float32)
    src_feats = ref_feats + 0.05 * jax.random.normal(k_noise, (N_SRC, HIDDEN_DIM), jnp.float32)
    kc1, kc2 = jax.random.split(k_compat)
    ref_compat = jax.random.normal(kc1, (N_REF, BLOCKS), jnp.float32)
    src_compat = jax.random.normal(kc2, (N_SRC, BLOCKS), jnp.float32)

    params = init_params(k_par)

    out = cast_forward(ref_nodes, src_nodes, ref_feats, src_feats,
                       ref_compat, src_compat, gt_transform, params)
    jax.block_until_ready(out)
    print("KERNEL_OK")
</pallas_src>

<mosaic_0001>
module attributes {stable_mosaic.version = 11 : i64} {
  func.func @cast_fused_kernel(%arg0: memref<32x32xf32, #tpu.memory_space<vmem>>, %arg1: memref<32x4xf32, #tpu.memory_space<vmem>>, %arg2: memref<16x3xf32, #tpu.memory_space<vmem>>, %arg3: memref<3x16xf32, #tpu.memory_space<vmem>>, %arg4: memref<4x4xf32, #tpu.memory_space<vmem>>, %arg5: memref<48x128xf32, #tpu.memory_space<vmem>>, %arg6: memref<32x128xf32, #tpu.memory_space<vmem>>) attributes {dimension_semantics = [], scalar_prefetch = 0 : i64, scratch_operands = 0 : i64, tpu.core_type = #tpu.core_type<tc>} {
    %c0 = arith.constant 0 : index
    %c0_0 = arith.constant 0 : index
    %0 = vector.load %arg0[%c0, %c0_0] : memref<32x32xf32, #tpu.memory_space<vmem>>, vector<32x32xf32>
    %c0_1 = arith.constant 0 : index
    %c0_2 = arith.constant 0 : index
    %1 = vector.load %arg5[%c0_1, %c0_2] : memref<48x128xf32, #tpu.memory_space<vmem>>, vector<32x64xf32>
    %c40 = arith.constant 40 : index
    %c0_3 = arith.constant 0 : index
    %2 = vector.load %arg5[%c40, %c0_3] : memref<48x128xf32, #tpu.memory_space<vmem>>, vector<1x64xf32>
    %c32 = arith.constant 32 : index
    %c0_4 = arith.constant 0 : index
    %3 = vector.load %arg5[%c32, %c0_4] : memref<48x128xf32, #tpu.memory_space<vmem>>, vector<4x32xf32>
    %c0_5 = arith.constant 0 : index
    %c64 = arith.constant 64 : index
    %4 = vector.load %arg5[%c0_5, %c64] : memref<48x128xf32, #tpu.memory_space<vmem>>, vector<32x32xf32>
    %c40_6 = arith.constant 40 : index
    %c64_7 = arith.constant 64 : index
    %5 = vector.load %arg5[%c40_6, %c64_7] : memref<48x128xf32, #tpu.memory_space<vmem>>, vector<1x32xf32>
    %c0_8 = arith.constant 0 : index
    %c96 = arith.constant 96 : index
    %6 = vector.load %arg5[%c0_8, %c96] : memref<48x128xf32, #tpu.memory_space<vmem>>, vector<32x1xf32>
    %c40_9 = arith.constant 40 : index
    %c96_10 = arith.constant 96 : index
    %7 = vector.load %arg5[%c40_9, %c96_10] : memref<48x128xf32, #tpu.memory_space<vmem>>, vector<1x1xf32>
    %cst = arith.constant dense<0.000000e+00> : vector<32x64xf32>
    %8 = tpu.matmul %0, %1, %cst {dimension_numbers = #tpu.dot_dimension_numbers<[1], [0], [0], [1], [0, 0, 1, 1], [], []>} : vector<32x32xf32>, vector<32x64xf32>, vector<32x64xf32> -> vector<32x64xf32>
    %9 = vector.broadcast %2 : vector<1x64xf32> to vector<32x64xf32>
    %10 = arith.addf %8, %9 : vector<32x64xf32>
    %11 = vector.extract_strided_slice %10 {offsets = [0, 32], sizes = [32, 32], strides = [1, 1]} : vector<32x64xf32> to vector<32x32xf32>
    %12 = vector.extract_strided_slice %10 {offsets = [0, 0], sizes = [32, 32], strides = [1, 1]} : vector<32x64xf32> to vector<32x32xf32>
    %c0_11 = arith.constant 0 : index
    %c0_12 = arith.constant 0 : index
    %13 = vector.load %arg1[%c0_11, %c0_12] : memref<32x4xf32, #tpu.memory_space<vmem>>, vector<32x4xf32>
    %cst_13 = arith.constant dense<0.000000e+00> : vector<32x32xf32>
    %14 = tpu.matmul %13, %3, %cst_13 {dimension_numbers = #tpu.dot_dimension_numbers<[1], [0], [0], [1], [0, 0, 1, 1], [], []>} : vector<32x4xf32>, vector<4x32xf32>, vector<32x32xf32> -> vector<32x32xf32>
    %15 = arith.addf %12, %14 : vector<32x32xf32>
    %cst_14 = arith.constant 1.000000e-01 : f32
    %16 = vector.broadcast %cst_14 : f32 to vector<32x32xf32>
    %17 = arith.mulf %16, %15 : vector<32x32xf32>
    %18 = arith.maximumf %15, %17 : vector<32x32xf32>
    %cst_15 = arith.constant dense<0.000000e+00> : vector<32x32xf32>
    %19 = tpu.matmul %18, %4, %cst_15 {dimension_numbers = #tpu.dot_dimension_numbers<[1], [0], [0], [1], [0, 0, 1, 1], [], []>} : vector<32x32xf32>, vector<32x32xf32>, vector<32x32xf32> -> vector<32x32xf32>
    %20 = vector.broadcast %5 : vector<1x32xf32> to vector<32x32xf32>
    %21 = arith.addf %19, %20 : vector<32x32xf32>
    %cst_16 = arith.constant 1.000000e-01 : f32
    %22 = vector.broadcast %cst_16 : f32 to vector<32x32xf32>
    %23 = arith.mulf %22, %21 : vector<32x32xf32>
    %24 = arith.maximumf %21, %23 : vector<32x32xf32>
    %cst_17 = arith.constant dense<0.000000e+00> : vector<32x1xf32>
    %25 = tpu.matmul %24, %6, %cst_17 {dimension_numbers = #tpu.dot_dimension_numbers<[1], [0], [0], [1], [0, 0, 1, 1], [], []>} : vector<32x32xf32>, vector<32x1xf32>, vector<32x1xf32> -> vector<32x1xf32>
    %26 = vector.broadcast %7 : vector<1x1xf32> to vector<32x1xf32>
    %27 = arith.addf %25, %26 : vector<32x1xf32>
    %28 = arith.negf %27 : vector<32x1xf32>
    %29 = math.exp %28 : vector<32x1xf32>
    %cst_18 = arith.constant 1.000000e+00 : f32
    %30 = vector.broadcast %cst_18 : f32 to vector<32x1xf32>
    %31 = arith.addf %30, %29 : vector<32x1xf32>
    %32 = arith.divf %30, %31 : vector<32x1xf32>
    %33 = vector.extract_strided_slice %11 {offsets = [0, 0], sizes = [16, 32], strides = [1, 1]} : vector<32x32xf32> to vector<16x32xf32>
    %34 = vector.extract_strided_slice %11 {offsets = [16, 0], sizes = [16, 32], strides = [1, 1]} : vector<32x32xf32> to vector<16x32xf32>
    %35 = vector.extract_strided_slice %32 {offsets = [0, 0], sizes = [16, 1], strides = [1, 1]} : vector<32x1xf32> to vector<16x1xf32>
    %36 = vector.extract_strided_slice %32 {offsets = [16, 0], sizes = [16, 1], strides = [1, 1]} : vector<32x1xf32> to vector<16x1xf32>
    %c0_19 = arith.constant 0 : index
    %c0_20 = arith.constant 0 : index
    %37 = vector.load %arg2[%c0_19, %c0_20] : memref<16x3xf32, #tpu.memory_space<vmem>>, vector<16x3xf32>
    %c0_21 = arith.constant 0 : index
    %c0_22 = arith.constant 0 : index
    %38 = vector.load %arg3[%c0_21, %c0_22] : memref<3x16xf32, #tpu.memory_space<vmem>>, vector<3x16xf32>
    %c0_23 = arith.constant 0 : index
    %c0_24 = arith.constant 0 : index
    %39 = vector.load %arg4[%c0_23, %c0_24] : memref<4x4xf32, #tpu.memory_space<vmem>>, vector<4x4xf32>
    %40 = vector.extract_strided_slice %39 {offsets = [0, 0], sizes = [3, 3], strides = [1, 1]} : vector<4x4xf32> to vector<3x3xf32>
    %41 = vector.extract_strided_slice %39 {offsets = [0, 3], sizes = [3, 1], strides = [1, 1]} : vector<4x4xf32> to vector<3x1xf32>
    %cst_25 = arith.constant dense<0.000000e+00> : vector<3x16xf32>
    %42 = tpu.matmul %40, %38, %cst_25 {dimension_numbers = #tpu.dot_dimension_numbers<[1], [0], [0], [1], [0, 0, 1, 1], [], []>} : vector<3x3xf32>, vector<3x16xf32>, vector<3x16xf32> -> vector<3x16xf32>
    %43 = vector.broadcast %41 : vector<3x1xf32> to vector<3x16xf32>
    %44 = arith.addf %42, %43 : vector<3x16xf32>
    %45 = arith.mulf %37, %37 : vector<16x3xf32>
    %cst_26 = arith.constant dense<0.000000e+00> : vector<16xf32>
    %46 = vector.multi_reduction <add>, %45, %cst_26 [1] : vector<16x3xf32> to vector<16xf32>
    %47 = vector.shape_cast %46 : vector<16xf32> to vector<16x1xf32>
    %48 = arith.mulf %44, %44 : vector<3x16xf32>
    %cst_27 = arith.constant dense<0.000000e+00> : vector<16xf32>
    %49 = vector.multi_reduction <add>, %48, %cst_27 [0] : vector<3x16xf32> to vector<16xf32>
    %50 = vector.shape_cast %49 : vector<16xf32> to vector<1x16xf32>
    %cst_28 = arith.constant dense<0.000000e+00> : vector<16x16xf32>
    %51 = tpu.matmul %37, %44, %cst_28 {dimension_numbers = #tpu.dot_dimension_numbers<[1], [0], [0], [1], [0, 0, 1, 1], [], []>} : vector<16x3xf32>, vector<3x16xf32>, vector<16x16xf32> -> vector<16x16xf32>
    %52 = vector.broadcast %47 : vector<16x1xf32> to vector<16x16xf32>
    %53 = vector.broadcast %50 : vector<1x16xf32> to vector<16x16xf32>
    %54 = arith.addf %52, %53 : vector<16x16xf32>
    %cst_29 = arith.constant 2.000000e+00 : f32
    %55 = vector.broadcast %cst_29 : f32 to vector<16x16xf32>
    %56 = arith.mulf %55, %51 : vector<16x16xf32>
    %57 = arith.subf %54, %56 : vector<16x16xf32>
    %cst_30 = arith.constant 0.000000e+00 : f32
    %58 = vector.broadcast %cst_30 : f32 to vector<16x16xf32>
    %59 = arith.maximumf %57, %58 : vector<16x16xf32>
    %60 = math.sqrt %59 : vector<16x16xf32>
    %cst_31 = arith.constant 5.000000e+00 : f32
    %61 = vector.broadcast %cst_31 : f32 to vector<16x16xf32>
    %62 = arith.mulf %60, %61 : vector<16x16xf32>
    %cst_32 = arith.constant 2.000000e+00 : f32
    %63 = vector.broadcast %cst_32 : f32 to vector<16x16xf32>
    %64 = arith.minimumf %62, %63 : vector<16x16xf32>
    %65 = arith.mulf %64, %64 : vector<16x16xf32>
    %66 = arith.mulf %65, %64 : vector<16x16xf32>
    %cst_33 = arith.constant 6.250000e-02 : f32
    %67 = vector.broadcast %cst_33 : f32 to vector<16x16xf32>
    %68 = arith.mulf %66, %67 : vector<16x16xf32>
    %cst_34 = arith.constant 1.000000e+00 : f32
    %69 = vector.broadcast %cst_34 : f32 to vector<16x16xf32>
    %70 = arith.addf %69, %68 : vector<16x16xf32>
    %cst_35 = arith.constant 7.500000e-01 : f32
    %71 = vector.broadcast %cst_35 : f32 to vector<16x16xf32>
    %72 = arith.mulf %71, %64 : vector<16x16xf32>
    %73 = arith.subf %70, %72 : vector<16x16xf32>
    %cst_36 = arith.constant 0.000000e+00 : f32
    %74 = vector.broadcast %cst_36 : f32 to vector<16x16xf32>
    %75 = arith.maximumf %73, %74 : vector<16x16xf32>
    %76 = arith.mulf %33, %33 : vector<16x32xf32>
    %cst_37 = arith.constant dense<0.000000e+00> : vector<16xf32>
    %77 = vector.multi_reduction <add>, %76, %cst_37 [1] : vector<16x32xf32> to vector<16xf32>
    %78 = vector.shape_cast %77 : vector<16xf32> to vector<16x1xf32>
    %cst_38 = arith.constant 1.000000e-24 : f32
    %79 = vector.broadcast %cst_38 : f32 to vector<16x1xf32>
    %80 = arith.maximumf %78, %79 : vector<16x1xf32>
    %81 = math.rsqrt %80 : vector<16x1xf32>
    %82 = vector.broadcast %81 : vector<16x1xf32> to vector<16x32xf32>
    %83 = arith.mulf %33, %82 : vector<16x32xf32>
    %84 = arith.mulf %34, %34 : vector<16x32xf32>
    %cst_39 = arith.constant dense<0.000000e+00> : vector<16xf32>
    %85 = vector.multi_reduction <add>, %84, %cst_39 [1] : vector<16x32xf32> to vector<16xf32>
    %86 = vector.shape_cast %85 : vector<16xf32> to vector<16x1xf32>
    %cst_40 = arith.constant 1.000000e-24 : f32
    %87 = vector.broadcast %cst_40 : f32 to vector<16x1xf32>
    %88 = arith.maximumf %86, %87 : vector<16x1xf32>
    %89 = math.rsqrt %88 : vector<16x1xf32>
    %90 = vector.broadcast %89 : vector<16x1xf32> to vector<16x32xf32>
    %91 = arith.mulf %34, %90 : vector<16x32xf32>
    %cst_41 = arith.constant dense<0.000000e+00> : vector<16x16xf32>
    %92 = tpu.matmul %83, %91, %cst_41 {dimension_numbers = #tpu.dot_dimension_numbers<[1], [1], [0], [0], [0, 0, 1, 0], [], []>} : vector<16x32xf32>, vector<16x32xf32>, vector<16x16xf32> -> vector<16x16xf32>
    %cst_42 = arith.constant 2.000000e+00 : f32
    %93 = vector.broadcast %cst_42 : f32 to vector<16x16xf32>
    %94 = arith.mulf %93, %92 : vector<16x16xf32>
    %cst_43 = arith.constant 2.000000e+00 : f32
    %95 = vector.broadcast %cst_43 : f32 to vector<16x16xf32>
    %96 = arith.subf %95, %94 : vector<16x16xf32>
    %cst_44 = arith.constant 0.000000e+00 : f32
    %97 = vector.broadcast %cst_44 : f32 to vector<16x16xf32>
    %98 = arith.maximumf %96, %97 : vector<16x16xf32>
    %cst_45 = arith.constant 0.000000e+00 : f32
    %99 = vector.broadcast %cst_45 : f32 to vector<16x16xf32>
    %100 = arith.subf %99, %98 : vector<16x16xf32>
    %101 = math.exp %100 : vector<16x16xf32>
    %102 = tpu.iota {dimensions = array<i32: 0>} : vector<16x16xi32>
    %103 = tpu.iota {dimensions = array<i32: 1>} : vector<16x16xi32>
    %104 = arith.cmpi eq, %102, %103 : vector<16x16xi32>
    %105 = arith.extui %104 : vector<16x16xi1> to vector<16x16xi32>
    %106 = arith.sitofp %105 : vector<16x16xi32> to vector<16x16xf32>
    %107 = vector.broadcast %36 : vector<16x1xf32> to vector<16x16xf32>
    %108 = arith.mulf %107, %106 : vector<16x16xf32>
    %cst_46 = arith.constant dense<0.000000e+00> : vector<16xf32>
    %109 = vector.multi_reduction <add>, %108, %cst_46 [0] : vector<16x16xf32> to vector<16xf32>
    %110 = vector.shape_cast %109 : vector<16xf32> to vector<1x16xf32>
    %111 = vector.broadcast %35 : vector<16x1xf32> to vector<16x16xf32>
    %112 = arith.mulf %101, %111 : vector<16x16xf32>
    %113 = vector.broadcast %110 : vector<1x16xf32> to vector<16x16xf32>
    %114 = arith.mulf %112, %113 : vector<16x16xf32>
    %115 = tpu.iota {dimensions = array<i32: 1>} : vector<16x16xi32>
    %116 = arith.sitofp %115 : vector<16x16xi32> to vector<16x16xf32>
    %117 = tpu.iota {dimensions = array<i32: 0>} : vector<16x16xi32>
    %118 = arith.sitofp %117 : vector<16x16xi32> to vector<16x16xf32>
    %cst_47 = arith.constant dense<0xFF800000> : vector<16xf32>
    %119 = vector.multi_reduction <maximumf>, %114, %cst_47 [1] : vector<16x16xf32> to vector<16xf32>
    %120 = vector.shape_cast %119 : vector<16xf32> to vector<16x1xf32>
    %cst_48 = arith.constant dense<0xFF800000> : vector<16xf32>
    %121 = vector.multi_reduction <maximumf>, %114, %cst_48 [0] : vector<16x16xf32> to vector<16xf32>
    %122 = vector.shape_cast %121 : vector<16xf32> to vector<1x16xf32>
    %123 = vector.broadcast %120 : vector<16x1xf32> to vector<16x16xf32>
    %124 = arith.cmpf oge, %114, %123 : vector<16x16xf32>
    %cst_49 = arith.constant 1.600000e+01 : f32
    %125 = vector.broadcast %cst_49 : f32 to vector<16x16xf32>
    %126 = arith.select %124, %116, %125 : vector<16x16xi1>, vector<16x16xf32>
    %cst_50 = arith.constant dense<0x7F800000> : vector<16xf32>
    %127 = vector.multi_reduction <minimumf>, %126, %cst_50 [1] : vector<16x16xf32> to vector<16xf32>
    %128 = vector.shape_cast %127 : vector<16xf32> to vector<16x1xf32>
    %129 = vector.broadcast %122 : vector<1x16xf32> to vector<16x16xf32>
    %130 = arith.cmpf oge, %114, %129 : vector<16x16xf32>
    %cst_51 = arith.constant 1.600000e+01 : f32
    %131 = vector.broadcast %cst_51 : f32 to vector<16x16xf32>
    %132 = arith.select %130, %118, %131 : vector<16x16xi1>, vector<16x16xf32>
    %cst_52 = arith.constant dense<0x7F800000> : vector<16xf32>
    %133 = vector.multi_reduction <minimumf>, %132, %cst_52 [0] : vector<16x16xf32> to vector<16xf32>
    %134 = vector.shape_cast %133 : vector<16xf32> to vector<1x16xf32>
    %135 = vector.broadcast %128 : vector<16x1xf32> to vector<16x16xf32>
    %136 = arith.cmpf oeq, %116, %135 : vector<16x16xf32>
    %137 = arith.extui %136 : vector<16x16xi1> to vector<16x16xi32>
    %138 = arith.sitofp %137 : vector<16x16xi32> to vector<16x16xf32>
    %139 = vector.broadcast %134 : vector<1x16xf32> to vector<16x16xf32>
    %140 = arith.cmpf oeq, %118, %139 : vector<16x16xf32>
    %141 = arith.extui %140 : vector<16x16xi1> to vector<16x16xi32>
    %142 = arith.sitofp %141 : vector<16x16xi32> to vector<16x16xf32>
    %143 = arith.mulf %138, %142 : vector<16x16xf32>
    %cst_53 = arith.constant dense<0.000000e+00> : vector<16x3xf32>
    %144 = tpu.matmul %138, %38, %cst_53 {dimension_numbers = #tpu.dot_dimension_numbers<[1], [1], [0], [0], [0, 0, 1, 0], [], []>} : vector<16x16xf32>, vector<3x16xf32>, vector<16x3xf32> -> vector<16x3xf32>
    %cst_54 = arith.constant dense<0.000000e+00> : vector<16x16xf32>
    %145 = tpu.matmul %37, %37, %cst_54 {dimension_numbers = #tpu.dot_dimension_numbers<[1], [1], [0], [0], [0, 0, 1, 0], [], []>} : vector<16x3xf32>, vector<16x3xf32>, vector<16x16xf32> -> vector<16x16xf32>
    %146 = arith.mulf %37, %37 : vector<16x3xf32>
    %cst_55 = arith.constant dense<0.000000e+00> : vector<16xf32>
    %147 = vector.multi_reduction <add>, %146, %cst_55 [1] : vector<16x3xf32> to vector<16xf32>
    %148 = vector.shape_cast %147 : vector<16xf32> to vector<16x1xf32>
    %149 = arith.mulf %145, %106 : vector<16x16xf32>
    %cst_56 = arith.constant dense<0.000000e+00> : vector<16xf32>
    %150 = vector.multi_reduction <add>, %149, %cst_56 [0] : vector<16x16xf32> to vector<16xf32>
    %151 = vector.shape_cast %150 : vector<16xf32> to vector<1x16xf32>
    %152 = vector.broadcast %148 : vector<16x1xf32> to vector<16x16xf32>
    %153 = vector.broadcast %151 : vector<1x16xf32> to vector<16x16xf32>
    %154 = arith.addf %152, %153 : vector<16x16xf32>
    %cst_57 = arith.constant 2.000000e+00 : f32
    %155 = vector.broadcast %cst_57 : f32 to vector<16x16xf32>
    %156 = arith.mulf %155, %145 : vector<16x16xf32>
    %157 = arith.subf %154, %156 : vector<16x16xf32>
    %cst_58 = arith.constant 0.000000e+00 : f32
    %158 = vector.broadcast %cst_58 : f32 to vector<16x16xf32>
    %159 = arith.maximumf %157, %158 : vector<16x16xf32>
    %160 = math.sqrt %159 : vector<16x16xf32>
    %cst_59 = arith.constant dense<0.000000e+00> : vector<16x16xf32>
    %161 = tpu.matmul %144, %144, %cst_59 {dimension_numbers = #tpu.dot_dimension_numbers<[1], [1], [0], [0], [0, 0, 1, 0], [], []>} : vector<16x3xf32>, vector<16x3xf32>, vector<16x16xf32> -> vector<16x16xf32>
    %162 = arith.mulf %144, %144 : vector<16x3xf32>
    %cst_60 = arith.constant dense<0.000000e+00> : vector<16xf32>
    %163 = vector.multi_reduction <add>, %162, %cst_60 [1] : vector<16x3xf32> to vector<16xf32>
    %164 = vector.shape_cast %163 : vector<16xf32> to vector<16x1xf32>
    %165 = arith.mulf %161, %106 : vector<16x16xf32>
    %cst_61 = arith.constant dense<0.000000e+00> : vector<16xf32>
    %166 = vector.multi_reduction <add>, %165, %cst_61 [0] : vector<16x16xf32> to vector<16xf32>
    %167 = vector.shape_cast %166 : vector<16xf32> to vector<1x16xf32>
    %168 = vector.broadcast %164 : vector<16x1xf32> to vector<16x16xf32>
    %169 = vector.broadcast %167 : vector<1x16xf32> to vector<16x16xf32>
    %170 = arith.addf %168, %169 : vector<16x16xf32>
    %cst_62 = arith.constant 2.000000e+00 : f32
    %171 = vector.broadcast %cst_62 : f32 to vector<16x16xf32>
    %172 = arith.mulf %171, %161 : vector<16x16xf32>
    %173 = arith.subf %170, %172 : vector<16x16xf32>
    %cst_63 = arith.constant 0.000000e+00 : f32
    %174 = vector.broadcast %cst_63 : f32 to vector<16x16xf32>
    %175 = arith.maximumf %173, %174 : vector<16x16xf32>
    %176 = math.sqrt %175 : vector<16x16xf32>
    %177 = arith.subf %160, %176 : vector<16x16xf32>
    %cst_64 = arith.constant 1.000000e+01 : f32
    %178 = vector.broadcast %cst_64 : f32 to vector<16x16xf32>
    %179 = arith.mulf %177, %178 : vector<16x16xf32>
    %180 = arith.mulf %179, %179 : vector<16x16xf32>
    %cst_65 = arith.constant 1.000000e+00 : f32
    %181 = vector.broadcast %cst_65 : f32 to vector<16x16xf32>
    %182 = arith.subf %181, %180 : vector<16x16xf32>
    %cst_66 = arith.constant 0.000000e+00 : f32
    %183 = vector.broadcast %cst_66 : f32 to vector<16x16xf32>
    %184 = arith.maximumf %182, %183 : vector<16x16xf32>
    %cst_67 = arith.constant dense<0.000000e+00> : vector<16x16xf32>
    %185 = tpu.matmul %184, %184, %cst_67 {dimension_numbers = #tpu.dot_dimension_numbers<[1], [0], [0], [1], [0, 0, 1, 1], [], []>} : vector<16x16xf32>, vector<16x16xf32>, vector<16x16xf32> -> vector<16x16xf32>
    %cst_68 = arith.constant dense<0.000000e+00> : vector<16x16xf32>
    %186 = tpu.matmul %185, %185, %cst_68 {dimension_numbers = #tpu.dot_dimension_numbers<[1], [0], [0], [1], [0, 0, 1, 1], [], []>} : vector<16x16xf32>, vector<16x16xf32>, vector<16x16xf32> -> vector<16x16xf32>
    %cst_69 = arith.constant dense<0.000000e+00> : vector<16x16xf32>
    %187 = tpu.matmul %186, %186, %cst_69 {dimension_numbers = #tpu.dot_dimension_numbers<[1], [0], [0], [1], [0, 0, 1, 1], [], []>} : vector<16x16xf32>, vector<16x16xf32>, vector<16x16xf32> -> vector<16x16xf32>
    %cst_70 = arith.constant 1.000000e+00 : f32
    %188 = vector.broadcast %cst_70 : f32 to vector<16x1xf32>
    %cst_71 = arith.constant dense<0.000000e+00> : vector<16x1xf32>
    %189 = tpu.matmul %185, %188, %cst_71 {dimension_numbers = #tpu.dot_dimension_numbers<[1], [0], [0], [1], [0, 0, 1, 1], [], []>} : vector<16x16xf32>, vector<16x1xf32>, vector<16x1xf32> -> vector<16x1xf32>
    %cst_72 = arith.constant dense<0.000000e+00> : vector<16x1xf32>
    %190 = tpu.matmul %187, %189, %cst_72 {dimension_numbers = #tpu.dot_dimension_numbers<[1], [0], [0], [1], [0, 0, 1, 1], [], []>} : vector<16x16xf32>, vector<16x1xf32>, vector<16x1xf32> -> vector<16x1xf32>
    %191 = arith.mulf %190, %190 : vector<16x1xf32>
    %192 = vector.shape_cast %191 : vector<16x1xf32> to vector<1x16x1xf32>
    %cst_73 = arith.constant dense<0.000000e+00> : vector<1xf32>
    %193 = vector.multi_reduction <add>, %192, %cst_73 [1, 2] : vector<1x16x1xf32> to vector<1xf32>
    %194 = vector.shape_cast %193 : vector<1xf32> to vector<1x1x1xf32>
    %195 = vector.extract %194[0, 0, 0] : f32 from vector<1x1x1xf32>
    %cst_74 = arith.constant 1.000000e-24 : f32
    %196 = arith.maximumf %195, %cst_74 : f32
    %197 = math.rsqrt %196 : f32
    %198 = vector.broadcast %197 : f32 to vector<16x1xf32>
    %199 = arith.mulf %190, %198 : vector<16x1xf32>
    %cst_75 = arith.constant 0.000000e+00 : f32
    %200 = vector.broadcast %cst_75 : f32 to vector<32x128xf32>
    %c0_76 = arith.constant 0 : index
    %c0_77 = arith.constant 0 : index
    %201 = vector.load %arg6[%c0_76, %c0_77] : memref<32x128xf32, #tpu.memory_space<vmem>>, vector<32x128xf32>
    tpu.vector_store %arg6[%c0_76, %c0_77], %200 {strides = array<i32>} : memref<32x128xf32, #tpu.memory_space<vmem>>, vector<32x128xf32>,
    %c0_78 = arith.constant 0 : index
    %c0_79 = arith.constant 0 : index
    %202 = vector.load %arg6[%c0_78, %c0_79] : memref<32x128xf32, #tpu.memory_space<vmem>>, vector<32x32xf32>
    tpu.vector_store %arg6[%c0_78, %c0_79], %11 {strides = array<i32>} : memref<32x128xf32, #tpu.memory_space<vmem>>, vector<32x32xf32>,
    %c0_80 = arith.constant 0 : index
    %c32_81 = arith.constant 32 : index
    %203 = vector.load %arg6[%c0_80, %c32_81] : memref<32x128xf32, #tpu.memory_space<vmem>>, vector<32x1xf32>
    tpu.vector_store %arg6[%c0_80, %c32_81], %32 {strides = array<i32>} : memref<32x128xf32, #tpu.memory_space<vmem>>, vector<32x1xf32>,
    %c0_82 = arith.constant 0 : index
    %c64_83 = arith.constant 64 : index
    %204 = vector.load %arg6[%c0_82, %c64_83] : memref<32x128xf32, #tpu.memory_space<vmem>>, vector<16x16xf32>
    tpu.vector_store %arg6[%c0_82, %c64_83], %75 {strides = array<i32>} : memref<32x128xf32, #tpu.memory_space<vmem>>, vector<16x16xf32>,
    %c0_84 = arith.constant 0 : index
    %c80 = arith.constant 80 : index
    %205 = vector.load %arg6[%c0_84, %c80] : memref<32x128xf32, #tpu.memory_space<vmem>>, vector<16x16xf32>
    tpu.vector_store %arg6[%c0_84, %c80], %114 {strides = array<i32>} : memref<32x128xf32, #tpu.memory_space<vmem>>, vector<16x16xf32>,
    %c0_85 = arith.constant 0 : index
    %c96_86 = arith.constant 96 : index
    %206 = vector.load %arg6[%c0_85, %c96_86] : memref<32x128xf32, #tpu.memory_space<vmem>>, vector<16x16xf32>
    tpu.vector_store %arg6[%c0_85, %c96_86], %143 {strides = array<i32>} : memref<32x128xf32, #tpu.memory_space<vmem>>, vector<16x16xf32>,
    %c0_87 = arith.constant 0 : index
    %c112 = arith.constant 112 : index
    %207 = vector.load %arg6[%c0_87, %c112] : memref<32x128xf32, #tpu.memory_space<vmem>>, vector<16x1xf32>
    tpu.vector_store %arg6[%c0_87, %c112], %199 {strides = array<i32>} : memref<32x128xf32, #tpu.memory_space<vmem>>, vector<16x1xf32>,
    %c0_88 = arith.constant 0 : index
    %c113 = arith.constant 113 : index
    %208 = vector.load %arg6[%c0_88, %c113] : memref<32x128xf32, #tpu.memory_space<vmem>>, vector<16x3xf32>
    tpu.vector_store %arg6[%c0_88, %c113], %144 {strides = array<i32>} : memref<32x128xf32, #tpu.memory_space<vmem>>, vector<16x3xf32>,
    return
  }
}

</mosaic_0001>

<llo_original>
// kernel: custom-call.176
$region0: #{custom-call.176}
  %s0 = inlined_call_operand.vmem [shape: f32[6,3], index: 0, kind: input, shape index: {}]
  %s1 = inlined_call_operand.vmem [shape: f32[6,3], index: 1, kind: output, shape index: {0}]
  %s2 = inlined_call_operand.vmem [shape: f32[3], index: 2, kind: output, shape index: {1}]
  %3 = xla_tuple %s1, %s2
  $region1: #{custom-call.176} parent=0
    #allocation0 [shape = 'u8[4096]{0}', space=vmem, size = 0x1000, scoped, tag = 'operand span for operand 0']
    #allocation1 [shape = 'u8[4096]{0}', space=vmem, size = 0x1000, scoped, tag = 'operand span for operand 1']
    #allocation2 [shape = 'u8[4096]{0}', space=vmem, size = 0x1000, scoped, tag = 'operand span for operand 2']
    #allocation3 [shape = 'u8[512]{0}', space=vmem, size = 0x400, scoped, tag = 'packed  for operand 2']
    #allocation4 [shape = 'f32[6,128]{1,0}', space=vmem, size = 0x1000, scoped, tag = 'scratch for Householder reflectors']
    // Predicated region
    $region2: #{custom-call.176} parent=1 // pred_check
      _
    $region3: #{custom-call.176} parent=1 // pred_check_branch
      %5 = sbr.rel (0) target = $region5
    $region4: #{custom-call.176} parent=1 // pred_region
      // Predicated region
      $region6: #{custom-call.176} parent=4 // pred_check
        _
      $region7: #{custom-call.176} parent=4 // pred_check_branch
        %7 = sbr.rel (0) target = $region9
      $region8: #{custom-call.176} parent=4 // pred_region
        // Predicated region
        $region21: #{custom-call.176} parent=8 // pred_check
          _
        $region22: #{custom-call.176} parent=8 // pred_check_branch
          %22 = sbr.rel (0) target = $region24
        $region23: #{custom-call.176} parent=8 // pred_region
          loop: start=0, step=1, limit=1
          $region25: #{custom-call.176} parent=23 // loop_pre_header
            _
          $region26: #{custom-call.176} parent=23 // loop_header
            %s24 = sphi 0, %s28
            %p25 = scmp.ge.s32.totalorder %s24, 1
            %s29 = sphi %s0, %s0
            %s30 = sphi [#allocation0], [#allocation0]
          $region27: #{custom-call.176} parent=23 // loop_header_branch
            %27 = sbr.rel (%p25) target = $region31
          $region28: #{custom-call.176} parent=23 // loop_body
            %v31 = vld [vmem:[%s29] sm:$0xff]
            %32 = vst [vmem:[%s30] sm:$0xff] %v31
          $region29: #{custom-call.176} parent=23 // loop_footer
            %s28 = sadd.s32 1, %s24
          $region30: #{custom-call.176} parent=23 // loop_footer_branch
            %23 = sbr.rel target = $region26
          $region31: #{custom-call.176} parent=23 // loop_exit
            _
        $region24: #{custom-call.176} parent=8 // pred_fallthru
          _
        // Predicated region
        $region32: #{custom-call.176} parent=8 // pred_check
          _
        $region33: #{custom-call.176} parent=8 // pred_check_branch
          %34 = sbr.rel target = $region35
        $region34: #{custom-call.176} parent=8 // pred_region
          _
        $region35: #{custom-call.176} parent=8 // pred_fallthru
          _
      $region9: #{custom-call.176} parent=4 // pred_fallthru
        _
      // Predicated region
      $region10: #{custom-call.176} parent=4 // pred_check
        _
      $region11: #{custom-call.176} parent=4 // pred_check_branch
        %9 = sbr.rel target = $region13
      $region12: #{custom-call.176} parent=4 // pred_region
        loop: start=0, step=1, limit=1
        $region14: #{custom-call.176} parent=12 // loop_pre_header
          _
        $region15: #{custom-call.176} parent=12 // loop_header
          %s12 = sphi 0, %s16
          %p13 = scmp.ge.s32.totalorder %s12, 1
          %s17 = sphi %s0, %s0
          %s18 = sphi [#allocation0], [#allocation0]
        $region16: #{custom-call.176} parent=12 // loop_header_branch
          %15 = sbr.rel (%p13) target = $region20
        $region17: #{custom-call.176} parent=12 // loop_body
          %v19 = vld [vmem:[%s17] sm:$0xff]
          %20 = vst [vmem:[%s18] sm:$0xff] %v19
        $region18: #{custom-call.176} parent=12 // loop_footer
          %s16 = sadd.s32 1, %s12
        $region19: #{custom-call.176} parent=12 // loop_footer_branch
          %11 = sbr.rel target = $region15
        $region20: #{custom-call.176} parent=12 // loop_exit
          _
      $region13: #{custom-call.176} parent=4 // pred_fallthru
        _
    $region5: #{custom-call.176} parent=1 // pred_fallthru
      _
    %35 = vnop
    %v36 = vld [vmem:[#allocation0] sm:$0xff]
    %37 = vst [vmem:[#allocation1] sm:$0xff] %v36
    %38 = vst [vmem:[#allocation2] sm:$0x1] 0.0
    loop: start=0, step=1, limit=3
    $region36: #{custom-call.176} parent=1 // loop_pre_header
      _
    $region37: #{custom-call.176} parent=1 // loop_header
      %s40 = sphi 0, %s44
      %p41 = scmp.ge.s32.totalorder %s40, 3
    $region38: #{custom-call.176} parent=1 // loop_header_branch
      %43 = sbr.rel (%p41) target = $region42
    $region39: #{custom-call.176} parent=1 // loop_body
      %v45 = vld [vmem:[#allocation1] sm:$0xff]
      %v46 = vlaneseq
      %v47 = vshrl.u32 %v46, 7
      %v49 = vstv %s40
      %vm50 = vcmp.gt.s32.totalorder %v47, %v49
      %vm51 = vcmp.lt.s32.totalorder %v47, 6
      %vm52 = vmand %vm50, %vm51
      %v53 = vsel %vm52, %v45, 0.0
      %v54 = vmul.f32 %v53, %v53
      %v55 = vrot.slane %v54, 4
      %v56 = vadd.f32 %v54, %v55
      %v57 = vrot.slane %v56, 2
      %v58 = vadd.f32 %v56, %v57
      %v59 = vrot.slane %v58, 1
      %v60 = vadd.f32 %v58, %v59
      %v61 = vrsqrt.pop %v60
      %v62 = vmul.f32 %v60, %v61
      %vm63 = vcmp.eq.f32.partialorder %v60, inf
      %v64 = vsel %vm63, %v60, %v62
      %vm65 = vcmp.eq.f32.partialorder %v60, 0.0
      %v66 = vand.u32 %v60, 2147483648
      %v67 = vsel %vm65, %v66, %v64
      %vm68 = vcmp.eq.f32.partialorder %v60, 0.0
      %s69 = sshrl.u32 %s40, 3
      %s70 = sand.u32 %s40, 7
      %s71 = smul.addr %s69, 8
      %s72 = sadd.s32 %s70, %s71
      %s73 = scalar_lea.vmem [#allocation1], %s72
      %v74 = vld [vmem:[%s73] ss:$0 sm:$0xff]
      %v75 = vand.u32 2147483647, %v74
      %v76 = vmax.f32 %v75, 0.0
      %v77 = vand.u32 2147483647, %v67
      %v78 = vmax.f32 %v76, %v77
      %v79 = vrcp.pop %v78
      %v80 = vmul.f32 %v75, %v79
      %v81 = vmul.f32 %v80, %v80
      %v82 = vrcp.pop %v78
      %v83 = vmul.f32 0.0, %v82
      %v84 = vmul.f32 %v83, %v83
      %v85 = vadd.f32 %v81, %v84
      %v86 = vrcp.pop %v78
      %v87 = vmul.f32 %v77, %v86
      %v88 = vmul.f32 %v87, %v87
      %v89 = vadd.f32 %v85, %v88
      %vm90 = vcmp.eq.f32.partialorder %v78, 0.0
      %v91 = vrsqrt.pop %v89
      %v92 = vmul.f32 %v89, %v91
      %vm93 = vcmp.eq.f32.partialorder %v89, inf
      %v94 = vsel %vm93, %v89, %v92
      %vm95 = vcmp.eq.f32.partialorder %v89, 0.0
      %v96 = vand.u32 %v89, 2147483648
      %v97 = vsel %vm95, %v96, %v94
      %v98 = vmul.f32 %v78, %v97
      %v99 = vsel %vm90, 0.0, %v98
      %vm100 = vcmp.lt.f32.partialorder %v74, 0.0
      %v101 = vxor.u32 %v99, 2147483648
      %v102 = vsel %vm100, %v99, %v101
      %v103 = vsub.f32 %v102, %v74
      %v104 = vrcp.pop %v102
      %v105 = vmul.f32 %v103, %v104
      %v106 = vsel %vm68, %v74, %v102
      %v107 = vsel %vm68, 0.0, %v105
      %v108 = vsub.f32 %v74, %v106
      %s109 = smov [#allocation1]
      %v110 = vlaneseq
      %v111 = vshrl.u32 %v110, 7
      %v112 = vmov %v111
      %v113 = vld [vmem:[%s109] sm:$0xff]
      %v115 = vstv %s40
      %vm116 = vcmp.gt.s32.totalorder %v112, %v115
      %vm117 = vcmp.lt.s32.totalorder %v112, 6
      %vm118 = vmand %vm116, %vm117
      %v119 = vsel %vm118, %v113, 0.0
      %v120 = vrcp.pop %v108
      %v121 = vmul.f32 %v119, %v120
      %v122 = vsel %vm68, 0.0, %v121
      %v123 = vstv %s40
      %v124 = vlaneseq
      %v125 = vand.u32 %v124, 127
      %vm126 = vcmp.eq.s32.totalorder %v125, %v123
      %v127 = vsel %vm126, %v122, 0.0
      %128 = vadd.xlane.f32.xlu0 %v127
      %v129 = vpop.xlane.xlu0 %128
      %130 = vst [vmem:[#allocation4] sm:$0xff] %v129
      %s131 = scalar_lea.vmem [#allocation4], %s40
      %132 = vst [vmem:[%s131] sm:$0x1] 1.0
      %v133 = vstv %s40
      %v134 = vlaneseq
      %v135 = vand.u32 %v134, 127
      %vm136 = vcmp.eq.s32.totalorder %v135, %v133
      %v137 = vsel %vm136, %v107, 0.0
      %138 = vadd.xlane.f32.xlu0 %v137
      %v139 = vpop.xlane.xlu0 %138
      %v140 = vstv %s40
      %v141 = vlaneseq
      %v142 = vand.u32 %v141, 127
      %vm143 = vcmp.eq.s32.totalorder %v142, %v140
      %v144 = vld [vmem:[#allocation2] ss:$0 sm:$0xff]
      %v145 = vsel %vm143, %v139, %v144
      %146 = vst [vmem:[#allocation2] sm:$0x1] %v145
      %s147 = smov [#allocation1]
      %s148 = smov [#allocation4]
      %v149 = vlaneseq
      %v150 = vshrl.u32 %v149, 7
      %v151 = vmov %v150
      %v153 = vld [vmem:[%s148] sm:$0xff]
      %v154 = vld [vmem:[%s147] sm:$0xff]
      %v155 = vmul.f32 %v153, %v154
      %vm156 = vcmp.lt.s32.totalorder %v151, 6
      %v157 = vsel %vm156, %v155, 0.0
      %v158 = vrot.slane %v157, 4
      %v159 = vadd.f32 %v157, %v158
      %v160 = vrot.slane %v159, 2
      %v161 = vadd.f32 %v159, %v160
      %v162 = vrot.slane %v161, 1
      %v163 = vadd.f32 %v161, %v162
      %s164 = smov %s147
      %s165 = smov %s148
      %v166 = vlaneseq
      %v167 = vshrl.u32 %v166, 7
      %v168 = vmov %v167
      %v169 = vmul.f32 %v163, %v139
      %v171 = vlaneseq
      %v172 = vand.u32 %v171, 127
      %v173 = vld [vmem:[%s165] sm:$0xff]
      %v174 = vmul.f32 %v173, %v169
      %v175 = vld [vmem:[%s164] sm:$0xff]
      %v176 = vstv %s40
      %vm177 = vcmp.gt.s32.totalorder %v172, %v176
      %v178 = vsub.f32 %v175, %v174
      %v179 = vsel %vm177, %v178, %v175
      %v180 = vstv %s40
      %v181 = vlaneseq
      %v182 = vand.u32 %v181, 127
      %vm183 = vcmp.eq.s32.totalorder %v182, %v180
      %v184 = vstv %s40
      %vm185 = vcmp.ge.s32.totalorder %v168, %v184
      %vm186 = vmand %vm183, %vm185
      %v187 = vsel %vm186, %v173, %v179
      %188 = vst [vmem:[%s164] sm:$0xff] %v187
      %s189 = scalar_lea.vmem %s164, %s40
      %v190 = vld [vmem:[%s189] ss:$0 sm:$0xff]
      %v191 = vstv %s40
      %v192 = vlaneseq
      %v193 = vand.u32 %v192, 127
      %vm194 = vcmp.eq.s32.totalorder %v193, %v191
      %v195 = vsel %vm194, %v106, %v190
      %196 = vst [vmem:[%s189] sm:$0x1] %v195
    $region40: #{custom-call.176} parent=1 // loop_footer
      %s44 = sadd.s32 1, %s40
    $region41: #{custom-call.176} parent=1 // loop_footer_branch
      %39 = sbr.rel target = $region37
    $region42: #{custom-call.176} parent=1 // loop_exit
      _
    %s198 = sshllo.u32 0, 1
    %v200 = vld [vmem:[#allocation2] sm:%s198]
    %s201 = sshllo.u32 0, 1
    %202 = vst [vmem:[#allocation3] sm:%s201] %v200
    // Predicated region
    $region43: #{custom-call.176} parent=1 // pred_check
      _
    $region44: #{custom-call.176} parent=1 // pred_check_branch
      %204 = sbr.rel (0) target = $region46
    $region45: #{custom-call.176} parent=1 // pred_region
      // Predicated region
      $region47: #{custom-call.176} parent=45 // pred_check
        _
      $region48: #{custom-call.176} parent=45 // pred_check_branch
        %206 = sbr.rel (0) target = $region50
      $region49: #{custom-call.176} parent=45 // pred_region
        // Predicated region
        $region62: #{custom-call.176} parent=49 // pred_check
          _
        $region63: #{custom-call.176} parent=49 // pred_check_branch
          %221 = sbr.rel (0) target = $region65
        $region64: #{custom-call.176} parent=49 // pred_region
          loop: start=0, step=1, limit=1
          $region66: #{custom-call.176} parent=64 // loop_pre_header
            _
          $region67: #{custom-call.176} parent=64 // loop_header
            %s223 = sphi 0, %s227
            %p224 = scmp.ge.s32.totalorder %s223, 1
            %s228 = sphi [#allocation1], [#allocation1]
            %s229 = sphi %s1, %s1
          $region68: #{custom-call.176} parent=64 // loop_header_branch
            %226 = sbr.rel (%p224) target = $region72
          $region69: #{custom-call.176} parent=64 // loop_body
            %v230 = vld [vmem:[%s228] sm:$0xff]
            %231 = vst [vmem:[%s229] sm:$0xff] %v230
          $region70: #{custom-call.176} parent=64 // loop_footer
            %s227 = sadd.s32 1, %s223
          $region71: #{custom-call.176} parent=64 // loop_footer_branch
            %222 = sbr.rel target = $region67
          $region72: #{custom-call.176} parent=64 // loop_exit
            _
        $region65: #{custom-call.176} parent=49 // pred_fallthru
          _
        // Predicated region
        $region73: #{custom-call.176} parent=49 // pred_check
          _
        $region74: #{custom-call.176} parent=49 // pred_check_branch
          %233 = sbr.rel target = $region76
        $region75: #{custom-call.176} parent=49 // pred_region
          _
        $region76: #{custom-call.176} parent=49 // pred_fallthru
          _
      $region50: #{custom-call.176} parent=45 // pred_fallthru
        _
      // Predicated region
      $region51: #{custom-call.176} parent=45 // pred_check
        _
      $region52: #{custom-call.176} parent=45 // pred_check_branch
        %208 = sbr.rel target = $region54
      $region53: #{custom-call.176} parent=45 // pred_region
        loop: start=0, step=1, limit=1
        $region55: #{custom-call.176} parent=53 // loop_pre_header
          _
        $region56: #{custom-call.176} parent=53 // loop_header
          %s211 = sphi 0, %s215
          %p212 = scmp.ge.s32.totalorder %s211, 1
          %s216 = sphi [#allocation1], [#allocation1]
          %s217 = sphi %s1, %s1
        $region57: #{custom-call.176} parent=53 // loop_header_branch
          %214 = sbr.rel (%p212) target = $region61
        $region58: #{custom-call.176} parent=53 // loop_body
          %v218 = vld [vmem:[%s216] sm:$0xff]
          %219 = vst [vmem:[%s217] sm:$0xff] %v218
        $region59: #{custom-call.176} parent=53 // loop_footer
          %s215 = sadd.s32 1, %s211
        $region60: #{custom-call.176} parent=53 // loop_footer_branch
          %210 = sbr.rel target = $region56
        $region61: #{custom-call.176} parent=53 // loop_exit
          _
      $region54: #{custom-call.176} parent=45 // pred_fallthru
        _
    $region46: #{custom-call.176} parent=1 // pred_fallthru
      _
    %234 = vnop
    // Predicated region
    $region77: #{custom-call.176} parent=1 // pred_check
      _
    $region78: #{custom-call.176} parent=1 // pred_check_branch
      %236 = sbr.rel (0) target = $region80
    $region79: #{custom-call.176} parent=1 // pred_region
      // Predicated region
      $region81: #{custom-call.176} parent=79 // pred_check
        _
      $region82: #{custom-call.176} parent=79 // pred_check_branch
        %238 = sbr.rel (0) target = $region84
      $region83: #{custom-call.176} parent=79 // pred_region
        // Predicated region
        $region85: #{custom-call.176} parent=83 // pred_check
          _
        $region86: #{custom-call.176} parent=83 // pred_check_branch
          %240 = sbr.rel target = $region88
        $region87: #{custom-call.176} parent=83 // pred_region
          // Predicated region
          $region100: #{custom-call.176} parent=87 // pred_check
            _
          $region101: #{custom-call.176} parent=87 // pred_check_branch
            %255 = sbr.rel (0) target = $region103
          $region102: #{custom-call.176} parent=87 // pred_region
            loop: start=0, step=1, limit=1
            $region104: #{custom-call.176} parent=102 // loop_pre_header
              _
            $region105: #{custom-call.176} parent=102 // loop_header
              %s258 = sphi 0, %s262
              %p259 = scmp.ge.s32.totalorder %s258, 1
              %s263 = sphi [#allocation3], [#allocation3]
              %s264 = sphi %s2, %s2
            $region106: #{custom-call.176} parent=102 // loop_header_branch
              %261 = sbr.rel (%p259) target = $region110
            $region107: #{custom-call.176} parent=102 // loop_body
              %v265 = vld [vmem:[%s263] sm:$0x1]
              %266 = vst [vmem:[%s264] sm:$0x1] %v265
            $region108: #{custom-call.176} parent=102 // loop_footer
              %s262 = sadd.s32 1, %s258
            $region109: #{custom-call.176} parent=102 // loop_footer_branch
              %257 = sbr.rel target = $region105
            $region110: #{custom-call.176} parent=102 // loop_exit
              _
          $region103: #{custom-call.176} parent=87 // pred_fallthru
            _
        $region88: #{custom-call.176} parent=83 // pred_fallthru
          _
        // Predicated region
        $region89: #{custom-call.176} parent=83 // pred_check
          _
        $region90: #{custom-call.176} parent=83 // pred_check_branch
          %242 = sbr.rel (0) target = $region92
        $region91: #{custom-call.176} parent=83 // pred_region
          loop: start=0, step=1, limit=1
          $region93: #{custom-call.176} parent=91 // loop_pre_header
            _
          $region94: #{custom-call.176} parent=91 // loop_header
            %s245 = sphi 0, %s249
            %p246 = scmp.ge.s32.totalorder %s245, 1
            %s250 = sphi [#allocation3], [#allocation3]
            %s251 = sphi %s2, %s2
          $region95: #{custom-call.176} parent=91 // loop_header_branch
            %248 = sbr.rel (%p246) target = $region99
          $region96: #{custom-call.176} parent=91 // loop_body
            %v252 = vld [vmem:[%s250] sm:$0x1]
            %253 = vst [vmem:[%s251] sm:$0x1] %v252
          $region97: #{custom-call.176} parent=91 // loop_footer
            %s249 = sadd.s32 1, %s245
          $region98: #{custom-call.176} parent=91 // loop_footer_branch
            %244 = sbr.rel target = $region94
          $region99: #{custom-call.176} parent=91 // loop_exit
            _
        $region92: #{custom-call.176} parent=83 // pred_fallthru
          _
      $region84: #{custom-call.176} parent=79 // pred_fallthru
        _
      %267 = vnop
    $region80: #{custom-call.176} parent=1 // pred_fallthru
      _
    // Predicated region
    $region111: #{custom-call.176} parent=1 // pred_check
      _
    $region112: #{custom-call.176} parent=1 // pred_check_branch
      %269 = sbr.rel (0) target = $region114
    $region113: #{custom-call.176} parent=1 // pred_region
      _
    $region114: #{custom-call.176} parent=1 // pred_fallthru
      _

// kernel: custom-call.177
$region0: #{custom-call.177}
  %s0 = inlined_call_operand.vmem [shape: f32[3,3], index: 0, kind: input, shape index: {}]
  %s1 = inlined_call_operand.vmem [shape: f32[3,3], index: 1, kind: output, shape index: {}]
  $region1: #{custom-call.177} parent=0
    #allocation0 [shape = 'u8[4096]{0}', space=vmem, size = 0x1000, scoped, tag = 'operand span for operand 0']
    #allocation1 [shape = 'u8[2048]{0}', space=vmem, size = 0x800, scoped, tag = 'packed  for operand 0']
    #allocation2 [shape = 'u8[4096]{0}', space=vmem, size = 0x1000, scoped, tag = 'operand span for operand 1']
    #allocation3 [shape = 'u8[2048]{0}', space=vmem, size = 0x800, scoped, tag = 'packed  for operand 1']
    %p3 = scmp.gt.s32.totalorder 4, 0
    // Predicated region
    $region2: #{custom-call.177} parent=1 // pred_check
      %p4 = pneg %p3
    $region3: #{custom-call.177} parent=1 // pred_check_branch
      %6 = sbr.rel (%p4) target = $region5
    $region4: #{custom-call.177} parent=1 // pred_region
      %s7 = sshra.s32 4, 3
      %p8 = scmp.gt.s32.totalorder %s7, 0
      // Predicated region
      $region6: #{custom-call.177} parent=4 // pred_check
        %p9 = pneg %p8
      $region7: #{custom-call.177} parent=4 // pred_check_branch
        %11 = sbr.rel (%p9) target = $region9
      $region8: #{custom-call.177} parent=4 // pred_region
        %s12 = ssub.s32 %s7, 1
        %s13 = smul.u32 %s12, 128
        %s14 = sshra.s32 %s13, 4
        %s15 = scalar_lea.vmem %s0, %s14
        %v16 = vld [vmem:[%s0] sm:$0xff]
        // While loop
        $region10: #{custom-call.177} parent=8 // loop_pre_header
          _
        $region11: #{custom-call.177} parent=8 // loop_header
          %s17 = sphi %s0, %s39
          %s18 = sphi [#allocation1], %s40
          %v19 = vphi %v16, %v41
          %s20 = ssub.s32 %s15, 64
          %p21 = scmp.gt.s32.totalorder %s17, %s20
        $region12: #{custom-call.177} parent=8 // loop_header_branch
          %23 = sbr.rel (%p21) target = $region16
        $region13: #{custom-call.177} parent=8 // loop_body
          %24 = vst [vmem:[%s18] sm:$0xff] %v19
          %v25 = vld [vmem:[%s17 + $0x8] sm:$0xff]
          %26 = vst [vmem:[%s18 + $0x8] sm:$0xff] %v25
          %v27 = vld [vmem:[%s17 + $0x10] sm:$0xff]
          %28 = vst [vmem:[%s18 + $0x10] sm:$0xff] %v27
          %v29 = vld [vmem:[%s17 + $0x18] sm:$0xff]
          %30 = vst [vmem:[%s18 + $0x18] sm:$0xff] %v29
          %v31 = vld [vmem:[%s17 + $0x20] sm:$0xff]
          %32 = vst [vmem:[%s18 + $0x20] sm:$0xff] %v31
          %v33 = vld [vmem:[%s17 + $0x28] sm:$0xff]
          %34 = vst [vmem:[%s18 + $0x28] sm:$0xff] %v33
          %v35 = vld [vmem:[%s17 + $0x30] sm:$0xff]
          %36 = vst [vmem:[%s18 + $0x30] sm:$0xff] %v35
          %v37 = vld [vmem:[%s17 + $0x38] sm:$0xff]
          %38 = vst [vmem:[%s18 + $0x38] sm:$0xff] %v37
        $region14: #{custom-call.177} parent=8 // loop_footer
          %s39 = scalar_lea.vmem %s17, 64
          %s40 = scalar_lea.vmem %s18, 64
          %v41 = vld [vmem:[%s17 + $0x40] sm:$0xff]
        $region15: #{custom-call.177} parent=8 // loop_footer_branch
          %42 = sbr.rel target = $region11
        $region16: #{custom-call.177} parent=8 // loop_exit
          _
        // While loop
        $region17: #{custom-call.177} parent=8 // loop_pre_header
          _
        $region18: #{custom-call.177} parent=8 // loop_header
          %s43 = sphi %s17, %s51
          %s44 = sphi %s18, %s52
          %v45 = vphi %v19, %v45
          %p46 = scmp.gt.s32.totalorder %s43, %s15
        $region19: #{custom-call.177} parent=8 // loop_header_branch
          %48 = sbr.rel (%p46) target = $region23
        $region20: #{custom-call.177} parent=8 // loop_body
          %v49 = vld [vmem:[%s43] sm:$0xff]
          %50 = vst [vmem:[%s44] sm:$0xff] %v49
        $region21: #{custom-call.177} parent=8 // loop_footer
          %s51 = scalar_lea.vmem %s43, 8
          %s52 = scalar_lea.vmem %s44, 8
        $region22: #{custom-call.177} parent=8 // loop_footer_branch
          %53 = sbr.rel target = $region18
        $region23: #{custom-call.177} parent=8 // loop_exit
          _
      $region9: #{custom-call.177} parent=4 // pred_fallthru
        _
      %s54 = sand.u32 4, 7
      %s55 = sshllo.u32 0, %s54
      %s56 = smul.u32 %s7, 128
      %s57 = sshra.s32 %s56, 4
      %s58 = scalar_lea.vmem [#allocation1], %s57
      %s59 = smul.u32 %s7, 128
      %s60 = sshra.s32 %s59, 4
      %s61 = scalar_lea.vmem %s0, %s60
      %v62 = vld [vmem:[%s61] sm:%s55]
      %63 = vst [vmem:[%s58] sm:%s55] %v62
    $region5: #{custom-call.177} parent=1 // pred_fallthru
      _
    %s65 = sshllo.u32 0, 4
    %v66 = vld [vmem:[#allocation1] sm:%s65]
    %67 = vst [vmem:[#allocation0] sm:%s65] %v66
    %v68 = vlaneseq
    %v69 = vand.u32 %v68, 127
    %v70 = vlaneseq
    %v71 = vshrl.u32 %v70, 7
    %vm73 = vcmp.eq.s32.totalorder %v69, %v71
    %v74 = vld [vmem:[#allocation0] sm:$0xff]
    %v75 = vlaneseq
    %v76 = vand.u32 %v75, 127
    %vm77 = vcmp.eq.s32.totalorder %v76, 0
    %v78 = vsel %vm77, %v74, 1.0
    %v79 = vsel %vm73, %v78, 0.0
    %s80 = scalar_lea.vmem [#allocation0], 1
    %v81 = vld [vmem:[%s80] ss:$0 sm:$0xff]
    %vm82 = vcmask 23552
    %v83 = vsel %vm82, %v81, 0.0
    %v84 = vlaneseq
    %v85 = vand.u32 %v84, 127
    %vm86 = vcmp.eq.s32.totalorder %v85, 1
    %v87 = vmul.f32 %v83, %v79
    %88 = vadd.xlane.f32.xlu0 %v87
    %v89 = vpop.xlane.xlu0 %88
    %v90 = vsel %vm86, %v89, %v79
    %s91 = scalar_lea.vmem [#allocation0], 2
    %v92 = vld [vmem:[%s91] ss:$0 sm:$0xff]
    %vm93 = vcmask 23552
    %v94 = vsel %vm93, %v92, 0.0
    %v95 = vlaneseq
    %v96 = vand.u32 %v95, 127
    %vm97 = vcmp.eq.s32.totalorder %v96, 2
    %v98 = vmul.f32 %v94, %v90
    %99 = vadd.xlane.f32.xlu0 %v98
    %v100 = vpop.xlane.xlu0 %99
    %v101 = vsel %vm97, %v100, %v90
    %102 = vst [vmem:[#allocation2] sm:$0xff] %v101
    %s104 = sshllo.u32 0, 4
    %v106 = vld [vmem:[#allocation2] sm:%s104]
    %s107 = sshllo.u32 0, 4
    %108 = vst [vmem:[#allocation3] sm:%s107] %v106
    %p110 = scmp.gt.s32.totalorder 4, 0
    // Predicated region
    $region24: #{custom-call.177} parent=1 // pred_check
      %p111 = pneg %p110
    $region25: #{custom-call.177} parent=1 // pred_check_branch
      %113 = sbr.rel (%p111) target = $region27
    $region26: #{custom-call.177} parent=1 // pred_region
      %s114 = sshra.s32 4, 3
      %p115 = scmp.gt.s32.totalorder %s114, 0
      // Predicated region
      $region28: #{custom-call.177} parent=26 // pred_check
        %p116 = pneg %p115
      $region29: #{custom-call.177} parent=26 // pred_check_branch
        %118 = sbr.rel (%p116) target = $region31
      $region30: #{custom-call.177} parent=26 // pred_region
        %s119 = ssub.s32 %s114, 1
        %s120 = smul.u32 %s119, 128
        %s121 = sshra.s32 %s120, 4
        %s122 = scalar_lea.vmem [#allocation3], %s121
        %v123 = vld [vmem:[#allocation3] sm:$0xff]
        // While loop
        $region32: #{custom-call.177} parent=30 // loop_pre_header
          _
        $region33: #{custom-call.177} parent=30 // loop_header
          %s124 = sphi [#allocation3], %s146
          %s125 = sphi %s1, %s147
          %v126 = vphi %v123, %v148
          %s127 = ssub.s32 %s122, 64
          %p128 = scmp.gt.s32.totalorder %s124, %s127
        $region34: #{custom-call.177} parent=30 // loop_header_branch
          %130 = sbr.rel (%p128) target = $region38
        $region35: #{custom-call.177} parent=30 // loop_body
          %131 = vst [vmem:[%s125] sm:$0xff] %v126
          %v132 = vld [vmem:[%s124 + $0x8] sm:$0xff]
          %133 = vst [vmem:[%s125 + $0x8] sm:$0xff] %v132
          %v134 = vld [vmem:[%s124 + $0x10] sm:$0xff]
          %135 = vst [vmem:[%s125 + $0x10] sm:$0xff] %v134
          %v136 = vld [vmem:[%s124 + $0x18] sm:$0xff]
          %137 = vst [vmem:[%s125 + $0x18] sm:$0xff] %v136
          %v138 = vld [vmem:[%s124 + $0x20] sm:$0xff]
          %139 = vst [vmem:[%s125 + $0x20] sm:$0xff] %v138
          %v140 = vld [vmem:[%s124 + $0x28] sm:$0xff]
          %141 = vst [vmem:[%s125 + $0x28] sm:$0xff] %v140
          %v142 = vld [vmem:[%s124 + $0x30] sm:$0xff]
          %143 = vst [vmem:[%s125 + $0x30] sm:$0xff] %v142
          %v144 = vld [vmem:[%s124 + $0x38] sm:$0xff]
          %145 = vst [vmem:[%s125 + $0x38] sm:$0xff] %v144
        $region36: #{custom-call.177} parent=30 // loop_footer
          %s146 = scalar_lea.vmem %s124, 64
          %s147 = scalar_lea.vmem %s125, 64
          %v148 = vld [vmem:[%s124 + $0x40] sm:$0xff]
        $region37: #{custom-call.177} parent=30 // loop_footer_branch
          %149 = sbr.rel target = $region33
        $region38: #{custom-call.177} parent=30 // loop_exit
          _
        // While loop
        $region39: #{custom-call.177} parent=30 // loop_pre_header
          _
        $region40: #{custom-call.177} parent=30 // loop_header
          %s150 = sphi %s124, %s158
          %s151 = sphi %s125, %s159
          %v152 = vphi %v126, %v152
          %p153 = scmp.gt.s32.totalorder %s150, %s122
        $region41: #{custom-call.177} parent=30 // loop_header_branch
          %155 = sbr.rel (%p153) target = $region45
        $region42: #{custom-call.177} parent=30 // loop_body
          %v156 = vld [vmem:[%s150] sm:$0xff]
          %157 = vst [vmem:[%s151] sm:$0xff] %v156
        $region43: #{custom-call.177} parent=30 // loop_footer
          %s158 = scalar_lea.vmem %s150, 8
          %s159 = scalar_lea.vmem %s151, 8
        $region44: #{custom-call.177} parent=30 // loop_footer_branch
          %160 = sbr.rel target = $region40
        $region45: #{custom-call.177} parent=30 // loop_exit
          _
      $region31: #{custom-call.177} parent=26 // pred_fallthru
        _
      %s161 = sand.u32 4, 7
      %s162 = sshllo.u32 0, %s161
      %s163 = smul.u32 %s114, 128
      %s164 = sshra.s32 %s163, 4
      %s165 = scalar_lea.vmem %s1, %s164
      %s166 = smul.u32 %s114, 128
      %s167 = sshra.s32 %s166, 4
      %s168 = scalar_lea.vmem [#allocation3], %s167
      %v169 = vld [vmem:[%s168] sm:%s162]
      %170 = vst [vmem:[%s165] sm:%s162] %v169
    $region27: #{custom-call.177} parent=1 // pred_fallthru
      _

// kernel: custom-call.178
$region0: #{custom-call.178}
  %s0 = inlined_call_operand.vmem [shape: f32[3,3], index: 0, kind: input, shape index: {}]
  %s1 = inlined_call_operand.vmem [shape: f32[3,3], index: 1, kind: output, shape index: {}]
  $region1: #{custom-call.178} parent=0
    #allocation0 [shape = 'u8[4096]{0}', space=vmem, size = 0x1000, scoped, tag = 'operand span for operand 0']
    #allocation1 [shape = 'u8[2048]{0}', space=vmem, size = 0x800, scoped, tag = 'packed  for operand 0']
    #allocation2 [shape = 'u8[4096]{0}', space=vmem, size = 0x1000, scoped, tag = 'operand span for operand 1']
    #allocation3 [shape = 'u8[2048]{0}', space=vmem, size = 0x800, scoped, tag = 'packed  for operand 1']
    // Predicated region
    $region2: #{custom-call.178} parent=1 // pred_check
      _
    $region3: #{custom-call.178} parent=1 // pred_check_branch
      %3 = sbr.rel (0) target = $region5
    $region4: #{custom-call.178} parent=1 // pred_region
      // Predicated region
      $region6: #{custom-call.178} parent=4 // pred_check
        _
      $region7: #{custom-call.178} parent=4 // pred_check_branch
        %5 = sbr.rel target = $region9
      $region8: #{custom-call.178} parent=4 // pred_region
        // Predicated region
        $region21: #{custom-call.178} parent=8 // pred_check
          _
        $region22: #{custom-call.178} parent=8 // pred_check_branch
          %20 = sbr.rel (0) target = $region24
        $region23: #{custom-call.178} parent=8 // pred_region
          loop: start=0, step=1, limit=1
          $region25: #{custom-call.178} parent=23 // loop_pre_header
            _
          $region26: #{custom-call.178} parent=23 // loop_header
            %s23 = sphi 0, %s27
            %p24 = scmp.ge.s32.totalorder %s23, 1
            %s28 = sphi %s0, %s0
            %s29 = sphi [#allocation1], [#allocation1]
          $region27: #{custom-call.178} parent=23 // loop_header_branch
            %26 = sbr.rel (%p24) target = $region31
          $region28: #{custom-call.178} parent=23 // loop_body
            %v30 = vld [vmem:[%s28] sm:$0xf]
            %31 = vst [vmem:[%s29] sm:$0xf] %v30
          $region29: #{custom-call.178} parent=23 // loop_footer
            %s27 = sadd.s32 1, %s23
          $region30: #{custom-call.178} parent=23 // loop_footer_branch
            %22 = sbr.rel target = $region26
          $region31: #{custom-call.178} parent=23 // loop_exit
            _
        $region24: #{custom-call.178} parent=8 // pred_fallthru
          _
      $region9: #{custom-call.178} parent=4 // pred_fallthru
        _
      // Predicated region
      $region10: #{custom-call.178} parent=4 // pred_check
        _
      $region11: #{custom-call.178} parent=4 // pred_check_branch
        %7 = sbr.rel (0) target = $region13
      $region12: #{custom-call.178} parent=4 // pred_region
        loop: start=0, step=1, limit=1
        $region14: #{custom-call.178} parent=12 // loop_pre_header
          _
        $region15: #{custom-call.178} parent=12 // loop_header
          %s10 = sphi 0, %s14
          %p11 = scmp.ge.s32.totalorder %s10, 1
          %s15 = sphi %s0, %s0
          %s16 = sphi [#allocation1], [#allocation1]
        $region16: #{custom-call.178} parent=12 // loop_header_branch
          %13 = sbr.rel (%p11) target = $region20
        $region17: #{custom-call.178} parent=12 // loop_body
          %v17 = vld [vmem:[%s15] sm:$0xf]
          %18 = vst [vmem:[%s16] sm:$0xf] %v17
        $region18: #{custom-call.178} parent=12 // loop_footer
          %s14 = sadd.s32 1, %s10
        $region19: #{custom-call.178} parent=12 // loop_footer_branch
          %9 = sbr.rel target = $region15
        $region20: #{custom-call.178} parent=12 // loop_exit
          _
      $region13: #{custom-call.178} parent=4 // pred_fallthru
        _
    $region5: #{custom-call.178} parent=1 // pred_fallthru
      _
    %32 = vnop
    %s34 = sshllo.u32 0, 4
    %v35 = vld [vmem:[#allocation1] sm:%s34]
    %36 = vst [vmem:[#allocation0] sm:%s34] %v35
    %37 = vst [vmem:[#allocation2] sm:$0xff] 0.0
    %vm38 = vcmask 7168
    %v39 = vld [vmem:[#allocation2] ss:$0 sm:$0xff]
    %v40 = vld [vmem:[#allocation0] ss:$0 sm:$0xff]
    %v41 = vmul.f32 %v39, %v39
    %42 = vadd.xlane.f32.xlu0 %v41
    %v43 = vpop.xlane.xlu0 %42
    %v44 = vsub.f32 %v40, %v43
    %v45 = vrsqrt.pop %v44
    %v46 = vld [vmem:[#allocation0] sm:$0xff]
    %v47 = vld [vmem:[#allocation2] sm:$0xff]
    %v48 = vmul.f32 %v47, %v39
    %49 = vadd.xlane.f32.xlu0 %v48
    %v50 = vpop.xlane.xlu0 %49
    %v51 = vsub.f32 %v46, %v50
    %v52 = vmul.f32 %v51, %v45
    %v53 = vsel %vm38, %v52, 0.0
    %v54 = vadd.f32 %v47, %v53
    %55 = vst [vmem:[#allocation2] sm:$0xff] %v54
    %vm56 = vcmask 15368
    %s57 = scalar_lea.vmem [#allocation2], 1
    %v58 = vld [vmem:[%s57] ss:$0 sm:$0xff]
    %s59 = scalar_lea.vmem [#allocation0], 1
    %v60 = vld [vmem:[%s59] ss:$0 sm:$0xff]
    %v61 = vmul.f32 %v58, %v58
    %62 = vadd.xlane.f32.xlu0 %v61
    %v63 = vpop.xlane.xlu0 %62
    %v64 = vsub.f32 %v60, %v63
    %v65 = vrsqrt.pop %v64
    %v66 = vld [vmem:[#allocation0] sm:$0xff]
    %v67 = vld [vmem:[#allocation2] sm:$0xff]
    %v68 = vmul.f32 %v67, %v58
    %69 = vadd.xlane.f32.xlu0 %v68
    %v70 = vpop.xlane.xlu0 %69
    %v71 = vsub.f32 %v66, %v70
    %v72 = vmul.f32 %v71, %v65
    %vm73 = vcmask 1047553
    %vm74 = vmand %vm56, %vm73
    %v75 = vsel %vm74, %v72, 0.0
    %v76 = vadd.f32 %v67, %v75
    %77 = vst [vmem:[#allocation2] sm:$0xff] %v76
    %vm78 = vcmask 23568
    %s79 = scalar_lea.vmem [#allocation2], 2
    %v80 = vld [vmem:[%s79] ss:$0 sm:$0xff]
    %s81 = scalar_lea.vmem [#allocation0], 2
    %v82 = vld [vmem:[%s81] ss:$0 sm:$0xff]
    %v83 = vmul.f32 %v80, %v80
    %84 = vadd.xlane.f32.xlu0 %v83
    %v85 = vpop.xlane.xlu0 %84
    %v86 = vsub.f32 %v82, %v85
    %v87 = vrsqrt.pop %v86
    %v88 = vld [vmem:[#allocation0] sm:$0xff]
    %v89 = vld [vmem:[#allocation2] sm:$0xff]
    %v90 = vmul.f32 %v89, %v80
    %91 = vadd.xlane.f32.xlu0 %v90
    %v92 = vpop.xlane.xlu0 %91
    %v93 = vsub.f32 %v88, %v92
    %v94 = vmul.f32 %v93, %v87
    %vm95 = vcmask 1047554
    %vm96 = vmand %vm78, %vm95
    %v97 = vsel %vm96, %v94, 0.0
    %v98 = vadd.f32 %v89, %v97
    %99 = vst [vmem:[#allocation2] sm:$0xff] %v98
    %s101 = sshllo.u32 0, 4
    %v103 = vld [vmem:[#allocation2] sm:%s101]
    %s104 = sshllo.u32 0, 4
    %105 = vst [vmem:[#allocation3] sm:%s104] %v103
    // Predicated region
    $region32: #{custom-call.178} parent=1 // pred_check
      _
    $region33: #{custom-call.178} parent=1 // pred_check_branch
      %107 = sbr.rel (0) target = $region35
    $region34: #{custom-call.178} parent=1 // pred_region
      // Predicated region
      $region36: #{custom-call.178} parent=34 // pred_check
        _
      $region37: #{custom-call.178} parent=34 // pred_check_branch
        %109 = sbr.rel target = $region39
      $region38: #{custom-call.178} parent=34 // pred_region
        // Predicated region
        $region51: #{custom-call.178} parent=38 // pred_check
          _
        $region52: #{custom-call.178} parent=38 // pred_check_branch
          %124 = sbr.rel (0) target = $region54
        $region53: #{custom-call.178} parent=38 // pred_region
          loop: start=0, step=1, limit=1
          $region55: #{custom-call.178} parent=53 // loop_pre_header
            _
          $region56: #{custom-call.178} parent=53 // loop_header
            %s127 = sphi 0, %s131
            %p128 = scmp.ge.s32.totalorder %s127, 1
            %s132 = sphi [#allocation3], [#allocation3]
            %s133 = sphi %s1, %s1
          $region57: #{custom-call.178} parent=53 // loop_header_branch
            %130 = sbr.rel (%p128) target = $region61
          $region58: #{custom-call.178} parent=53 // loop_body
            %v134 = vld [vmem:[%s132] sm:$0xf]
            %135 = vst [vmem:[%s133] sm:$0xf] %v134
          $region59: #{custom-call.178} parent=53 // loop_footer
            %s131 = sadd.s32 1, %s127
          $region60: #{custom-call.178} parent=53 // loop_footer_branch
            %126 = sbr.rel target = $region56
          $region61: #{custom-call.178} parent=53 // loop_exit
            _
        $region54: #{custom-call.178} parent=38 // pred_fallthru
          _
      $region39: #{custom-call.178} parent=34 // pred_fallthru
        _
      // Predicated region
      $region40: #{custom-call.178} parent=34 // pred_check
        _
      $region41: #{custom-call.178} parent=34 // pred_check_branch
        %111 = sbr.rel (0) target = $region43
      $region42: #{custom-call.178} parent=34 // pred_region
        loop: start=0, step=1, limit=1
        $region44: #{custom-call.178} parent=42 // loop_pre_header
          _
        $region45: #{custom-call.178} parent=42 // loop_header
          %s114 = sphi 0, %s118
          %p115 = scmp.ge.s32.totalorder %s114, 1
          %s119 = sphi [#allocation3], [#allocation3]
          %s120 = sphi %s1, %s1
        $region46: #{custom-call.178} parent=42 // loop_header_branch
          %117 = sbr.rel (%p115) target = $region50
        $region47: #{custom-call.178} parent=42 // loop_body
          %v121 = vld [vmem:[%s119] sm:$0xf]
          %122 = vst [vmem:[%s120] sm:$0xf] %v121
        $region48: #{custom-call.178} parent=42 // loop_footer
          %s118 = sadd.s32 1, %s114
        $region49: #{custom-call.178} parent=42 // loop_footer_branch
          %113 = sbr.rel target = $region45
        $region50: #{custom-call.178} parent=42 // loop_exit
          _
      $region43: #{custom-call.178} parent=34 // pred_fallthru
        _
    $region35: #{custom-call.178} parent=1 // pred_fallthru
      _
    %136 = vnop

// kernel: custom-call.179
$region0: #{custom-call.179}
  %s0 = inlined_call_operand.vmem [shape: f32[1,3,3], index: 0, kind: input, shape index: {}]
  %s1 = inlined_call_operand.vmem [shape: f32[1,3,3], index: 1, kind: output, shape index: {}]
  $region1: #{custom-call.179} parent=0
    #allocation0 [shape = 'u8[4096]{0}', space=vmem, size = 0x1000, scoped, tag = 'operand span for operand 0']
    #allocation1 [shape = 'u8[2048]{0}', space=vmem, size = 0x800, scoped, tag = 'packed  for operand 0']
    #allocation2 [shape = 'u8[4096]{0}', space=vmem, size = 0x1000, scoped, tag = 'operand span for operand 1']
    #allocation3 [shape = 'u8[2048]{0}', space=vmem, size = 0x800, scoped, tag = 'packed  for operand 1']
    #allocation4 [shape = 'f32[3,3]{1,0}', space=vmem, size = 0x1000, scoped, tag = 'rescaled input a']
    // Predicated region
    $region2: #{custom-call.179} parent=1 // pred_check
      _
    $region3: #{custom-call.179} parent=1 // pred_check_branch
      %3 = sbr.rel (0) target = $region5
    $region4: #{custom-call.179} parent=1 // pred_region
      // Predicated region
      $region6: #{custom-call.179} parent=4 // pred_check
        _
      $region7: #{custom-call.179} parent=4 // pred_check_branch
        %5 = sbr.rel target = $region9
      $region8: #{custom-call.179} parent=4 // pred_region
        // Predicated region
        $region21: #{custom-call.179} parent=8 // pred_check
          _
        $region22: #{custom-call.179} parent=8 // pred_check_branch
          %20 = sbr.rel (0) target = $region24
        $region23: #{custom-call.179} parent=8 // pred_region
          loop: start=0, step=1, limit=1
          $region25: #{custom-call.179} parent=23 // loop_pre_header
            _
          $region26: #{custom-call.179} parent=23 // loop_header
            %s23 = sphi 0, %s27
            %p24 = scmp.ge.s32.totalorder %s23, 1
            %s28 = sphi %s0, %s0
            %s29 = sphi [#allocation1], [#allocation1]
          $region27: #{custom-call.179} parent=23 // loop_header_branch
            %26 = sbr.rel (%p24) target = $region31
          $region28: #{custom-call.179} parent=23 // loop_body
            %v30 = vld [vmem:[%s28] sm:$0xf]
            %31 = vst [vmem:[%s29] sm:$0xf] %v30
          $region29: #{custom-call.179} parent=23 // loop_footer
            %s27 = sadd.s32 1, %s23
          $region30: #{custom-call.179} parent=23 // loop_footer_branch
            %22 = sbr.rel target = $region26
          $region31: #{custom-call.179} parent=23 // loop_exit
            _
        $region24: #{custom-call.179} parent=8 // pred_fallthru
          _
      $region9: #{custom-call.179} parent=4 // pred_fallthru
        _
      // Predicated region
      $region10: #{custom-call.179} parent=4 // pred_check
        _
      $region11: #{custom-call.179} parent=4 // pred_check_branch
        %7 = sbr.rel (0) target = $region13
      $region12: #{custom-call.179} parent=4 // pred_region
        loop: start=0, step=1, limit=1
        $region14: #{custom-call.179} parent=12 // loop_pre_header
          _
        $region15: #{custom-call.179} parent=12 // loop_header
          %s10 = sphi 0, %s14
          %p11 = scmp.ge.s32.totalorder %s10, 1
          %s15 = sphi %s0, %s0
          %s16 = sphi [#allocation1], [#allocation1]
        $region16: #{custom-call.179} parent=12 // loop_header_branch
          %13 = sbr.rel (%p11) target = $region20
        $region17: #{custom-call.179} parent=12 // loop_body
          %v17 = vld [vmem:[%s15] sm:$0xf]
          %18 = vst [vmem:[%s16] sm:$0xf] %v17
        $region18: #{custom-call.179} parent=12 // loop_footer
          %s14 = sadd.s32 1, %s10
        $region19: #{custom-call.179} parent=12 // loop_footer_branch
          %9 = sbr.rel target = $region15
        $region20: #{custom-call.179} parent=12 // loop_exit
          _
      $region13: #{custom-call.179} parent=4 // pred_fallthru
        _
    $region5: #{custom-call.179} parent=1 // pred_fallthru
      _
    %32 = vnop
    %s34 = sshllo.u32 0, 4
    %v35 = vld [vmem:[#allocation1] sm:%s34]
    %36 = vst [vmem:[#allocation0] sm:%s34] %v35
    %v37 = vlaneseq
    %v38 = vand.u32 %v37, 127
    %vm39 = vcmp.lt.s32.totalorder %v38, 3
    %v40 = vlaneseq
    %v41 = vshrl.u32 %v40, 7
    %vm43 = vcmp.eq.s32.totalorder %v41, %v38
    %v44 = vld [vmem:[#allocation0] sm:$0xff]
    %v45 = vsel %vm43, %v44, 0.0
    %46 = vadd.xlane.f32.xlu0 %v45
    %v47 = vpop.xlane.xlu0 %46
    %vm48 = vcmp.ge.s32.totalorder %v41, %v38
    %vm49 = vmand %vm48, %vm39
    %v50 = vsel %vm49, %v44, 0.0
    %v51 = vrcp.pop %v47
    %v52 = vmul.f32 %v50, %v51
    %53 = vst [vmem:[#allocation4] sm:$0xff] %v52
    %v54 = vlaneseq
    %v55 = vand.u32 %v54, 127
    %v56 = vlaneseq
    %v57 = vshrl.u32 %v56, 7
    %vm59 = vcmp.eq.s32.totalorder %v55, %v57
    %v60 = vlaneseq
    %v61 = vand.u32 %v60, 127
    %vm62 = vcmp.eq.s32.totalorder %v61, 0
    %v63 = vsel %vm62, 1.0, -1.0
    %v64 = vsel %vm59, %v63, 0.0
    %s65 = scalar_lea.vmem [#allocation4], 1
    %v66 = vld [vmem:[%s65] ss:$0 sm:$0xff]
    %v67 = vxor.u32 %v66, 2147483648
    %v68 = vlaneseq
    %v69 = vand.u32 %v68, 127
    %vm70 = vcmp.eq.s32.totalorder %v69, 1
    %v71 = vmul.f32 %v67, %v64
    %72 = vadd.xlane.f32.xlu0 %v71
    %v73 = vpop.xlane.xlu0 %72
    %v74 = vsel %vm70, %v73, %v64
    %s75 = scalar_lea.vmem [#allocation4], 2
    %v76 = vld [vmem:[%s75] ss:$0 sm:$0xff]
    %v77 = vxor.u32 %v76, 2147483648
    %v78 = vlaneseq
    %v79 = vand.u32 %v78, 127
    %vm80 = vcmp.eq.s32.totalorder %v79, 2
    %v81 = vmul.f32 %v77, %v74
    %82 = vadd.xlane.f32.xlu0 %v81
    %v83 = vpop.xlane.xlu0 %82
    %v84 = vsel %vm80, %v83, %v74
    %v85 = vrcp.pop %v47
    %v86 = vmul.f32 %v84, %v85
    %vm87 = vweird.f32 %v47
    %v88 = vsel %vm87, %v84, %v86
    %89 = vst [vmem:[#allocation2] sm:$0xff] %v88
    %s91 = sshllo.u32 0, 4
    %v93 = vld [vmem:[#allocation2] sm:%s91]
    %s94 = sshllo.u32 0, 4
    %95 = vst [vmem:[#allocation3] sm:%s94] %v93
    // Predicated region
    $region32: #{custom-call.179} parent=1 // pred_check
      _
    $region33: #{custom-call.179} parent=1 // pred_check_branch
      %97 = sbr.rel (0) target = $region35
    $region34: #{custom-call.179} parent=1 // pred_region
      // Predicated region
      $region36: #{custom-call.179} parent=34 // pred_check
        _
      $region37: #{custom-call.179} parent=34 // pred_check_branch
        %99 = sbr.rel target = $region39
      $region38: #{custom-call.179} parent=34 // pred_region
        // Predicated region
        $region51: #{custom-call.179} parent=38 // pred_check
          _
        $region52: #{custom-call.179} parent=38 // pred_check_branch
          %114 = sbr.rel (0) target = $region54
        $region53: #{custom-call.179} parent=38 // pred_region
          loop: start=0, step=1, limit=1
          $region55: #{custom-call.179} parent=53 // loop_pre_header
            _
          $region56: #{custom-call.179} parent=53 // loop_header
            %s117 = sphi 0, %s121
            %p118 = scmp.ge.s32.totalorder %s117, 1
            %s122 = sphi [#allocation3], [#allocation3]
            %s123 = sphi %s1, %s1
          $region57: #{custom-call.179} parent=53 // loop_header_branch
            %120 = sbr.rel (%p118) target = $region61
          $region58: #{custom-call.179} parent=53 // loop_body
            %v124 = vld [vmem:[%s122] sm:$0xf]
            %125 = vst [vmem:[%s123] sm:$0xf] %v124
          $region59: #{custom-call.179} parent=53 // loop_footer
            %s121 = sadd.s32 1, %s117
          $region60: #{custom-call.179} parent=53 // loop_footer_branch
            %116 = sbr.rel target = $region56
          $region61: #{custom-call.179} parent=53 // loop_exit
            _
        $region54: #{custom-call.179} parent=38 // pred_fallthru
          _
      $region39: #{custom-call.179} parent=34 // pred_fallthru
        _
      // Predicated region
      $region40: #{custom-call.179} parent=34 // pred_check
        _
      $region41: #{custom-call.179} parent=34 // pred_check_branch
        %101 = sbr.rel (0) target = $region43
      $region42: #{custom-call.179} parent=34 // pred_region
        loop: start=0, step=1, limit=1
        $region44: #{custom-call.179} parent=42 // loop_pre_header
          _
        $region45: #{custom-call.179} parent=42 // loop_header
          %s104 = sphi 0, %s108
          %p105 = scmp.ge.s32.totalorder %s104, 1
          %s109 = sphi [#allocation3], [#allocation3]
          %s110 = sphi %s1, %s1
        $region46: #{custom-call.179} parent=42 // loop_header_branch
          %107 = sbr.rel (%p105) target = $region50
        $region47: #{custom-call.179} parent=42 // loop_body
          %v111 = vld [vmem:[%s109] sm:$0xf]
          %112 = vst [vmem:[%s110] sm:$0xf] %v111
        $region48: #{custom-call.179} parent=42 // loop_footer
          %s108 = sadd.s32 1, %s104
        $region49: #{custom-call.179} parent=42 // loop_footer_branch
          %103 = sbr.rel target = $region45
        $region50: #{custom-call.179} parent=42 // loop_exit
          _
      $region43: #{custom-call.179} parent=34 // pred_fallthru
        _
    $region35: #{custom-call.179} parent=1 // pred_fallthru
      _
    %126 = vnop

// kernel: custom-call.121
$region0: #{custom-call.121}
  %s0 = inlined_call_operand.vmem [shape: f32[2,2], index: 0, kind: input, shape index: {}]
  %s1 = inlined_call_operand.vmem [shape: f32[2,2], index: 1, kind: input, shape index: {}]
  %s2 = inlined_call_operand.vmem [shape: f32[2,2], index: 2, kind: input, shape index: {}]
  %s3 = inlined_call_operand.vmem [shape: f32[2,2], index: 3, kind: input, shape index: {}]
  %s4 = inlined_call_operand.vmem [shape: f32[2], index: 4, kind: output, shape index: {0}]
  %s5 = inlined_call_operand.vmem [shape: f32[2], index: 5, kind: output, shape index: {1}]
  %s6 = inlined_call_operand.vmem [shape: f32[2,2], index: 6, kind: output, shape index: {2}]
  %s7 = inlined_call_operand.vmem [shape: f32[2,2], index: 7, kind: output, shape index: {3}]
  %s8 = inlined_call_operand.vmem [shape: f32[2,2], index: 8, kind: output, shape index: {4}]
  %s9 = inlined_call_operand.vmem [shape: f32[2,2], index: 9, kind: output, shape index: {5}]
  %10 = xla_tuple %s4, %s5, %s6, %s7, %s8, %s9
  $region1: #{custom-call.121} parent=0
    #allocation0 [shape = 'u8[4096]{0}', space=vmem, size = 0x1000, scoped, tag = 'operand span for operand 0']
    #allocation1 [shape = 'u8[1024]{0}', space=vmem, size = 0x400, scoped, tag = 'packed  for operand 0']
    #allocation2 [shape = 'u8[4096]{0}', space=vmem, size = 0x1000, scoped, tag = 'operand span for operand 1']
    #allocation3 [shape = 'u8[1024]{0}', space=vmem, size = 0x400, scoped, tag = 'packed  for operand 1']
    #allocation4 [shape = 'u8[4096]{0}', space=vmem, size = 0x1000, scoped, tag = 'operand span for operand 2']
    #allocation5 [shape = 'u8[1024]{0}', space=vmem, size = 0x400, scoped, tag = 'packed  for operand 2']
    #allocation6 [shape = 'u8[4096]{0}', space=vmem, size = 0x1000, scoped, tag = 'operand span for operand 3']
    #allocation7 [shape = 'u8[1024]{0}', space=vmem, size = 0x400, scoped, tag = 'packed  for operand 3']
    #allocation8 [shape = 'u8[4096]{0}', space=vmem, size = 0x1000, scoped, tag = 'operand span for operand 4']
    #allocation9 [shape = 'u8[512]{0}', space=vmem, size = 0x400, scoped, tag = 'packed  for operand 4']
    #allocation10 [shape = 'u8[4096]{0}', space=vmem, size = 0x1000, scoped, tag = 'operand span for operand 5']
    #allocation11 [shape = 'u8[512]{0}', space=vmem, size = 0x400, scoped, tag = 'packed  for operand 5']
    #allocation12 [shape = 'u8[4096]{0}', space=vmem, size = 0x1000, scoped, tag = 'operand span for operand 6']
    #allocation13 [shape = 'u8[1024]{0}', space=vmem, size = 0x400, scoped, tag = 'packed  for operand 6']
    #allocation14 [shape = 'u8[4096]{0}', space=vmem, size = 0x1000, scoped, tag = 'operand span for operand 7']
    #allocation15 [shape = 'u8[1024]{0}', space=vmem, size = 0x400, scoped, tag = 'packed  for operand 7']
    #allocation16 [shape = 'u8[4096]{0}', space=vmem, size = 0x1000, scoped, tag = 'operand span for operand 8']
    #allocation17 [shape = 'u8[1024]{0}', space=vmem, size = 0x400, scoped, tag = 'packed  for operand 8']
    #allocation18 [shape = 'u8[4096]{0}', space=vmem, size = 0x1000, scoped, tag = 'operand span for operand 9']
    #allocation19 [shape = 'u8[1024]{0}', space=vmem, size = 0x400, scoped, tag = 'packed  for operand 9']
    #allocation20 [shape = 'f32[2,2]{1,0}', space=vmem, size = 0x1000, scoped, tag = 'a top-left matrix']
    #allocation21 [shape = 'f32[2,2]{1,0}', space=vmem, size = 0x1000, scoped, tag = 'a top-right matrix']
    #allocation22 [shape = 'f32[2,2]{1,0}', space=vmem, size = 0x1000, scoped, tag = 'a bottom-left matrix']
    #allocation23 [shape = 'f32[2,2]{1,0}', space=vmem, size = 0x1000, scoped, tag = 'a bottom-right matrix']
    %p12 = scmp.gt.s32.totalorder 2, 0
    // Predicated region
    $region2: #{custom-call.121} parent=1 // pred_check
      %p13 = pneg %p12
    $region3: #{custom-call.121} parent=1 // pred_check_branch
      %15 = sbr.rel (%p13) target = $region5
    $region4: #{custom-call.121} parent=1 // pred_region
      %s16 = sshra.s32 2, 3
      %p17 = scmp.gt.s32.totalorder %s16, 0
      // Predicated region
      $region6: #{custom-call.121} parent=4 // pred_check
        %p18 = pneg %p17
      $region7: #{custom-call.121} parent=4 // pred_check_branch
        %20 = sbr.rel (%p18) target = $region9
      $region8: #{custom-call.121} parent=4 // pred_region
        %s21 = ssub.s32 %s16, 1
        %s22 = smul.u32 %s21, 128
        %s23 = sshra.s32 %s22, 4
        %s24 = scalar_lea.vmem %s0, %s23
        %v25 = vld [vmem:[%s0] sm:$0xff]
        // While loop
        $region10: #{custom-call.121} parent=8 // loop_pre_header
          _
        $region11: #{custom-call.121} parent=8 // loop_header
          %s26 = sphi %s0, %s48
          %s27 = sphi [#allocation1], %s49
          %v28 = vphi %v25, %v50
          %s29 = ssub.s32 %s24, 64
          %p30 = scmp.gt.s32.totalorder %s26, %s29
        $region12: #{custom-call.121} parent=8 // loop_header_branch
          %32 = sbr.rel (%p30) target = $region16
        $region13: #{custom-call.121} parent=8 // loop_body
          %33 = vst [vmem:[%s27] sm:$0xff] %v28
          %v34 = vld [vmem:[%s26 + $0x8] sm:$0xff]
          %35 = vst [vmem:[%s27 + $0x8] sm:$0xff] %v34
          %v36 = vld [vmem:[%s26 + $0x10] sm:$0xff]
          %37 = vst [vmem:[%s27 + $0x10] sm:$0xff] %v36
          %v38 = vld [vmem:[%s26 + $0x18] sm:$0xff]
          %39 = vst [vmem:[%s27 + $0x18] sm:$0xff] %v38
          %v40 = vld [vmem:[%s26 + $0x20] sm:$0xff]
          %41 = vst [vmem:[%s27 + $0x20] sm:$0xff] %v40
          %v42 = vld [vmem:[%s26 + $0x28] sm:$0xff]
          %43 = vst [vmem:[%s27 + $0x28] sm:$0xff] %v42
          %v44 = vld [vmem:[%s26 + $0x30] sm:$0xff]
          %45 = vst [vmem:[%s27 + $0x30] sm:$0xff] %v44
          %v46 = vld [vmem:[%s26 + $0x38] sm:$0xff]
          %47 = vst [vmem:[%s27 + $0x38] sm:$0xff] %v46
        $region14: #{custom-call.121} parent=8 // loop_footer
          %s48 = scalar_lea.vmem %s26, 64
          %s49 = scalar_lea.vmem %s27, 64
          %v50 = vld [vmem:[%s26 + $0x40] sm:$0xff]
        $region15: #{custom-call.121} parent=8 // loop_footer_branch
          %51 = sbr.rel target = $region11
        $region16: #{custom-call.121} parent=8 // loop_exit
          _
        // While loop
        $region17: #{custom-call.121} parent=8 // loop_pre_header
          _
        $region18: #{custom-call.121} parent=8 // loop_header
          %s52 = sphi %s26, %s60
          %s53 = sphi %s27, %s61
          %v54 = vphi %v28, %v54
          %p55 = scmp.gt.s32.totalorder %s52, %s24
        $region19: #{custom-call.121} parent=8 // loop_header_branch
          %57 = sbr.rel (%p55) target = $region23
        $region20: #{custom-call.121} parent=8 // loop_body
          %v58 = vld [vmem:[%s52] sm:$0xff]
          %59 = vst [vmem:[%s53] sm:$0xff] %v58
        $region21: #{custom-call.121} parent=8 // loop_footer
          %s60 = scalar_lea.vmem %s52, 8
          %s61 = scalar_lea.vmem %s53, 8
        $region22: #{custom-call.121} parent=8 // loop_footer_branch
          %62 = sbr.rel target = $region18
        $region23: #{custom-call.121} parent=8 // loop_exit
          _
      $region9: #{custom-call.121} parent=4 // pred_fallthru
        _
      %s63 = sand.u32 2, 7
      %s64 = sshllo.u32 0, %s63
      %s65 = smul.u32 %s16, 128
      %s66 = sshra.s32 %s65, 4
      %s67 = scalar_lea.vmem [#allocation1], %s66
      %s68 = smul.u32 %s16, 128
      %s69 = sshra.s32 %s68, 4
      %s70 = scalar_lea.vmem %s0, %s69
      %v71 = vld [vmem:[%s70] sm:%s64]
      %72 = vst [vmem:[%s67] sm:%s64] %v71
    $region5: #{custom-call.121} parent=1 // pred_fallthru
      _
    %p74 = scmp.gt.s32.totalorder 2, 0
    // Predicated region
    $region24: #{custom-call.121} parent=1 // pred_check
      %p75 = pneg %p74
    $region25: #{custom-call.121} parent=1 // pred_check_branch
      %77 = sbr.rel (%p75) target = $region27
    $region26: #{custom-call.121} parent=1 // pred_region
      %s78 = sshra.s32 2, 3
      %p79 = scmp.gt.s32.totalorder %s78, 0
      // Predicated region
      $region28: #{custom-call.121} parent=26 // pred_check
        %p80 = pneg %p79
      $region29: #{custom-call.121} parent=26 // pred_check_branch
        %82 = sbr.rel (%p80) target = $region31
      $region30: #{custom-call.121} parent=26 // pred_region
        %s83 = ssub.s32 %s78, 1
        %s84 = smul.u32 %s83, 128
        %s85 = sshra.s32 %s84, 4
        %s86 = scalar_lea.vmem %s1, %s85
        %v87 = vld [vmem:[%s1] sm:$0xff]
        // While loop
        $region32: #{custom-call.121} parent=30 // loop_pre_header
          _
        $region33: #{custom-call.121} parent=30 // loop_header
          %s88 = sphi %s1, %s110
          %s89 = sphi [#allocation3], %s111
          %v90 = vphi %v87, %v112
          %s91 = ssub.s32 %s86, 64
          %p92 = scmp.gt.s32.totalorder %s88, %s91
        $region34: #{custom-call.121} parent=30 // loop_header_branch
          %94 = sbr.rel (%p92) target = $region38
        $region35: #{custom-call.121} parent=30 // loop_body
          %95 = vst [vmem:[%s89] sm:$0xff] %v90
          %v96 = vld [vmem:[%s88 + $0x8] sm:$0xff]
          %97 = vst [vmem:[%s89 + $0x8] sm:$0xff] %v96
          %v98 = vld [vmem:[%s88 + $0x10] sm:$0xff]
          %99 = vst [vmem:[%s89 + $0x10] sm:$0xff] %v98
          %v100 = vld [vmem:[%s88 + $0x18] sm:$0xff]
          %101 = vst [vmem:[%s89 + $0x18] sm:$0xff] %v100
          %v102 = vld [vmem:[%s88 + $0x20] sm:$0xff]
          %103 = vst [vmem:[%s89 + $0x20] sm:$0xff] %v102
          %v104 = vld [vmem:[%s88 + $0x28] sm:$0xff]
          %105 = vst [vmem:[%s89 + $0x28] sm:$0xff] %v104
          %v106 = vld [vmem:[%s88 + $0x30] sm:$0xff]
          %107 = vst [vmem:[%s89 + $0x30] sm:$0xff] %v106
          %v108 = vld [vmem:[%s88 + $0x38] sm:$0xff]
          %109 = vst [vmem:[%s89 + $0x38] sm:$0xff] %v108
        $region36: #{custom-call.121} parent=30 // loop_footer
          %s110 = scalar_lea.vmem %s88, 64
          %s111 = scalar_lea.vmem %s89, 64
          %v112 = vld [vmem:[%s88 + $0x40] sm:$0xff]
        $region37: #{custom-call.121} parent=30 // loop_footer_branch
          %113 = sbr.rel target = $region33
        $region38: #{custom-call.121} parent=30 // loop_exit
          _
        // While loop
        $region39: #{custom-call.121} parent=30 // loop_pre_header
          _
        $region40: #{custom-call.121} parent=30 // loop_header
          %s114 = sphi %s88, %s122
          %s115 = sphi %s89, %s123
          %v116 = vphi %v90, %v116
          %p117 = scmp.gt.s32.totalorder %s114, %s86
        $region41: #{custom-call.121} parent=30 // loop_header_branch
          %119 = sbr.rel (%p117) target = $region45
        $region42: #{custom-call.121} parent=30 // loop_body
          %v120 = vld [vmem:[%s114] sm:$0xff]
          %121 = vst [vmem:[%s115] sm:$0xff] %v120
        $region43: #{custom-call.121} parent=30 // loop_footer
          %s122 = scalar_lea.vmem %s114, 8
          %s123 = scalar_lea.vmem %s115, 8
        $region44: #{custom-call.121} parent=30 // loop_footer_branch
          %124 = sbr.rel target = $region40
        $region45: #{custom-call.121} parent=30 // loop_exit
          _
      $region31: #{custom-call.121} parent=26 // pred_fallthru
        _
      %s125 = sand.u32 2, 7
      %s126 = sshllo.u32 0, %s125
      %s127 = smul.u32 %s78, 128
      %s128 = sshra.s32 %s127, 4
      %s129 = scalar_lea.vmem [#allocation3], %s128
      %s130 = smul.u32 %s78, 128
      %s131 = sshra.s32 %s130, 4
      %s132 = scalar_lea.vmem %s1, %s131
      %v133 = vld [vmem:[%s132] sm:%s126]
      %134 = vst [vmem:[%s129] sm:%s126] %v133
    $region27: #{custom-call.121} parent=1 // pred_fallthru
      _
    %p136 = scmp.gt.s32.totalorder 2, 0
    // Predicated region
    $region46: #{custom-call.121} parent=1 // pred_check
      %p137 = pneg %p136
    $region47: #{custom-call.121} parent=1 // pred_check_branch
      %139 = sbr.rel (%p137) target = $region49
    $region48: #{custom-call.121} parent=1 // pred_region
      %s140 = sshra.s32 2, 3
      %p141 = scmp.gt.s32.totalorder %s140, 0
      // Predicated region
      $region50: #{custom-call.121} parent=48 // pred_check
        %p142 = pneg %p141
      $region51: #{custom-call.121} parent=48 // pred_check_branch
        %144 = sbr.rel (%p142) target = $region53
      $region52: #{custom-call.121} parent=48 // pred_region
        %s145 = ssub.s32 %s140, 1
        %s146 = smul.u32 %s145, 128
        %s147 = sshra.s32 %s146, 4
        %s148 = scalar_lea.vmem %s2, %s147
        %v149 = vld [vmem:[%s2] sm:$0xff]
        // While loop
        $region54: #{custom-call.121} parent=52 // loop_pre_header
          _
        $region55: #{custom-call.121} parent=52 // loop_header
          %s150 = sphi %s2, %s172
          %s151 = sphi [#allocation5], %s173
          %v152 = vphi %v149, %v174
          %s153 = ssub.s32 %s148, 64
          %p154 = scmp.gt.s32.totalorder %s150, %s153
        $region56: #{custom-call.121} parent=52 // loop_header_branch
          %156 = sbr.rel (%p154) target = $region60
        $region57: #{custom-call.121} parent=52 // loop_body
          %157 = vst [vmem:[%s151] sm:$0xff] %v152
          %v158 = vld [vmem:[%s150 + $0x8] sm:$0xff]
          %159 = vst [vmem:[%s151 + $0x8] sm:$0xff] %v158
          %v160 = vld [vmem:[%s150 + $0x10] sm:$0xff]
          %161 = vst [vmem:[%s151 + $0x10] sm:$0xff] %v160
          %v162 = vld [vmem:[%s150 + $0x18] sm:$0xff]
          %163 = vst [vmem:[%s151 + $0x18] sm:$0xff] %v162
          %v164 = vld [vmem:[%s150 + $0x20] sm:$0xff]
          %165 = vst [vmem:[%s151 + $0x20] sm:$0xff] %v164
          %v166 = vld [vmem:[%s150 + $0x28] sm:$0xff]
          %167 = vst [vmem:[%s151 + $0x28] sm:$0xff] %v166
          %v168 = vld [vmem:[%s150 + $0x30] sm:$0xff]
          %169 = vst [vmem:[%s151 + $0x30] sm:$0xff] %v168
          %v170 = vld [vmem:[%s150 + $0x38] sm:$0xff]
          %171 = vst [vmem:[%s151 + $0x38] sm:$0xff] %v170
        $region58: #{custom-call.121} parent=52 // loop_footer
          %s172 = scalar_lea.vmem %s150, 64
          %s173 = scalar_lea.vmem %s151, 64
          %v174 = vld [vmem:[%s150 + $0x40] sm:$0xff]
        $region59: #{custom-call.121} parent=52 // loop_footer_branch
          %175 = sbr.rel target = $region55
        $region60: #{custom-call.121} parent=52 // loop_exit
          _
        // While loop
        $region61: #{custom-call.121} parent=52 // loop_pre_header
          _
        $region62: #{custom-call.121} parent=52 // loop_header
          %s176 = sphi %s150, %s184
          %s177 = sphi %s151, %s185
          %v178 = vphi %v152, %v178
          %p179 = scmp.gt.s32.totalorder %s176, %s148
        $region63: #{custom-call.121} parent=52 // loop_header_branch
          %181 = sbr.rel (%p179) target = $region67
        $region64: #{custom-call.121} parent=52 // loop_body
          %v182 = vld [vmem:[%s176] sm:$0xff]
          %183 = vst [vmem:[%s177] sm:$0xff] %v182
        $region65: #{custom-call.121} parent=52 // loop_footer
          %s184 = scalar_lea.vmem %s176, 8
          %s185 = scalar_lea.vmem %s177, 8
        $region66: #{custom-call.121} parent=52 // loop_footer_branch
          %186 = sbr.rel target = $region62
        $region67: #{custom-call.121} parent=52 // loop_exit
          _
      $region53: #{custom-call.121} parent=48 // pred_fallthru
        _
      %s187 = sand.u32 2, 7
      %s188 = sshllo.u32 0, %s187
      %s189 = smul.u32 %s140, 128
      %s190 = sshra.s32 %s189, 4
      %s191 = scalar_lea.vmem [#allocation5], %s190
      %s192 = smul.u32 %s140, 128
      %s193 = sshra.s32 %s192, 4
      %s194 = scalar_lea.vmem %s2, %s193
      %v195 = vld [vmem:[%s194] sm:%s188]
      %196 = vst [vmem:[%s191] sm:%s188] %v195
    $region49: #{custom-call.121} parent=1 // pred_fallthru
      _
    %p198 = scmp.gt.s32.totalorder 2, 0
    // Predicated region
    $region68: #{custom-call.121} parent=1 // pred_check
      %p199 = pneg %p198
    $region69: #{custom-call.121} parent=1 // pred_check_branch
      %201 = sbr.rel (%p199) target = $region71
    $region70: #{custom-call.121} parent=1 // pred_region
      %s202 = sshra.s32 2, 3
      %p203 = scmp.gt.s32.totalorder %s202, 0
      // Predicated region
      $region72: #{custom-call.121} parent=70 // pred_check
        %p204 = pneg %p203
      $region73: #{custom-call.121} parent=70 // pred_check_branch
        %206 = sbr.rel (%p204) target = $region75
      $region74: #{custom-call.121} parent=70 // pred_region
        %s207 = ssub.s32 %s202, 1
        %s208 = smul.u32 %s207, 128
        %s209 = sshra.s32 %s208, 4
        %s210 = scalar_lea.vmem %s3, %s209
        %v211 = vld [vmem:[%s3] sm:$0xff]
        // While loop
        $region76: #{custom-call.121} parent=74 // loop_pre_header
          _
        $region77: #{custom-call.121} parent=74 // loop_header
          %s212 = sphi %s3, %s234
          %s213 = sphi [#allocation7], %s235
          %v214 = vphi %v211, %v236
          %s215 = ssub.s32 %s210, 64
          %p216 = scmp.gt.s32.totalorder %s212, %s215
        $region78: #{custom-call.121} parent=74 // loop_header_branch
          %218 = sbr.rel (%p216) target = $region82
        $region79: #{custom-call.121} parent=74 // loop_body
          %219 = vst [vmem:[%s213] sm:$0xff] %v214
          %v220 = vld [vmem:[%s212 + $0x8] sm:$0xff]
          %221 = vst [vmem:[%s213 + $0x8] sm:$0xff] %v220
          %v222 = vld [vmem:[%s212 + $0x10] sm:$0xff]
          %223 = vst [vmem:[%s213 + $0x10] sm:$0xff] %v222
          %v224 = vld [vmem:[%s212 + $0x18] sm:$0xff]
          %225 = vst [vmem:[%s213 + $0x18] sm:$0xff] %v224
          %v226 = vld [vmem:[%s212 + $0x20] sm:$0xff]
          %227 = vst [vmem:[%s213 + $0x20] sm:$0xff] %v226
          %v228 = vld [vmem:[%s212 + $0x28] sm:$0xff]
          %229 = vst [vmem:[%s213 + $0x28] sm:$0xff] %v228
          %v230 = vld [vmem:[%s212 + $0x30] sm:$0xff]
          %231 = vst [vmem:[%s213 + $0x30] sm:$0xff] %v230
          %v232 = vld [vmem:[%s212 + $0x38] sm:$0xff]
          %233 = vst [vmem:[%s213 + $0x38] sm:$0xff] %v232
        $region80: #{custom-call.121} parent=74 // loop_footer
          %s234 = scalar_lea.vmem %s212, 64
          %s235 = scalar_lea.vmem %s213, 64
          %v236 = vld [vmem:[%s212 + $0x40] sm:$0xff]
        $region81: #{custom-call.121} parent=74 // loop_footer_branch
          %237 = sbr.rel target = $region77
        $region82: #{custom-call.121} parent=74 // loop_exit
          _
        // While loop
        $region83: #{custom-call.121} parent=74 // loop_pre_header
          _
        $region84: #{custom-call.121} parent=74 // loop_header
          %s238 = sphi %s212, %s246
          %s239 = sphi %s213, %s247
          %v240 = vphi %v214, %v240
          %p241 = scmp.gt.s32.totalorder %s238, %s210
        $region85: #{custom-call.121} parent=74 // loop_header_branch
          %243 = sbr.rel (%p241) target = $region89
        $region86: #{custom-call.121} parent=74 // loop_body
          %v244 = vld [vmem:[%s238] sm:$0xff]
          %245 = vst [vmem:[%s239] sm:$0xff] %v244
        $region87: #{custom-call.121} parent=74 // loop_footer
          %s246 = scalar_lea.vmem %s238, 8
          %s247 = scalar_lea.vmem %s239, 8
        $region88: #{custom-call.121} parent=74 // loop_footer_branch
          %248 = sbr.rel target = $region84
        $region89: #{custom-call.121} parent=74 // loop_exit
          _
      $region75: #{custom-call.121} parent=70 // pred_fallthru
        _
      %s249 = sand.u32 2, 7
      %s250 = sshllo.u32 0, %s249
      %s251 = smul.u32 %s202, 128
      %s252 = sshra.s32 %s251, 4
      %s253 = scalar_lea.vmem [#allocation7], %s252
      %s254 = smul.u32 %s202, 128
      %s255 = sshra.s32 %s254, 4
      %s256 = scalar_lea.vmem %s3, %s255
      %v257 = vld [vmem:[%s256] sm:%s250]
      %258 = vst [vmem:[%s253] sm:%s250] %v257
    $region71: #{custom-call.121} parent=1 // pred_fallthru
      _
    %s260 = sshllo.u32 0, 2
    %v261 = vld [vmem:[#allocation1] sm:%s260]
    %262 = vst [vmem:[#allocation0] sm:%s260] %v261
    %s264 = sshllo.u32 0, 2
    %v265 = vld [vmem:[#allocation3] sm:%s264]
    %266 = vst [vmem:[#allocation2] sm:%s264] %v265
    %s268 = sshllo.u32 0, 2
    %v269 = vld [vmem:[#allocation5] sm:%s268]
    %270 = vst [vmem:[#allocation4] sm:%s268] %v269
    %s272 = sshllo.u32 0, 2
    %v273 = vld [vmem:[#allocation7] sm:%s272]
    %274 = vst [vmem:[#allocation6] sm:%s272] %v273
    %s275 = smov [#allocation20]
    %v276 = vld [vmem:[#allocation0] sm:$0xff]
    %277 = vst [vmem:[%s275] sm:$0xff] %v276
    %s278 = smov [#allocation21]
    %v279 = vld [vmem:[#allocation2] sm:$0xff]
    %280 = vst [vmem:[%s278] sm:$0xff] %v279
    %s281 = smov [#allocation22]
    %v282 = vld [vmem:[#allocation4] sm:$0xff]
    %283 = vst [vmem:[%s281] sm:$0xff] %v282
    %s284 = smov [#allocation23]
    %v285 = vld [vmem:[#allocation6] sm:$0xff]
    %286 = vst [vmem:[%s284] sm:$0xff] %v285
    %287 = vst [vmem:[#allocation12] sm:$0xff] 0.0
    %288 = vst [vmem:[#allocation14] sm:$0xff] 0.0
    %289 = vst [vmem:[#allocation16] sm:$0xff] 0.0
    %290 = vst [vmem:[#allocation18] sm:$0xff] 0.0
    %s291 = smov [#allocation12]
    %v292 = vlaneseq
    %v293 = vand.u32 %v292, 127
    %v294 = vmov %v293
    %v295 = vlaneseq
    %v296 = vshrl.u32 %v295, 7
    %v297 = vmov %v296
    %v298 = vld [vmem:[%s291] sm:$0x3]
    %vm301 = vcmp.eq.s32.totalorder %v297, %v294
    %v302 = vsel %vm301, 1.0, %v298
    %303 = vst [vmem:[%s291] sm:$0x3] %v302
    %s304 = smov [#allocation18]
    %v305 = vlaneseq
    %v306 = vand.u32 %v305, 127
    %v307 = vmov %v306
    %v308 = vlaneseq
    %v309 = vshrl.u32 %v308, 7
    %v310 = vmov %v309
    %v311 = vld [vmem:[%s304] sm:$0x3]
    %vm314 = vcmp.eq.s32.totalorder %v310, %v307
    %v315 = vsel %vm314, 1.0, %v311
    %316 = vst [vmem:[%s304] sm:$0x3] %v315
    // While loop
    $region90: #{custom-call.121} parent=1 // loop_pre_header
      _
    $region91: #{custom-call.121} parent=1 // loop_header
      %s318 = sphi 0, %s860
      %v319 = vlaneseq
      %v320 = vand.u32 %v319, 127
      %v321 = vmov %v320
      %v322 = vlaneseq
      %v323 = vshrl.u32 %v322, 7
      %v324 = vmov %v323
      %s325 = smov [#allocation20]
      %v326 = vlaneseq
      %v327 = vand.u32 %v326, 127
      %vm328 = vcmp.ge.s32.totalorder %v327, 0
      %vm329 = vcmp.lt.s32.totalorder %v327, 2
      %vm330 = vmand %vm328, %vm329
      %v331 = vld [vmem:[%s325] sm:$0x3]
      %v332 = vsel %vm330, %v331, 0.0
      %v333 = vmul.f32 %v332, %v332
      %vm336 = vcmp.eq.s32.totalorder %v324, %v321
      %v337 = vsel %vm336, 0.0, %v333
      %v338 = vlaneseq
      %v339 = vand.u32 %v338, 127
      %v340 = vmov %v339
      %v341 = vlaneseq
      %v342 = vshrl.u32 %v341, 7
      %v343 = vmov %v342
      %s344 = smov [#allocation21]
      %v345 = vlaneseq
      %v346 = vand.u32 %v345, 127
      %vm347 = vcmp.ge.s32.totalorder %v346, 0
      %vm348 = vcmp.lt.s32.totalorder %v346, 2
      %vm349 = vmand %vm347, %vm348
      %v350 = vld [vmem:[%s344] sm:$0x3]
      %v351 = vsel %vm349, %v350, 0.0
      %v352 = vmul.f32 %v351, %v351
      %v353 = vadd.f32 %v337, %v352
      %v354 = vadd.f32 %v333, %v352
      %v355 = vlaneseq
      %v356 = vand.u32 %v355, 127
      %v357 = vmov %v356
      %v358 = vlaneseq
      %v359 = vshrl.u32 %v358, 7
      %v360 = vmov %v359
      %s361 = smov [#allocation22]
      %v362 = vlaneseq
      %v363 = vand.u32 %v362, 127
      %vm364 = vcmp.ge.s32.totalorder %v363, 0
      %vm365 = vcmp.lt.s32.totalorder %v363, 2
      %vm366 = vmand %vm364, %vm365
      %v367 = vld [vmem:[%s361] sm:$0x3]
      %v368 = vsel %vm366, %v367, 0.0
      %v369 = vmul.f32 %v368, %v368
      %v370 = vadd.f32 %v353, %v369
      %v371 = vadd.f32 %v354, %v369
      %v372 = vlaneseq
      %v373 = vand.u32 %v372, 127
      %v374 = vmov %v373
      %v375 = vlaneseq
      %v376 = vshrl.u32 %v375, 7
      %v377 = vmov %v376
      %s378 = smov [#allocation23]
      %v379 = vlaneseq
      %v380 = vand.u32 %v379, 127
      %vm381 = vcmp.ge.s32.totalorder %v380, 0
      %vm382 = vcmp.lt.s32.totalorder %v380, 2
      %vm383 = vmand %vm381, %vm382
      %v384 = vld [vmem:[%s378] sm:$0x3]
      %v385 = vsel %vm383, %v384, 0.0
      %v386 = vmul.f32 %v385, %v385
      %vm389 = vcmp.eq.s32.totalorder %v377, %v374
      %v390 = vsel %vm389, 0.0, %v386
      %v391 = vadd.f32 %v370, %v390
      %v392 = vadd.f32 %v371, %v386
      %393 = vadd.xlane.f32.xlu0 %v392
      %v394 = vpop.xlane.xlu0 %393
      %v395 = vrot.slane %v394, 4
      %v396 = vadd.f32 %v394, %v395
      %v397 = vrot.slane %v396, 2
      %v398 = vadd.f32 %v396, %v397
      %v399 = vrot.slane %v398, 1
      %v400 = vadd.f32 %v398, %v399
      %401 = vadd.xlane.f32.xlu0 %v391
      %v402 = vpop.xlane.xlu0 %401
      %v403 = vrot.slane %v402, 4
      %v404 = vadd.f32 %v402, %v403
      %v405 = vrot.slane %v404, 2
      %v406 = vadd.f32 %v404, %v405
      %v407 = vrot.slane %v406, 1
      %v408 = vadd.f32 %v406, %v407
      %s409 = vtos %v408
      %s410 = vtos %v400
      %s411 = smul.f32 1e-10, %s410
      %p412 = scmp.le.f32.partialorder %s409, %s411
      %p413 = scmp.ge.s32.totalorder %s318, 15
      %p414 = por %p412, %p413
    $region92: #{custom-call.121} parent=1 // loop_header_branch
      %862 = sbr.rel (%p414) target = $region96
    $region93: #{custom-call.121} parent=1 // loop_body
      loop: start=0, step=1, limit=3
      $region97: #{custom-call.121} parent=93 // loop_pre_header
        _
      $region98: #{custom-call.121} parent=93 // loop_header
        %s416 = sphi 0, %s420
        %p417 = scmp.ge.s32.totalorder %s416, 3
      $region99: #{custom-call.121} parent=93 // loop_header_branch
        %419 = sbr.rel (%p417) target = $region103
      $region100: #{custom-call.121} parent=93 // loop_body
        #allocation24 [shape = 'f32[1024]{0}', space=vmem, size = 0x1000, scoped, tag = 'a_tl_diag vmem']
        #allocation25 [shape = 'f32[1024]{0}', space=vmem, size = 0x1000, scoped, tag = 'a_tr_diag vmem']
        #allocation26 [shape = 'f32[1024]{0}', space=vmem, size = 0x1000, scoped, tag = 'a_br_diag vmem']
        #allocation27 [shape = 'f32[1024]{0}', space=vmem, size = 0x1000, scoped, tag = 'rt1 vmem']
        #allocation28 [shape = 'f32[1024]{0}', space=vmem, size = 0x1000, scoped, tag = 'rt2 vmem']
        #allocation29 [shape = 'f32[1024]{0}', space=vmem, size = 0x1000, scoped, tag = 'c vmem']
        #allocation30 [shape = 'f32[1024]{0}', space=vmem, size = 0x1000, scoped, tag = 's vmem']
        #allocation31 [shape = 'f32[4096]{0}', space=vmem, size = 0x4000, scoped, tag = 'c broadcast']
        #allocation32 [shape = 'f32[4096]{0}', space=vmem, size = 0x4000, scoped, tag = 's broadcast']
        %s421 = smov [#allocation20]
        %s422 = smov [#allocation24]
        %v423 = vlaneseq
        %v424 = vand.u32 %v423, 127
        %v425 = vmov %v424
        %v426 = vlaneseq
        %v427 = vshrl.u32 %v426, 7
        %v428 = vmov %v427
        %v429 = vld [vmem:[%s421] sm:$0x3]
        %vm432 = vcmp.eq.s32.totalorder %v428, %v425
        %v433 = vsel %vm432, %v429, 0.0
        %v434 = vrot.slane %v433, 4
        %v435 = vadd.f32 %v433, %v434
        %v436 = vrot.slane %v435, 2
        %v437 = vadd.f32 %v435, %v436
        %v438 = vrot.slane %v437, 1
        %v439 = vadd.f32 %v437, %v438
        %440 = vst [vmem:[%s422] sm:$0x1] %v439
        %s441 = smov [#allocation21]
        %s442 = smov [#allocation25]
        %v443 = vlaneseq
        %v444 = vand.u32 %v443, 127
        %v445 = vmov %v444
        %v446 = vlaneseq
        %v447 = vshrl.u32 %v446, 7
        %v448 = vmov %v447
        %v449 = vld [vmem:[%s441] sm:$0x3]
        %vm452 = vcmp.eq.s32.totalorder %v448, %v445
        %v453 = vsel %vm452, %v449, 0.0
        %v454 = vrot.slane %v453, 4
        %v455 = vadd.f32 %v453, %v454
        %v456 = vrot.slane %v455, 2
        %v457 = vadd.f32 %v455, %v456
        %v458 = vrot.slane %v457, 1
        %v459 = vadd.f32 %v457, %v458
        %460 = vst [vmem:[%s442] sm:$0x1] %v459
        %s461 = smov [#allocation23]
        %s462 = smov [#allocation26]
        %v463 = vlaneseq
        %v464 = vand.u32 %v463, 127
        %v465 = vmov %v464
        %v466 = vlaneseq
        %v467 = vshrl.u32 %v466, 7
        %v468 = vmov %v467
        %v469 = vld [vmem:[%s461] sm:$0x3]
        %vm472 = vcmp.eq.s32.totalorder %v468, %v465
        %v473 = vsel %vm472, %v469, 0.0
        %v474 = vrot.slane %v473, 4
        %v475 = vadd.f32 %v473, %v474
        %v476 = vrot.slane %v475, 2
        %v477 = vadd.f32 %v475, %v476
        %v478 = vrot.slane %v477, 1
        %v479 = vadd.f32 %v477, %v478
        %480 = vst [vmem:[%s462] sm:$0x1] %v479
        %s481 = smov [#allocation29]
        %s482 = smov [#allocation30]
        %s483 = smov [#allocation24]
        %v484 = vld [vmem:[%s483] sm:$0xff]
        %s485 = smov [#allocation25]
        %v486 = vld [vmem:[%s485] sm:$0xff]
        %s487 = smov [#allocation26]
        %v488 = vld [vmem:[%s487] sm:$0xff]
        %v489 = vsub.f32 %v488, %v484
        %v490 = vmul.f32 2.0, %v486
        %v491 = vrcp.pop %v490
        %v492 = vmul.f32 %v489, %v491
        %vm493 = vcmp.ge.f32.partialorder %v492, 0.0
        %v494 = vmul.f32 %v492, %v492
        %v495 = vadd.f32 1.0, %v494
        %v496 = vrsqrt.pop %v495
        %v497 = vmul.f32 %v495, %v496
        %vm498 = vcmp.eq.f32.partialorder %v495, inf
        %v499 = vsel %vm498, %v495, %v497
        %vm500 = vcmp.eq.f32.partialorder %v495, 0.0
        %v501 = vand.u32 %v495, 2147483648
        %v502 = vsel %vm500, %v501, %v499
        %v503 = vxor.u32 %v502, 2147483648
        %v504 = vsel %vm493, %v502, %v503
        %v505 = vadd.f32 %v492, %v504
        %v506 = vrcp.pop %v505
        %v507 = vand.u32 2147483647, %v484
        %v508 = vand.u32 2147483647, %v486
        %v509 = vand.u32 2147483647, %v488
        %v510 = vmin.f32 %v507, %v509
        %v511 = vmul.f32 1.1920929e-08, %v510
        %vm512 = vcmp.le.f32.partialorder %v508, %v511
        %v513 = vsel %vm512, 0.0, %v506
        %v514 = vmul.f32 %v513, %v513
        %v515 = vadd.f32 1.0, %v514
        %v516 = vrsqrt.pop %v515
        %v517 = vmul.f32 %v513, %v516
        %v518 = vmul.f32 %v513, %v486
        %v519 = vsub.f32 %v484, %v518
        %v520 = vmul.f32 %v513, %v486
        %v521 = vadd.f32 %v488, %v520
        %s522 = smov [#allocation27]
        %523 = vst [vmem:[%s522] sm:$0xff] %v519
        %s524 = smov [#allocation28]
        %525 = vst [vmem:[%s524] sm:$0xff] %v521
        %s526 = smov %s481
        %527 = vst [vmem:[%s526] sm:$0xff] %v516
        %s528 = smov %s482
        %529 = vst [vmem:[%s528] sm:$0xff] %v517
        %s530 = smov [#allocation29]
        %v531 = vld [vmem:[%s530] ss:$0 sm:$0xff]
        %v532 = vlaneseq
        %v533 = vand.u32 %v532, 127
        %v534 = vmov %v533
        %v535 = vlaneseq
        %v536 = vshrl.u32 %v535, 7
        %v537 = vmov %v536
        %vm539 = vcmp.eq.s32.totalorder %v537, %v534
        %v540 = vsel %vm539, %v531, 0.0
        %541 = vadd.xlane.f32.xlu0 %v540
        %v542 = vpop.xlane.xlu0 %541
        %s543 = smov [#allocation31]
        %544 = vst [vmem:[%s543] sm:$0xff] %v542
        %s545 = smov [#allocation30]
        %v546 = vld [vmem:[%s545] ss:$0 sm:$0xff]
        %v547 = vlaneseq
        %v548 = vand.u32 %v547, 127
        %v549 = vmov %v548
        %v550 = vlaneseq
        %v551 = vshrl.u32 %v550, 7
        %v552 = vmov %v551
        %vm554 = vcmp.eq.s32.totalorder %v552, %v549
        %v555 = vsel %vm554, %v546, 0.0
        %556 = vadd.xlane.f32.xlu0 %v555
        %v557 = vpop.xlane.xlu0 %556
        %s558 = smov [#allocation32]
        %559 = vst [vmem:[%s558] sm:$0xff] %v557
        %s560 = smov [#allocation31]
        %v561 = vld [vmem:[%s560] sm:$0xff]
        %s562 = smov [#allocation32]
        %v563 = vld [vmem:[%s562] sm:$0xff]
        %s564 = smov [#allocation20]
        %s565 = smov [#allocation21]
        %s566 = smov [#allocation22]
        %s567 = smov [#allocation23]
        %v568 = vld [vmem:[%s564] sm:$0x3]
        %v569 = vld [vmem:[%s565] sm:$0x3]
        %v570 = vld [vmem:[%s566] sm:$0x3]
        %v571 = vld [vmem:[%s567] sm:$0x3]
        %v572 = vmul.f32 %v561, %v568
        %v573 = vmul.f32 %v563, %v570
        %v574 = vsub.f32 %v572, %v573
        %v575 = vmul.f32 %v561, %v569
        %v576 = vmul.f32 %v563, %v571
        %v577 = vsub.f32 %v575, %v576
        %v578 = vmul.f32 %v563, %v568
        %v579 = vmul.f32 %v561, %v570
        %v580 = vadd.f32 %v578, %v579
        %v581 = vmul.f32 %v563, %v569
        %v582 = vmul.f32 %v561, %v571
        %v583 = vadd.f32 %v581, %v582
        %584 = vst [vmem:[%s564] sm:$0x3] %v574
        %585 = vst [vmem:[%s565] sm:$0x3] %v577
        %586 = vst [vmem:[%s566] sm:$0x3] %v580
        %587 = vst [vmem:[%s567] sm:$0x3] %v583
        %s588 = smov [#allocation29]
        %v589 = vld [vmem:[%s588] ss:$0 sm:$0xff]
        %s590 = smov [#allocation30]
        %v591 = vld [vmem:[%s590] ss:$0 sm:$0xff]
        %s592 = smov [#allocation20]
        %s593 = smov [#allocation21]
        %s594 = smov [#allocation22]
        %s595 = smov [#allocation23]
        %v596 = vld [vmem:[%s592] sm:$0x3]
        %v597 = vld [vmem:[%s593] sm:$0x3]
        %v598 = vld [vmem:[%s594] sm:$0x3]
        %v599 = vld [vmem:[%s595] sm:$0x3]
        %v600 = vmul.f32 %v589, %v596
        %v601 = vmul.f32 %v591, %v597
        %v602 = vsub.f32 %v600, %v601
        %v603 = vmul.f32 %v591, %v596
        %v604 = vmul.f32 %v589, %v597
        %v605 = vadd.f32 %v603, %v604
        %v606 = vmul.f32 %v589, %v598
        %v607 = vmul.f32 %v591, %v599
        %v608 = vsub.f32 %v606, %v607
        %v609 = vmul.f32 %v591, %v598
        %v610 = vmul.f32 %v589, %v599
        %v611 = vadd.f32 %v609, %v610
        %612 = vst [vmem:[%s592] sm:$0x3] %v602
        %613 = vst [vmem:[%s593] sm:$0x3] %v605
        %614 = vst [vmem:[%s594] sm:$0x3] %v608
        %615 = vst [vmem:[%s595] sm:$0x3] %v611
        %s616 = smov [#allocation20]
        %s617 = smov [#allocation27]
        %v618 = vlaneseq
        %v619 = vand.u32 %v618, 127
        %v620 = vmov %v619
        %v621 = vlaneseq
        %v622 = vshrl.u32 %v621, 7
        %v623 = vmov %v622
        %v624 = vld [vmem:[%s617] ss:$0 sm:$0xff]
        %v625 = vld [vmem:[%s616] sm:$0x3]
        %vm628 = vcmp.eq.s32.totalorder %v623, %v620
        %v629 = vsel %vm628, %v624, %v625
        %630 = vst [vmem:[%s616] sm:$0x3] %v629
        %s631 = smov [#allocation21]
        %v632 = vlaneseq
        %v633 = vand.u32 %v632, 127
        %v634 = vmov %v633
        %v635 = vlaneseq
        %v636 = vshrl.u32 %v635, 7
        %v637 = vmov %v636
        %v638 = vld [vmem:[%s631] sm:$0x3]
        %vm641 = vcmp.eq.s32.totalorder %v637, %v634
        %v642 = vsel %vm641, 0.0, %v638
        %643 = vst [vmem:[%s631] sm:$0x3] %v642
        %s644 = smov [#allocation22]
        %v645 = vlaneseq
        %v646 = vand.u32 %v645, 127
        %v647 = vmov %v646
        %v648 = vlaneseq
        %v649 = vshrl.u32 %v648, 7
        %v650 = vmov %v649
        %v651 = vld [vmem:[%s644] sm:$0x3]
        %vm654 = vcmp.eq.s32.totalorder %v650, %v647
        %v655 = vsel %vm654, 0.0, %v651
        %656 = vst [vmem:[%s644] sm:$0x3] %v655
        %s657 = smov [#allocation23]
        %s658 = smov [#allocation28]
        %v659 = vlaneseq
        %v660 = vand.u32 %v659, 127
        %v661 = vmov %v660
        %v662 = vlaneseq
        %v663 = vshrl.u32 %v662, 7
        %v664 = vmov %v663
        %v665 = vld [vmem:[%s658] ss:$0 sm:$0xff]
        %v666 = vld [vmem:[%s657] sm:$0x3]
        %vm669 = vcmp.eq.s32.totalorder %v664, %v661
        %v670 = vsel %vm669, %v665, %v666
        %671 = vst [vmem:[%s657] sm:$0x3] %v670
        %s672 = smov [#allocation20]
        %s673 = smov [#allocation21]
        %v674 = vld [vmem:[%s673] sm:$0x3]
        %675 = vrot.lane.b32.xlu0 %v674, 1
        %v676 = vpop.permute.xlu0 %675
        %v677 = vld [vmem:[%s672] sm:$0x3]
        %v678 = vld [vmem:[%s672] sm:$0x3]
        %679 = vrot.lane.b32.xlu0 %v678, 1
        %v680 = vpop.permute.xlu0 %679
        %v681 = vlaneseq
        %v682 = vand.u32 %v681, 127
        %vm683 = vcmp.eq.s32.totalorder %v682, 0
        %v684 = vsel %vm683, %v678, %v680
        %v685 = vlaneseq
        %v686 = vand.u32 %v685, 127
        %vm687 = vcmp.eq.s32.totalorder %v686, 1
        %v688 = vsel %vm687, %v676, %v684
        %v689 = vlaneseq
        %v690 = vand.u32 %v689, 127
        %vm691 = vcmp.ge.s32.totalorder %v690, 0
        %vm692 = vcmp.lt.s32.totalorder %v690, 2
        %vm693 = vmand %vm691, %vm692
        %v694 = vsel %vm693, %v688, 0.0
        %v695 = vld [vmem:[%s673] sm:$0x3]
        %696 = vrot.lane.b32.xlu0 %v695, 127
        %v697 = vpop.permute.xlu0 %696
        %v698 = vlaneseq
        %v699 = vand.u32 %v698, 127
        %vm700 = vcmp.eq.s32.totalorder %v699, 1
        %v701 = vsel %vm700, %v677, %v697
        %702 = vst [vmem:[%s672] sm:$0x3] %v694
        %703 = vst [vmem:[%s673] sm:$0x3] %v701
        %s704 = smov [#allocation22]
        %s705 = smov [#allocation23]
        %v706 = vld [vmem:[%s705] sm:$0x3]
        %707 = vrot.lane.b32.xlu0 %v706, 1
        %v708 = vpop.permute.xlu0 %707
        %v709 = vld [vmem:[%s704] sm:$0x3]
        %v710 = vld [vmem:[%s704] sm:$0x3]
        %711 = vrot.lane.b32.xlu0 %v710, 1
        %v712 = vpop.permute.xlu0 %711
        %v713 = vlaneseq
        %v714 = vand.u32 %v713, 127
        %vm715 = vcmp.eq.s32.totalorder %v714, 0
        %v716 = vsel %vm715, %v710, %v712
        %v717 = vlaneseq
        %v718 = vand.u32 %v717, 127
        %vm719 = vcmp.eq.s32.totalorder %v718, 1
        %v720 = vsel %vm719, %v708, %v716
        %v721 = vlaneseq
        %v722 = vand.u32 %v721, 127
        %vm723 = vcmp.ge.s32.totalorder %v722, 0
        %vm724 = vcmp.lt.s32.totalorder %v722, 2
        %vm725 = vmand %vm723, %vm724
        %v726 = vsel %vm725, %v720, 0.0
        %v727 = vld [vmem:[%s705] sm:$0x3]
        %728 = vrot.lane.b32.xlu0 %v727, 127
        %v729 = vpop.permute.xlu0 %728
        %v730 = vlaneseq
        %v731 = vand.u32 %v730, 127
        %vm732 = vcmp.eq.s32.totalorder %v731, 1
        %v733 = vsel %vm732, %v709, %v729
        %734 = vst [vmem:[%s704] sm:$0x3] %v726
        %735 = vst [vmem:[%s705] sm:$0x3] %v733
        %s736 = smov [#allocation20]
        %s737 = smov [#allocation22]
        %v738 = vld [vmem:[%s736] ss:$0 sm:$0xff]
        %s740 = scalar_lea.vmem %s736, 4294967295
        %v741 = vld [vmem:[%s740] sm:$0x2]
        %v742 = vlaneseq
        %v743 = vshrl.u32 %v742, 7
        %vm744 = vcmp.eq.s32.totalorder %v743, 0
        %v745 = vsel %vm744, %v738, %v741
        %s746 = scalar_lea.vmem %s736, 1
        %v747 = vld [vmem:[%s746] ss:$0 sm:$0xff]
        %748 = vst [vmem:[%s736] sm:$0x3] %v745
        %v749 = vld [vmem:[%s737] ss:$0 sm:$0xff]
        %s750 = scalar_lea.vmem %s736, 1
        %751 = vst [vmem:[%s750] sm:$0x1] %v749
        %s752 = scalar_lea.vmem %s737, 1
        %v753 = vld [vmem:[%s752] sm:$0x1]
        %v754 = vlaneseq
        %v755 = vshrl.u32 %v754, 7
        %vm756 = vcmp.eq.s32.totalorder %v755, 1
        %v757 = vsel %vm756, %v747, %v753
        %v758 = vld [vmem:[%s737] ss:$0 sm:$0xff]
        %759 = vst [vmem:[%s737] sm:$0x3] %v757
        %s760 = smov [#allocation21]
        %s761 = smov [#allocation23]
        %v762 = vld [vmem:[%s760] ss:$0 sm:$0xff]
        %s764 = scalar_lea.vmem %s760, 4294967295
        %v765 = vld [vmem:[%s764] sm:$0x2]
        %v766 = vlaneseq
        %v767 = vshrl.u32 %v766, 7
        %vm768 = vcmp.eq.s32.totalorder %v767, 0
        %v769 = vsel %vm768, %v762, %v765
        %s770 = scalar_lea.vmem %s760, 1
        %v771 = vld [vmem:[%s770] ss:$0 sm:$0xff]
        %772 = vst [vmem:[%s760] sm:$0x3] %v769
        %v773 = vld [vmem:[%s761] ss:$0 sm:$0xff]
        %s774 = scalar_lea.vmem %s760, 1
        %775 = vst [vmem:[%s774] sm:$0x1] %v773
        %s776 = scalar_lea.vmem %s761, 1
        %v777 = vld [vmem:[%s776] sm:$0x1]
        %v778 = vlaneseq
        %v779 = vshrl.u32 %v778, 7
        %vm780 = vcmp.eq.s32.totalorder %v779, 1
        %v781 = vsel %vm780, %v771, %v777
        %v782 = vld [vmem:[%s761] ss:$0 sm:$0xff]
        %783 = vst [vmem:[%s761] sm:$0x3] %v781
        %s784 = smov [#allocation31]
        %v785 = vld [vmem:[%s784] sm:$0xff]
        %s786 = smov [#allocation32]
        %v787 = vld [vmem:[%s786] sm:$0xff]
        %s788 = smov [#allocation12]
        %s789 = smov [#allocation14]
        %s790 = smov [#allocation16]
        %s791 = smov [#allocation18]
        %v792 = vld [vmem:[%s788] sm:$0x3]
        %v793 = vld [vmem:[%s789] sm:$0x3]
        %v794 = vld [vmem:[%s790] sm:$0x3]
        %v795 = vld [vmem:[%s791] sm:$0x3]
        %v796 = vmul.f32 %v785, %v792
        %v797 = vmul.f32 %v787, %v794
        %v798 = vsub.f32 %v796, %v797
        %v799 = vmul.f32 %v785, %v793
        %v800 = vmul.f32 %v787, %v795
        %v801 = vsub.f32 %v799, %v800
        %v802 = vmul.f32 %v787, %v792
        %v803 = vmul.f32 %v785, %v794
        %v804 = vadd.f32 %v802, %v803
        %v805 = vmul.f32 %v787, %v793
        %v806 = vmul.f32 %v785, %v795
        %v807 = vadd.f32 %v805, %v806
        %808 = vst [vmem:[%s788] sm:$0x3] %v798
        %809 = vst [vmem:[%s789] sm:$0x3] %v801
        %810 = vst [vmem:[%s790] sm:$0x3] %v804
        %811 = vst [vmem:[%s791] sm:$0x3] %v807
        %s812 = smov [#allocation12]
        %s813 = smov [#allocation16]
        %v814 = vld [vmem:[%s812] ss:$0 sm:$0xff]
        %s816 = scalar_lea.vmem %s812, 4294967295
        %v817 = vld [vmem:[%s816] sm:$0x2]
        %v818 = vlaneseq
        %v819 = vshrl.u32 %v818, 7
        %vm820 = vcmp.eq.s32.totalorder %v819, 0
        %v821 = vsel %vm820, %v814, %v817
        %s822 = scalar_lea.vmem %s812, 1
        %v823 = vld [vmem:[%s822] ss:$0 sm:$0xff]
        %824 = vst [vmem:[%s812] sm:$0x3] %v821
        %v825 = vld [vmem:[%s813] ss:$0 sm:$0xff]
        %s826 = scalar_lea.vmem %s812, 1
        %827 = vst [vmem:[%s826] sm:$0x1] %v825
        %s828 = scalar_lea.vmem %s813, 1
        %v829 = vld [vmem:[%s828] sm:$0x1]
        %v830 = vlaneseq
        %v831 = vshrl.u32 %v830, 7
        %vm832 = vcmp.eq.s32.totalorder %v831, 1
        %v833 = vsel %vm832, %v823, %v829
        %v834 = vld [vmem:[%s813] ss:$0 sm:$0xff]
        %835 = vst [vmem:[%s813] sm:$0x3] %v833
        %s836 = smov [#allocation14]
        %s837 = smov [#allocation18]
        %v838 = vld [vmem:[%s836] ss:$0 sm:$0xff]
        %s840 = scalar_lea.vmem %s836, 4294967295
        %v841 = vld [vmem:[%s840] sm:$0x2]
        %v842 = vlaneseq
        %v843 = vshrl.u32 %v842, 7
        %vm844 = vcmp.eq.s32.totalorder %v843, 0
        %v845 = vsel %vm844, %v838, %v841
        %s846 = scalar_lea.vmem %s836, 1
        %v847 = vld [vmem:[%s846] ss:$0 sm:$0xff]
        %848 = vst [vmem:[%s836] sm:$0x3] %v845
        %v849 = vld [vmem:[%s837] ss:$0 sm:$0xff]
        %s850 = scalar_lea.vmem %s836, 1
        %851 = vst [vmem:[%s850] sm:$0x1] %v849
        %s852 = scalar_lea.vmem %s837, 1
        %v853 = vld [vmem:[%s852] sm:$0x1]
        %v854 = vlaneseq
        %v855 = vshrl.u32 %v854, 7
        %vm856 = vcmp.eq.s32.totalorder %v855, 1
        %v857 = vsel %vm856, %v847, %v853
        %v858 = vld [vmem:[%s837] ss:$0 sm:$0xff]
        %859 = vst [vmem:[%s837] sm:$0x3] %v857
      $region101: #{custom-call.121} parent=93 // loop_footer
        %s420 = sadd.s32 1, %s416
      $region102: #{custom-call.121} parent=93 // loop_footer_branch
        %415 = sbr.rel target = $region98
      $region103: #{custom-call.121} parent=93 // loop_exit
        _
      %s860 = sadd.s32 %s318, 1
    $region94: #{custom-call.121} parent=1 // loop_footer
      _
    $region95: #{custom-call.121} parent=1 // loop_footer_branch
      %317 = sbr.rel target = $region91
    $region96: #{custom-call.121} parent=1 // loop_exit
      _
    %s863 = smov [#allocation20]
    %s864 = smov [#allocation8]
    %v865 = vlaneseq
    %v866 = vand.u32 %v865, 127
    %v867 = vmov %v866
    %v868 = vlaneseq
    %v869 = vshrl.u32 %v868, 7
    %v870 = vmov %v869
    %v871 = vld [vmem:[%s863] sm:$0x3]
    %vm874 = vcmp.eq.s32.totalorder %v870, %v867
    %v875 = vsel %vm874, %v871, 0.0
    %v876 = vrot.slane %v875, 4
    %v877 = vadd.f32 %v875, %v876
    %v878 = vrot.slane %v877, 2
    %v879 = vadd.f32 %v877, %v878
    %v880 = vrot.slane %v879, 1
    %v881 = vadd.f32 %v879, %v880
    %882 = vst [vmem:[%s864] sm:$0x1] %v881
    %s883 = smov [#allocation23]
    %s884 = smov [#allocation10]
    %v885 = vlaneseq
    %v886 = vand.u32 %v885, 127
    %v887 = vmov %v886
    %v888 = vlaneseq
    %v889 = vshrl.u32 %v888, 7
    %v890 = vmov %v889
    %v891 = vld [vmem:[%s883] sm:$0x3]
    %vm894 = vcmp.eq.s32.totalorder %v890, %v887
    %v895 = vsel %vm894, %v891, 0.0
    %v896 = vrot.slane %v895, 4
    %v897 = vadd.f32 %v895, %v896
    %v898 = vrot.slane %v897, 2
    %v899 = vadd.f32 %v897, %v898
    %v900 = vrot.slane %v899, 1
    %v901 = vadd.f32 %v899, %v900
    %902 = vst [vmem:[%s884] sm:$0x1] %v901
    %s904 = sshllo.u32 0, 1
    %v906 = vld [vmem:[#allocation8] sm:%s904]
    %s907 = sshllo.u32 0, 1
    %908 = vst [vmem:[#allocation9] sm:%s907] %v906
    %s910 = sshllo.u32 0, 1
    %v912 = vld [vmem:[#allocation10] sm:%s910]
    %s913 = sshllo.u32 0, 1
    %914 = vst [vmem:[#allocation11] sm:%s913] %v912
    %s916 = sshllo.u32 0, 2
    %v918 = vld [vmem:[#allocation12] sm:%s916]
    %s919 = sshllo.u32 0, 2
    %920 = vst [vmem:[#allocation13] sm:%s919] %v918
    %s922 = sshllo.u32 0, 2
    %v924 = vld [vmem:[#allocation14] sm:%s922]
    %s925 = sshllo.u32 0, 2
    %926 = vst [vmem:[#allocation15] sm:%s925] %v924
    %s928 = sshllo.u32 0, 2
    %v930 = vld [vmem:[#allocation16] sm:%s928]
    %s931 = sshllo.u32 0, 2
    %932 = vst [vmem:[#allocation17] sm:%s931] %v930
    %s934 = sshllo.u32 0, 2
    %v936 = vld [vmem:[#allocation18] sm:%s934]
    %s937 = sshllo.u32 0, 2
    %938 = vst [vmem:[#allocation19] sm:%s937] %v936
    // Predicated region
    $region104: #{custom-call.121} parent=1 // pred_check
      _
    $region105: #{custom-call.121} parent=1 // pred_check_branch
      %940 = sbr.rel (0) target = $region107
    $region106: #{custom-call.121} parent=1 // pred_region
      %p942 = scmp.gt.s32.totalorder 1, 0
      // Predicated region
      $region108: #{custom-call.121} parent=106 // pred_check
        %p943 = pneg %p942
      $region109: #{custom-call.121} parent=106 // pred_check_branch
        %945 = sbr.rel (%p943) target = $region111
      $region110: #{custom-call.121} parent=106 // pred_region
        %s946 = sshra.s32 1, 3
        %p947 = scmp.gt.s32.totalorder %s946, 0
        // Predicated region
        $region112: #{custom-call.121} parent=110 // pred_check
          %p948 = pneg %p947
        $region113: #{custom-call.121} parent=110 // pred_check_branch
          %950 = sbr.rel (%p948) target = $region115
        $region114: #{custom-call.121} parent=110 // pred_region
          %s951 = ssub.s32 %s946, 1
          %s952 = smul.u32 %s951, 128
          %s953 = sshra.s32 %s952, 4
          %s954 = scalar_lea.vmem [#allocation9], %s953
          %v955 = vld [vmem:[#allocation9] sm:$0xff]
          // While loop
          $region116: #{custom-call.121} parent=114 // loop_pre_header
            _
          $region117: #{custom-call.121} parent=114 // loop_header
            %s956 = sphi [#allocation9], %s978
            %s957 = sphi %s4, %s979
            %v958 = vphi %v955, %v980
            %s959 = ssub.s32 %s954, 64
            %p960 = scmp.gt.s32.totalorder %s956, %s959
          $region118: #{custom-call.121} parent=114 // loop_header_branch
            %962 = sbr.rel (%p960) target = $region122
          $region119: #{custom-call.121} parent=114 // loop_body
            %963 = vst [vmem:[%s957] sm:$0xff] %v958
            %v964 = vld [vmem:[%s956 + $0x8] sm:$0xff]
            %965 = vst [vmem:[%s957 + $0x8] sm:$0xff] %v964
            %v966 = vld [vmem:[%s956 + $0x10] sm:$0xff]
            %967 = vst [vmem:[%s957 + $0x10] sm:$0xff] %v966
            %v968 = vld [vmem:[%s956 + $0x18] sm:$0xff]
            %969 = vst [vmem:[%s957 + $0x18] sm:$0xff] %v968
            %v970 = vld [vmem:[%s956 + $0x20] sm:$0xff]
            %971 = vst [vmem:[%s957 + $0x20] sm:$0xff] %v970
            %v972 = vld [vmem:[%s956 + $0x28] sm:$0xff]
            %973 = vst [vmem:[%s957 + $0x28] sm:$0xff] %v972
            %v974 = vld [vmem:[%s956 + $0x30] sm:$0xff]
            %975 = vst [vmem:[%s957 + $0x30] sm:$0xff] %v974
            %v976 = vld [vmem:[%s956 + $0x38] sm:$0xff]
            %977 = vst [vmem:[%s957 + $0x38] sm:$0xff] %v976
          $region120: #{custom-call.121} parent=114 // loop_footer
            %s978 = scalar_lea.vmem %s956, 64
            %s979 = scalar_lea.vmem %s957, 64
            %v980 = vld [vmem:[%s956 + $0x40] sm:$0xff]
          $region121: #{custom-call.121} parent=114 // loop_footer_branch
            %981 = sbr.rel target = $region117
          $region122: #{custom-call.121} parent=114 // loop_exit
            _
          // While loop
          $region123: #{custom-call.121} parent=114 // loop_pre_header
            _
          $region124: #{custom-call.121} parent=114 // loop_header
            %s982 = sphi %s956, %s990
            %s983 = sphi %s957, %s991
            %v984 = vphi %v958, %v984
            %p985 = scmp.gt.s32.totalorder %s982, %s954
          $region125: #{custom-call.121} parent=114 // loop_header_branch
            %987 = sbr.rel (%p985) target = $region129
          $region126: #{custom-call.121} parent=114 // loop_body
            %v988 = vld [vmem:[%s982] sm:$0xff]
            %989 = vst [vmem:[%s983] sm:$0xff] %v988
          $region127: #{custom-call.121} parent=114 // loop_footer
            %s990 = scalar_lea.vmem %s982, 8
            %s991 = scalar_lea.vmem %s983, 8
          $region128: #{custom-call.121} parent=114 // loop_footer_branch
            %992 = sbr.rel target = $region124
          $region129: #{custom-call.121} parent=114 // loop_exit
            _
        $region115: #{custom-call.121} parent=110 // pred_fallthru
          _
        %s993 = sand.u32 1, 7
        %s994 = sshllo.u32 0, %s993
        %s995 = smul.u32 %s946, 128
        %s996 = sshra.s32 %s995, 4
        %s997 = scalar_lea.vmem %s4, %s996
        %s998 = smul.u32 %s946, 128
        %s999 = sshra.s32 %s998, 4
        %s1000 = scalar_lea.vmem [#allocation9], %s999
        %v1001 = vld [vmem:[%s1000] sm:%s994]
        %1002 = vst [vmem:[%s997] sm:%s994] %v1001
      $region111: #{custom-call.121} parent=106 // pred_fallthru
        _
    $region107: #{custom-call.121} parent=1 // pred_fallthru
      _
    // Predicated region
    $region130: #{custom-call.121} parent=1 // pred_check
      _
    $region131: #{custom-call.121} parent=1 // pred_check_branch
      %1004 = sbr.rel (0) target = $region133
    $region132: #{custom-call.121} parent=1 // pred_region
      %p1006 = scmp.gt.s32.totalorder 1, 0
      // Predicated region
      $region134: #{custom-call.121} parent=132 // pred_check
        %p1007 = pneg %p1006
      $region135: #{custom-call.121} parent=132 // pred_check_branch
        %1009 = sbr.rel (%p1007) target = $region137
      $region136: #{custom-call.121} parent=132 // pred_region
        %s1010 = sshra.s32 1, 3
        %p1011 = scmp.gt.s32.totalorder %s1010, 0
        // Predicated region
        $region138: #{custom-call.121} parent=136 // pred_check
          %p1012 = pneg %p1011
        $region139: #{custom-call.121} parent=136 // pred_check_branch
          %1014 = sbr.rel (%p1012) target = $region141
        $region140: #{custom-call.121} parent=136 // pred_region
          %s1015 = ssub.s32 %s1010, 1
          %s1016 = smul.u32 %s1015, 128
          %s1017 = sshra.s32 %s1016, 4
          %s1018 = scalar_lea.vmem [#allocation11], %s1017
          %v1019 = vld [vmem:[#allocation11] sm:$0xff]
          // While loop
          $region142: #{custom-call.121} parent=140 // loop_pre_header
            _
          $region143: #{custom-call.121} parent=140 // loop_header
            %s1020 = sphi [#allocation11], %s1042
            %s1021 = sphi %s5, %s1043
            %v1022 = vphi %v1019, %v1044
            %s1023 = ssub.s32 %s1018, 64
            %p1024 = scmp.gt.s32.totalorder %s1020, %s1023
          $region144: #{custom-call.121} parent=140 // loop_header_branch
            %1026 = sbr.rel (%p1024) target = $region148
          $region145: #{custom-call.121} parent=140 // loop_body
            %1027 = vst [vmem:[%s1021] sm:$0xff] %v1022
            %v1028 = vld [vmem:[%s1020 + $0x8] sm:$0xff]
            %1029 = vst [vmem:[%s1021 + $0x8] sm:$0xff] %v1028
            %v1030 = vld [vmem:[%s1020 + $0x10] sm:$0xff]
            %1031 = vst [vmem:[%s1021 + $0x10] sm:$0xff] %v1030
            %v1032 = vld [vmem:[%s1020 + $0x18] sm:$0xff]
            %1033 = vst [vmem:[%s1021 + $0x18] sm:$0xff] %v1032
            %v1034 = vld [vmem:[%s1020 + $0x20] sm:$0xff]
            %1035 = vst [vmem:[%s1021 + $0x20] sm:$0xff] %v1034
            %v1036 = vld [vmem:[%s1020 + $0x28] sm:$0xff]
            %1037 = vst [vmem:[%s1021 + $0x28] sm:$0xff] %v1036
            %v1038 = vld [vmem:[%s1020 + $0x30] sm:$0xff]
            %1039 = vst [vmem:[%s1021 + $0x30] sm:$0xff] %v1038
            %v1040 = vld [vmem:[%s1020 + $0x38] sm:$0xff]
            %1041 = vst [vmem:[%s1021 + $0x38] sm:$0xff] %v1040
          $region146: #{custom-call.121} parent=140 // loop_footer
            %s1042 = scalar_lea.vmem %s1020, 64
            %s1043 = scalar_lea.vmem %s1021, 64
            %v1044 = vld [vmem:[%s1020 + $0x40] sm:$0xff]
          $region147: #{custom-call.121} parent=140 // loop_footer_branch
            %1045 = sbr.rel target = $region143
          $region148: #{custom-call.121} parent=140 // loop_exit
            _
          // While loop
          $region149: #{custom-call.121} parent=140 // loop_pre_header
            _
          $region150: #{custom-call.121} parent=140 // loop_header
            %s1046 = sphi %s1020, %s1054
            %s1047 = sphi %s1021, %s1055
            %v1048 = vphi %v1022, %v1048
            %p1049 = scmp.gt.s32.totalorder %s1046, %s1018
          $region151: #{custom-call.121} parent=140 // loop_header_branch
            %1051 = sbr.rel (%p1049) target = $region155
          $region152: #{custom-call.121} parent=140 // loop_body
            %v1052 = vld [vmem:[%s1046] sm:$0xff]
            %1053 = vst [vmem:[%s1047] sm:$0xff] %v1052
          $region153: #{custom-call.121} parent=140 // loop_footer
            %s1054 = scalar_lea.vmem %s1046, 8
            %s1055 = scalar_lea.vmem %s1047, 8
          $region154: #{custom-call.121} parent=140 // loop_footer_branch
            %1056 = sbr.rel target = $region150
          $region155: #{custom-call.121} parent=140 // loop_exit
            _
        $region141: #{custom-call.121} parent=136 // pred_fallthru
          _
        %s1057 = sand.u32 1, 7
        %s1058 = sshllo.u32 0, %s1057
        %s1059 = smul.u32 %s1010, 128
        %s1060 = sshra.s32 %s1059, 4
        %s1061 = scalar_lea.vmem %s5, %s1060
        %s1062 = smul.u32 %s1010, 128
        %s1063 = sshra.s32 %s1062, 4
        %s1064 = scalar_lea.vmem [#allocation11], %s1063
        %v1065 = vld [vmem:[%s1064] sm:%s1058]
        %1066 = vst [vmem:[%s1061] sm:%s1058] %v1065
      $region137: #{custom-call.121} parent=132 // pred_fallthru
        _
    $region133: #{custom-call.121} parent=1 // pred_fallthru
      _
    %p1068 = scmp.gt.s32.totalorder 2, 0
    // Predicated region
    $region156: #{custom-call.121} parent=1 // pred_check
      %p1069 = pneg %p1068
    $region157: #{custom-call.121} parent=1 // pred_check_branch
      %1071 = sbr.rel (%p1069) target = $region159
    $region158: #{custom-call.121} parent=1 // pred_region
      %s1072 = sshra.s32 2, 3
      %p1073 = scmp.gt.s32.totalorder %s1072, 0
      // Predicated region
      $region160: #{custom-call.121} parent=158 // pred_check
        %p1074 = pneg %p1073
      $region161: #{custom-call.121} parent=158 // pred_check_branch
        %1076 = sbr.rel (%p1074) target = $region163
      $region162: #{custom-call.121} parent=158 // pred_region
        %s1077 = ssub.s32 %s1072, 1
        %s1078 = smul.u32 %s1077, 128
        %s1079 = sshra.s32 %s1078, 4
        %s1080 = scalar_lea.vmem [#allocation13], %s1079
        %v1081 = vld [vmem:[#allocation13] sm:$0xff]
        // While loop
        $region164: #{custom-call.121} parent=162 // loop_pre_header
          _
        $region165: #{custom-call.121} parent=162 // loop_header
          %s1082 = sphi [#allocation13], %s1104
          %s1083 = sphi %s6, %s1105
          %v1084 = vphi %v1081, %v1106
          %s1085 = ssub.s32 %s1080, 64
          %p1086 = scmp.gt.s32.totalorder %s1082, %s1085
        $region166: #{custom-call.121} parent=162 // loop_header_branch
          %1088 = sbr.rel (%p1086) target = $region170
        $region167: #{custom-call.121} parent=162 // loop_body
          %1089 = vst [vmem:[%s1083] sm:$0xff] %v1084
          %v1090 = vld [vmem:[%s1082 + $0x8] sm:$0xff]
          %1091 = vst [vmem:[%s1083 + $0x8] sm:$0xff] %v1090
          %v1092 = vld [vmem:[%s1082 + $0x10] sm:$0xff]
          %1093 = vst [vmem:[%s1083 + $0x10] sm:$0xff] %v1092
          %v1094 = vld [vmem:[%s1082 + $0x18] sm:$0xff]
          %1095 = vst [vmem:[%s1083 + $0x18] sm:$0xff] %v1094
          %v1096 = vld [vmem:[%s1082 + $0x20] sm:$0xff]
          %1097 = vst [vmem:[%s1083 + $0x20] sm:$0xff] %v1096
          %v1098 = vld [vmem:[%s1082 + $0x28] sm:$0xff]
          %1099 = vst [vmem:[%s1083 + $0x28] sm:$0xff] %v1098
          %v1100 = vld [vmem:[%s1082 + $0x30] sm:$0xff]
          %1101 = vst [vmem:[%s1083 + $0x30] sm:$0xff] %v1100
          %v1102 = vld [vmem:[%s1082 + $0x38] sm:$0xff]
          %1103 = vst [vmem:[%s1083 + $0x38] sm:$0xff] %v1102
        $region168: #{custom-call.121} parent=162 // loop_footer
          %s1104 = scalar_lea.vmem %s1082, 64
          %s1105 = scalar_lea.vmem %s1083, 64
          %v1106 = vld [vmem:[%s1082 + $0x40] sm:$0xff]
        $region169: #{custom-call.121} parent=162 // loop_footer_branch
          %1107 = sbr.rel target = $region165
        $region170: #{custom-call.121} parent=162 // loop_exit
          _
        // While loop
        $region171: #{custom-call.121} parent=162 // loop_pre_header
          _
        $region172: #{custom-call.121} parent=162 // loop_header
          %s1108 = sphi %s1082, %s1116
          %s1109 = sphi %s1083, %s1117
          %v1110 = vphi %v1084, %v1110
          %p1111 = scmp.gt.s32.totalorder %s1108, %s1080
        $region173: #{custom-call.121} parent=162 // loop_header_branch
          %1113 = sbr.rel (%p1111) target = $region177
        $region174: #{custom-call.121} parent=162 // loop_body
          %v1114 = vld [vmem:[%s1108] sm:$0xff]
          %1115 = vst [vmem:[%s1109] sm:$0xff] %v1114
        $region175: #{custom-call.121} parent=162 // loop_footer
          %s1116 = scalar_lea.vmem %s1108, 8
          %s1117 = scalar_lea.vmem %s1109, 8
        $region176: #{custom-call.121} parent=162 // loop_footer_branch
          %1118 = sbr.rel target = $region172
        $region177: #{custom-call.121} parent=162 // loop_exit
          _
      $region163: #{custom-call.121} parent=158 // pred_fallthru
        _
      %s1119 = sand.u32 2, 7
      %s1120 = sshllo.u32 0, %s1119
      %s1121 = smul.u32 %s1072, 128
      %s1122 = sshra.s32 %s1121, 4
      %s1123 = scalar_lea.vmem %s6, %s1122
      %s1124 = smul.u32 %s1072, 128
      %s1125 = sshra.s32 %s1124, 4
      %s1126 = scalar_lea.vmem [#allocation13], %s1125
      %v1127 = vld [vmem:[%s1126] sm:%s1120]
      %1128 = vst [vmem:[%s1123] sm:%s1120] %v1127
    $region159: #{custom-call.121} parent=1 // pred_fallthru
      _
    %p1130 = scmp.gt.s32.totalorder 2, 0
    // Predicated region
    $region178: #{custom-call.121} parent=1 // pred_check
      %p1131 = pneg %p1130
    $region179: #{custom-call.121} parent=1 // pred_check_branch
      %1133 = sbr.rel (%p1131) target = $region181
    $region180: #{custom-call.121} parent=1 // pred_region
      %s1134 = sshra.s32 2, 3
      %p1135 = scmp.gt.s32.totalorder %s1134, 0
      // Predicated region
      $region182: #{custom-call.121} parent=180 // pred_check
        %p1136 = pneg %p1135
      $region183: #{custom-call.121} parent=180 // pred_check_branch
        %1138 = sbr.rel (%p1136) target = $region185
      $region184: #{custom-call.121} parent=180 // pred_region
        %s1139 = ssub.s32 %s1134, 1
        %s1140 = smul.u32 %s1139, 128
        %s1141 = sshra.s32 %s1140, 4
        %s1142 = scalar_lea.vmem [#allocation15], %s1141
        %v1143 = vld [vmem:[#allocation15] sm:$0xff]
        // While loop
        $region186: #{custom-call.121} parent=184 // loop_pre_header
          _
        $region187: #{custom-call.121} parent=184 // loop_header
          %s1144 = sphi [#allocation15], %s1166
          %s1145 = sphi %s7, %s1167
          %v1146 = vphi %v1143, %v1168
          %s1147 = ssub.s32 %s1142, 64
          %p1148 = scmp.gt.s32.totalorder %s1144, %s1147
        $region188: #{custom-call.121} parent=184 // loop_header_branch
          %1150 = sbr.rel (%p1148) target = $region192
        $region189: #{custom-call.121} parent=184 // loop_body
          %1151 = vst [vmem:[%s1145] sm:$0xff] %v1146
          %v1152 = vld [vmem:[%s1144 + $0x8] sm:$0xff]
          %1153 = vst [vmem:[%s1145 + $0x8] sm:$0xff] %v1152
          %v1154 = vld [vmem:[%s1144 + $0x10] sm:$0xff]
          %1155 = vst [vmem:[%s1145 + $0x10] sm:$0xff] %v1154
          %v1156 = vld [vmem:[%s1144 + $0x18] sm:$0xff]
          %1157 = vst [vmem:[%s1145 + $0x18] sm:$0xff] %v1156
          %v1158 = vld [vmem:[%s1144 + $0x20] sm:$0xff]
          %1159 = vst [vmem:[%s1145 + $0x20] sm:$0xff] %v1158
          %v1160 = vld [vmem:[%s1144 + $0x28] sm:$0xff]
          %1161 = vst [vmem:[%s1145 + $0x28] sm:$0xff] %v1160
          %v1162 = vld [vmem:[%s1144 + $0x30] sm:$0xff]
          %1163 = vst [vmem:[%s1145 + $0x30] sm:$0xff] %v1162
          %v1164 = vld [vmem:[%s1144 + $0x38] sm:$0xff]
          %1165 = vst [vmem:[%s1145 + $0x38] sm:$0xff] %v1164
        $region190: #{custom-call.121} parent=184 // loop_footer
          %s1166 = scalar_lea.vmem %s1144, 64
          %s1167 = scalar_lea.vmem %s1145, 64
          %v1168 = vld [vmem:[%s1144 + $0x40] sm:$0xff]
        $region191: #{custom-call.121} parent=184 // loop_footer_branch
          %1169 = sbr.rel target = $region187
        $region192: #{custom-call.121} parent=184 // loop_exit
          _
        // While loop
        $region193: #{custom-call.121} parent=184 // loop_pre_header
          _
        $region194: #{custom-call.121} parent=184 // loop_header
          %s1170 = sphi %s1144, %s1178
          %s1171 = sphi %s1145, %s1179
          %v1172 = vphi %v1146, %v1172
          %p1173 = scmp.gt.s32.totalorder %s1170, %s1142
        $region195: #{custom-call.121} parent=184 // loop_header_branch
          %1175 = sbr.rel (%p1173) target = $region199
        $region196: #{custom-call.121} parent=184 // loop_body
          %v1176 = vld [vmem:[%s1170] sm:$0xff]
          %1177 = vst [vmem:[%s1171] sm:$0xff] %v1176
        $region197: #{custom-call.121} parent=184 // loop_footer
          %s1178 = scalar_lea.vmem %s1170, 8
          %s1179 = scalar_lea.vmem %s1171, 8
        $region198: #{custom-call.121} parent=184 // loop_footer_branch
          %1180 = sbr.rel target = $region194
        $region199: #{custom-call.121} parent=184 // loop_exit
          _
      $region185: #{custom-call.121} parent=180 // pred_fallthru
        _
      %s1181 = sand.u32 2, 7
      %s1182 = sshllo.u32 0, %s1181
      %s1183 = smul.u32 %s1134, 128
      %s1184 = sshra.s32 %s1183, 4
      %s1185 = scalar_lea.vmem %s7, %s1184
      %s1186 = smul.u32 %s1134, 128
      %s1187 = sshra.s32 %s1186, 4
      %s1188 = scalar_lea.vmem [#allocation15], %s1187
      %v1189 = vld [vmem:[%s1188] sm:%s1182]
      %1190 = vst [vmem:[%s1185] sm:%s1182] %v1189
    $region181: #{custom-call.121} parent=1 // pred_fallthru
      _
    %p1192 = scmp.gt.s32.totalorder 2, 0
    // Predicated region
    $region200: #{custom-call.121} parent=1 // pred_check
      %p1193 = pneg %p1192
    $region201: #{custom-call.121} parent=1 // pred_check_branch
      %1195 = sbr.rel (%p1193) target = $region203
    $region202: #{custom-call.121} parent=1 // pred_region
      %s1196 = sshra.s32 2, 3
      %p1197 = scmp.gt.s32.totalorder %s1196, 0
      // Predicated region
      $region204: #{custom-call.121} parent=202 // pred_check
        %p1198 = pneg %p1197
      $region205: #{custom-call.121} parent=202 // pred_check_branch
        %1200 = sbr.rel (%p1198) target = $region207
      $region206: #{custom-call.121} parent=202 // pred_region
        %s1201 = ssub.s32 %s1196, 1
        %s1202 = smul.u32 %s1201, 128
        %s1203 = sshra.s32 %s1202, 4
        %s1204 = scalar_lea.vmem [#allocation17], %s1203
        %v1205 = vld [vmem:[#allocation17] sm:$0xff]
        // While loop
        $region208: #{custom-call.121} parent=206 // loop_pre_header
          _
        $region209: #{custom-call.121} parent=206 // loop_header
          %s1206 = sphi [#allocation17], %s1228
          %s1207 = sphi %s8, %s1229
          %v1208 = vphi %v1205, %v1230
          %s1209 = ssub.s32 %s1204, 64
          %p1210 = scmp.gt.s32.totalorder %s1206, %s1209
        $region210: #{custom-call.121} parent=206 // loop_header_branch
          %1212 = sbr.rel (%p1210) target = $region214
        $region211: #{custom-call.121} parent=206 // loop_body
          %1213 = vst [vmem:[%s1207] sm:$0xff] %v1208
          %v1214 = vld [vmem:[%s1206 + $0x8] sm:$0xff]
          %1215 = vst [vmem:[%s1207 + $0x8] sm:$0xff] %v1214
          %v1216 = vld [vmem:[%s1206 + $0x10] sm:$0xff]
          %1217 = vst [vmem:[%s1207 + $0x10] sm:$0xff] %v1216
          %v1218 = vld [vmem:[%s1206 + $0x18] sm:$0xff]
          %1219 = vst [vmem:[%s1207 + $0x18] sm:$0xff] %v1218
          %v1220 = vld [vmem:[%s1206 + $0x20] sm:$0xff]
          %1221 = vst [vmem:[%s1207 + $0x20] sm:$0xff] %v1220
          %v1222 = vld [vmem:[%s1206 + $0x28] sm:$0xff]
          %1223 = vst [vmem:[%s1207 + $0x28] sm:$0xff] %v1222
          %v1224 = vld [vmem:[%s1206 + $0x30] sm:$0xff]
          %1225 = vst [vmem:[%s1207 + $0x30] sm:$0xff] %v1224
          %v1226 = vld [vmem:[%s1206 + $0x38] sm:$0xff]
          %1227 = vst [vmem:[%s1207 + $0x38] sm:$0xff] %v1226
        $region212: #{custom-call.121} parent=206 // loop_footer
          %s1228 = scalar_lea.vmem %s1206, 64
          %s1229 = scalar_lea.vmem %s1207, 64
          %v1230 = vld [vmem:[%s1206 + $0x40] sm:$0xff]
        $region213: #{custom-call.121} parent=206 // loop_footer_branch
          %1231 = sbr.rel target = $region209
        $region214: #{custom-call.121} parent=206 // loop_exit
          _
        // While loop
        $region215: #{custom-call.121} parent=206 // loop_pre_header
          _
        $region216: #{custom-call.121} parent=206 // loop_header
          %s1232 = sphi %s1206, %s1240
          %s1233 = sphi %s1207, %s1241
          %v1234 = vphi %v1208, %v1234
          %p1235 = scmp.gt.s32.totalorder %s1232, %s1204
        $region217: #{custom-call.121} parent=206 // loop_header_branch
          %1237 = sbr.rel (%p1235) target = $region221
        $region218: #{custom-call.121} parent=206 // loop_body
          %v1238 = vld [vmem:[%s1232] sm:$0xff]
          %1239 = vst [vmem:[%s1233] sm:$0xff] %v1238
        $region219: #{custom-call.121} parent=206 // loop_footer
          %s1240 = scalar_lea.vmem %s1232, 8
          %s1241 = scalar_lea.vmem %s1233, 8
        $region220: #{custom-call.121} parent=206 // loop_footer_branch
          %1242 = sbr.rel target = $region216
        $region221: #{custom-call.121} parent=206 // loop_exit
          _
      $region207: #{custom-call.121} parent=202 // pred_fallthru
        _
      %s1243 = sand.u32 2, 7
      %s1244 = sshllo.u32 0, %s1243
      %s1245 = smul.u32 %s1196, 128
      %s1246 = sshra.s32 %s1245, 4
      %s1247 = scalar_lea.vmem %s8, %s1246
      %s1248 = smul.u32 %s1196, 128
      %s1249 = sshra.s32 %s1248, 4
      %s1250 = scalar_lea.vmem [#allocation17], %s1249
      %v1251 = vld [vmem:[%s1250] sm:%s1244]
      %1252 = vst [vmem:[%s1247] sm:%s1244] %v1251
    $region203: #{custom-call.121} parent=1 // pred_fallthru
      _
    %p1254 = scmp.gt.s32.totalorder 2, 0
    // Predicated region
    $region222: #{custom-call.121} parent=1 // pred_check
      %p1255 = pneg %p1254
    $region223: #{custom-call.121} parent=1 // pred_check_branch
      %1257 = sbr.rel (%p1255) target = $region225
    $region224: #{custom-call.121} parent=1 // pred_region
      %s1258 = sshra.s32 2, 3
      %p1259 = scmp.gt.s32.totalorder %s1258, 0
      // Predicated region
      $region226: #{custom-call.121} parent=224 // pred_check
        %p1260 = pneg %p1259
      $region227: #{custom-call.121} parent=224 // pred_check_branch
        %1262 = sbr.rel (%p1260) target = $region229
      $region228: #{custom-call.121} parent=224 // pred_region
        %s1263 = ssub.s32 %s1258, 1
        %s1264 = smul.u32 %s1263, 128
        %s1265 = sshra.s32 %s1264, 4
        %s1266 = scalar_lea.vmem [#allocation19], %s1265
        %v1267 = vld [vmem:[#allocation19] sm:$0xff]
        // While loop
        $region230: #{custom-call.121} parent=228 // loop_pre_header
          _
        $region231: #{custom-call.121} parent=228 // loop_header
          %s1268 = sphi [#allocation19], %s1290
          %s1269 = sphi %s9, %s1291
          %v1270 = vphi %v1267, %v1292
          %s1271 = ssub.s32 %s1266, 64
          %p1272 = scmp.gt.s32.totalorder %s1268, %s1271
        $region232: #{custom-call.121} parent=228 // loop_header_branch
          %1274 = sbr.rel (%p1272) target = $region236
        $region233: #{custom-call.121} parent=228 // loop_body
          %1275 = vst [vmem:[%s1269] sm:$0xff] %v1270
          %v1276 = vld [vmem:[%s1268 + $0x8] sm:$0xff]
          %1277 = vst [vmem:[%s1269 + $0x8] sm:$0xff] %v1276
          %v1278 = vld [vmem:[%s1268 + $0x10] sm:$0xff]
          %1279 = vst [vmem:[%s1269 + $0x10] sm:$0xff] %v1278
          %v1280 = vld [vmem:[%s1268 + $0x18] sm:$0xff]
          %1281 = vst [vmem:[%s1269 + $0x18] sm:$0xff] %v1280
          %v1282 = vld [vmem:[%s1268 + $0x20] sm:$0xff]
          %1283 = vst [vmem:[%s1269 + $0x20] sm:$0xff] %v1282
          %v1284 = vld [vmem:[%s1268 + $0x28] sm:$0xff]
          %1285 = vst [vmem:[%s1269 + $0x28] sm:$0xff] %v1284
          %v1286 = vld [vmem:[%s1268 + $0x30] sm:$0xff]
          %1287 = vst [vmem:[%s1269 + $0x30] sm:$0xff] %v1286
          %v1288 = vld [vmem:[%s1268 + $0x38] sm:$0xff]
          %1289 = vst [vmem:[%s1269 + $0x38] sm:$0xff] %v1288
        $region234: #{custom-call.121} parent=228 // loop_footer
          %s1290 = scalar_lea.vmem %s1268, 64
          %s1291 = scalar_lea.vmem %s1269, 64
          %v1292 = vld [vmem:[%s1268 + $0x40] sm:$0xff]
        $region235: #{custom-call.121} parent=228 // loop_footer_branch
          %1293 = sbr.rel target = $region231
        $region236: #{custom-call.121} parent=228 // loop_exit
          _
        // While loop
        $region237: #{custom-call.121} parent=228 // loop_pre_header
          _
        $region238: #{custom-call.121} parent=228 // loop_header
          %s1294 = sphi %s1268, %s1302
          %s1295 = sphi %s1269, %s1303
          %v1296 = vphi %v1270, %v1296
          %p1297 = scmp.gt.s32.totalorder %s1294, %s1266
        $region239: #{custom-call.121} parent=228 // loop_header_branch
          %1299 = sbr.rel (%p1297) target = $region243
        $region240: #{custom-call.121} parent=228 // loop_body
          %v1300 = vld [vmem:[%s1294] sm:$0xff]
          %1301 = vst [vmem:[%s1295] sm:$0xff] %v1300
        $region241: #{custom-call.121} parent=228 // loop_footer
          %s1302 = scalar_lea.vmem %s1294, 8
          %s1303 = scalar_lea.vmem %s1295, 8
        $region242: #{custom-call.121} parent=228 // loop_footer_branch
          %1304 = sbr.rel target = $region238
        $region243: #{custom-call.121} parent=228 // loop_exit
          _
      $region229: #{custom-call.121} parent=224 // pred_fallthru
        _
      %s1305 = sand.u32 2, 7
      %s1306 = sshllo.u32 0, %s1305
      %s1307 = smul.u32 %s1258, 128
      %s1308 = sshra.s32 %s1307, 4
      %s1309 = scalar_lea.vmem %s9, %s1308
      %s1310 = smul.u32 %s1258, 128
      %s1311 = sshra.s32 %s1310, 4
      %s1312 = scalar_lea.vmem [#allocation19], %s1311
      %v1313 = vld [vmem:[%s1312] sm:%s1306]
      %1314 = vst [vmem:[%s1309] sm:%s1306] %v1313
    $region225: #{custom-call.121} parent=1 // pred_fallthru
      _
    // Predicated region
    $region244: #{custom-call.121} parent=1 // pred_check
      _
    $region245: #{custom-call.121} parent=1 // pred_check_branch
      %1316 = sbr.rel (0) target = $region247
    $region246: #{custom-call.121} parent=1 // pred_region
      _
    $region247: #{custom-call.121} parent=1 // pred_fallthru
      _
    // Predicated region
    $region248: #{custom-call.121} parent=1 // pred_check
      _
    $region249: #{custom-call.121} parent=1 // pred_check_branch
      %1318 = sbr.rel (0) target = $region251
    $region250: #{custom-call.121} parent=1 // pred_region
      _
    $region251: #{custom-call.121} parent=1 // pred_fallthru
      _

// kernel: reverse.5
$region0: #{reverse.5}
  %s0 = inlined_call_operand.vmem [shape: f32[3], index: 0, kind: input, shape index: {}]
  %s1 = inlined_call_operand.vmem [shape: f32[3], index: 1, kind: output, shape index: {}]
  %v2 = vlaneseq
  %v3 = vsub.s32 2, %v2
  %4 = vset.pattern.permute.xlu0 %v3
  $region1: #{reverse.5} parent=0
    #allocation0 [shape = 'u8[8192]{0}', space=vmem, size = 0x2000, scoped, tag = 'operand span for operand 0']
    #allocation1 [shape = 'u8[1024]{0}', space=vmem, size = 0x400, scoped, tag = 'packed  for operand 0']
    #allocation2 [shape = 'u8[4096]{0}', space=vmem, size = 0x1000, scoped, tag = 'operand span for operand 1']
    #allocation3 [shape = 'u8[512]{0}', space=vmem, size = 0x400, scoped, tag = 'packed  for operand 1']
    %s5 = scalar_lea.vmem [#allocation1], 1
    // Predicated region
    $region2: #{reverse.5} parent=1 // pred_check
      _
    $region3: #{reverse.5} parent=1 // pred_check_branch
      %7 = sbr.rel (0) target = $region5
    $region4: #{reverse.5} parent=1 // pred_region
      // Predicated region
      $region6: #{reverse.5} parent=4 // pred_check
        _
      $region7: #{reverse.5} parent=4 // pred_check_branch
        %9 = sbr.rel target = $region9
      $region8: #{reverse.5} parent=4 // pred_region
        // Predicated region
        $region21: #{reverse.5} parent=8 // pred_check
          _
        $region22: #{reverse.5} parent=8 // pred_check_branch
          %24 = sbr.rel (0) target = $region24
        $region23: #{reverse.5} parent=8 // pred_region
          loop: start=0, step=1, limit=1
          $region25: #{reverse.5} parent=23 // loop_pre_header
            _
          $region26: #{reverse.5} parent=23 // loop_header
            %s27 = sphi 0, %s31
            %p28 = scmp.ge.s32.totalorder %s27, 1
            %s32 = sphi %s0, %s0
            %s33 = sphi %s5, %s5
          $region27: #{reverse.5} parent=23 // loop_header_branch
            %30 = sbr.rel (%p28) target = $region31
          $region28: #{reverse.5} parent=23 // loop_body
            %v34 = vld [vmem:[%s32] sm:$0x1]
            %35 = vst [vmem:[%s33] sm:$0x1] %v34
          $region29: #{reverse.5} parent=23 // loop_footer
            %s31 = sadd.s32 1, %s27
          $region30: #{reverse.5} parent=23 // loop_footer_branch
            %26 = sbr.rel target = $region26
          $region31: #{reverse.5} parent=23 // loop_exit
            _
        $region24: #{reverse.5} parent=8 // pred_fallthru
          _
      $region9: #{reverse.5} parent=4 // pred_fallthru
        _
      // Predicated region
      $region10: #{reverse.5} parent=4 // pred_check
        _
      $region11: #{reverse.5} parent=4 // pred_check_branch
        %11 = sbr.rel (0) target = $region13
      $region12: #{reverse.5} parent=4 // pred_region
        loop: start=0, step=1, limit=1
        $region14: #{reverse.5} parent=12 // loop_pre_header
          _
        $region15: #{reverse.5} parent=12 // loop_header
          %s14 = sphi 0, %s18
          %p15 = scmp.ge.s32.totalorder %s14, 1
          %s19 = sphi %s0, %s0
          %s20 = sphi %s5, %s5
        $region16: #{reverse.5} parent=12 // loop_header_branch
          %17 = sbr.rel (%p15) target = $region20
        $region17: #{reverse.5} parent=12 // loop_body
          %v21 = vld [vmem:[%s19] sm:$0x1]
          %22 = vst [vmem:[%s20] sm:$0x1] %v21
        $region18: #{reverse.5} parent=12 // loop_footer
          %s18 = sadd.s32 1, %s14
        $region19: #{reverse.5} parent=12 // loop_footer_branch
          %13 = sbr.rel target = $region15
        $region20: #{reverse.5} parent=12 // loop_exit
          _
      $region13: #{reverse.5} parent=4 // pred_fallthru
        _
    $region5: #{reverse.5} parent=1 // pred_fallthru
      _
    %36 = vnop
    %s38 = sshllo.u32 0, 1
    %s39 = scalar_lea.vmem [#allocation1], 1
    %v40 = vld [vmem:[%s39] sm:%s38]
    %s41 = scalar_lea.vmem [#allocation0], 8
    %42 = vst [vmem:[%s41] sm:%s38] %v40
    %v43 = vld [vmem:[#allocation1] sm:%s38]
    %44 = vst [vmem:[#allocation0] sm:%s38] %v43
    %s45 = scalar_lea.vmem [#allocation0], 7
    %v46 = vld [vmem:[%s45] ss:$-1 sm:$0xff]
    %v47 = vrot.slane %v46, 7
    %48 = vperm.xlu0 %4, %v47
    %v49 = vpop.permute.xlu0 %48
    %50 = vst [vmem:[#allocation2] sm:$0xff] %v49
    %s51 = scalar_lea.vmem [#allocation0], 8
    %s52 = scalar_lea.vmem %s51, 7 [#allocation0]
    %v53 = vld [vmem:[%s52] ss:$-1 sm:$0xff]
    %v54 = vrot.slane %v53, 7
    %55 = vperm.xlu0 %4, %v54
    %v56 = vpop.permute.xlu0 %55
    %v57 = vlaneseq
    %v58 = vshrl.u32 %v57, 7
    %vm59 = vcmp.lt.s32.totalorder %v58, 1
    %60 = vst.msk [vmem:[#allocation2] sm:$0xff] %vm59, %v56
    %s62 = sshllo.u32 0, 1
    %v64 = vld [vmem:[#allocation2] sm:%s62]
    %s65 = sshllo.u32 0, 1
    %66 = vst [vmem:[#allocation3] sm:%s65] %v64
    // Predicated region
    $region32: #{reverse.5} parent=1 // pred_check
      _
    $region33: #{reverse.5} parent=1 // pred_check_branch
      %68 = sbr.rel (0) target = $region35
    $region34: #{reverse.5} parent=1 // pred_region
      // Predicated region
      $region36: #{reverse.5} parent=34 // pred_check
        _
      $region37: #{reverse.5} parent=34 // pred_check_branch
        %70 = sbr.rel target = $region39
      $region38: #{reverse.5} parent=34 // pred_region
        // Predicated region
        $region51: #{reverse.5} parent=38 // pred_check
          _
        $region52: #{reverse.5} parent=38 // pred_check_branch
          %85 = sbr.rel (0) target = $region54
        $region53: #{reverse.5} parent=38 // pred_region
          loop: start=0, step=1, limit=1
          $region55: #{reverse.5} parent=53 // loop_pre_header
            _
          $region56: #{reverse.5} parent=53 // loop_header
            %s88 = sphi 0, %s92
            %p89 = scmp.ge.s32.totalorder %s88, 1
            %s93 = sphi [#allocation3], [#allocation3]
            %s94 = sphi %s1, %s1
          $region57: #{reverse.5} parent=53 // loop_header_branch
            %91 = sbr.rel (%p89) target = $region61
          $region58: #{reverse.5} parent=53 // loop_body
            %v95 = vld [vmem:[%s93] sm:$0x1]
            %96 = vst [vmem:[%s94] sm:$0x1] %v95
          $region59: #{reverse.5} parent=53 // loop_footer
            %s92 = sadd.s32 1, %s88
          $region60: #{reverse.5} parent=53 // loop_footer_branch
            %87 = sbr.rel target = $region56
          $region61: #{reverse.5} parent=53 // loop_exit
            _
        $region54: #{reverse.5} parent=38 // pred_fallthru
          _
      $region39: #{reverse.5} parent=34 // pred_fallthru
        _
      // Predicated region
      $region40: #{reverse.5} parent=34 // pred_check
        _
      $region41: #{reverse.5} parent=34 // pred_check_branch
        %72 = sbr.rel (0) target = $region43
      $region42: #{reverse.5} parent=34 // pred_region
        loop: start=0, step=1, limit=1
        $region44: #{reverse.5} parent=42 // loop_pre_header
          _
        $region45: #{reverse.5} parent=42 // loop_header
          %s75 = sphi 0, %s79
          %p76 = scmp.ge.s32.totalorder %s75, 1
          %s80 = sphi [#allocation3], [#allocation3]
          %s81 = sphi %s1, %s1
        $region46: #{reverse.5} parent=42 // loop_header_branch
          %78 = sbr.rel (%p76) target = $region50
        $region47: #{reverse.5} parent=42 // loop_body
          %v82 = vld [vmem:[%s80] sm:$0x1]
          %83 = vst [vmem:[%s81] sm:$0x1] %v82
        $region48: #{reverse.5} parent=42 // loop_footer
          %s79 = sadd.s32 1, %s75
        $region49: #{reverse.5} parent=42 // loop_footer_branch
          %74 = sbr.rel target = $region45
        $region50: #{reverse.5} parent=42 // loop_exit
          _
      $region43: #{reverse.5} parent=34 // pred_fallthru
        _
    $region35: #{reverse.5} parent=1 // pred_fallthru
      _
    %97 = vnop

// kernel: custom-call.16
$region0: #{custom-call.16}
  %s0 = inlined_call_operand.vmem [shape: f32[3,3], index: 0, kind: input, shape index: {}]
  %s1 = inlined_call_operand.vmem [shape: f32[3,3], index: 1, kind: output, shape index: {0}]
  %s2 = inlined_call_operand.vmem [shape: f32[3], index: 2, kind: output, shape index: {1}]
  %3 = xla_tuple %s1, %s2
  $region1: #{custom-call.16} parent=0
    #allocation0 [shape = 'u8[4096]{0}', space=vmem, size = 0x1000, scoped, tag = 'operand span for operand 0']
    #allocation1 [shape = 'u8[2048]{0}', space=vmem, size = 0x800, scoped, tag = 'packed  for operand 0']
    #allocation2 [shape = 'u8[4096]{0}', space=vmem, size = 0x1000, scoped, tag = 'operand span for operand 1']
    #allocation3 [shape = 'u8[2048]{0}', space=vmem, size = 0x800, scoped, tag = 'packed  for operand 1']
    #allocation4 [shape = 'u8[4096]{0}', space=vmem, size = 0x1000, scoped, tag = 'operand span for operand 2']
    #allocation5 [shape = 'u8[512]{0}', space=vmem, size = 0x400, scoped, tag = 'packed  for operand 2']
    #allocation6 [shape = 'f32[3,128]{1,0}', space=vmem, size = 0x1000, scoped, tag = 'scratch for Householder reflectors']
    // Predicated region
    $region2: #{custom-call.16} parent=1 // pred_check
      _
    $region3: #{custom-call.16} parent=1 // pred_check_branch
      %5 = sbr.rel (0) target = $region5
    $region4: #{custom-call.16} parent=1 // pred_region
      // Predicated region
      $region6: #{custom-call.16} parent=4 // pred_check
        _
      $region7: #{custom-call.16} parent=4 // pred_check_branch
        %7 = sbr.rel target = $region9
      $region8: #{custom-call.16} parent=4 // pred_region
        // Predicated region
        $region21: #{custom-call.16} parent=8 // pred_check
          _
        $region22: #{custom-call.16} parent=8 // pred_check_branch
          %22 = sbr.rel (0) target = $region24
        $region23: #{custom-call.16} parent=8 // pred_region
          loop: start=0, step=1, limit=1
          $region25: #{custom-call.16} parent=23 // loop_pre_header
            _
          $region26: #{custom-call.16} parent=23 // loop_header
            %s25 = sphi 0, %s29
            %p26 = scmp.ge.s32.totalorder %s25, 1
            %s30 = sphi %s0, %s0
            %s31 = sphi [#allocation1], [#allocation1]
          $region27: #{custom-call.16} parent=23 // loop_header_branch
            %28 = sbr.rel (%p26) target = $region31
          $region28: #{custom-call.16} parent=23 // loop_body
            %v32 = vld [vmem:[%s30] sm:$0xf]
            %33 = vst [vmem:[%s31] sm:$0xf] %v32
          $region29: #{custom-call.16} parent=23 // loop_footer
            %s29 = sadd.s32 1, %s25
          $region30: #{custom-call.16} parent=23 // loop_footer_branch
            %24 = sbr.rel target = $region26
          $region31: #{custom-call.16} parent=23 // loop_exit
            _
        $region24: #{custom-call.16} parent=8 // pred_fallthru
          _
      $region9: #{custom-call.16} parent=4 // pred_fallthru
        _
      // Predicated region
      $region10: #{custom-call.16} parent=4 // pred_check
        _
      $region11: #{custom-call.16} parent=4 // pred_check_branch
        %9 = sbr.rel (0) target = $region13
      $region12: #{custom-call.16} parent=4 // pred_region
        loop: start=0, step=1, limit=1
        $region14: #{custom-call.16} parent=12 // loop_pre_header
          _
        $region15: #{custom-call.16} parent=12 // loop_header
          %s12 = sphi 0, %s16
          %p13 = scmp.ge.s32.totalorder %s12, 1
          %s17 = sphi %s0, %s0
          %s18 = sphi [#allocation1], [#allocation1]
        $region16: #{custom-call.16} parent=12 // loop_header_branch
          %15 = sbr.rel (%p13) target = $region20
        $region17: #{custom-call.16} parent=12 // loop_body
          %v19 = vld [vmem:[%s17] sm:$0xf]
          %20 = vst [vmem:[%s18] sm:$0xf] %v19
        $region18: #{custom-call.16} parent=12 // loop_footer
          %s16 = sadd.s32 1, %s12
        $region19: #{custom-call.16} parent=12 // loop_footer_branch
          %11 = sbr.rel target = $region15
        $region20: #{custom-call.16} parent=12 // loop_exit
          _
      $region13: #{custom-call.16} parent=4 // pred_fallthru
        _
    $region5: #{custom-call.16} parent=1 // pred_fallthru
      _
    %34 = vnop
    %s36 = sshllo.u32 0, 4
    %v37 = vld [vmem:[#allocation1] sm:%s36]
    %38 = vst [vmem:[#allocation0] sm:%s36] %v37
    %v39 = vld [vmem:[#allocation0] sm:$0xff]
    %40 = vst [vmem:[#allocation2] sm:$0xff] %v39
    %41 = vst [vmem:[#allocation4] sm:$0x1] 0.0
    loop: start=0, step=1, limit=3
    $region32: #{custom-call.16} parent=1 // loop_pre_header
      _
    $region33: #{custom-call.16} parent=1 // loop_header
      %s43 = sphi 0, %s47
      %p44 = scmp.ge.s32.totalorder %s43, 3
    $region34: #{custom-call.16} parent=1 // loop_header_branch
      %46 = sbr.rel (%p44) target = $region38
    $region35: #{custom-call.16} parent=1 // loop_body
      %v48 = vld [vmem:[#allocation2] sm:$0xff]
      %v49 = vlaneseq
      %v50 = vshrl.u32 %v49, 7
      %v52 = vstv %s43
      %vm53 = vcmp.gt.s32.totalorder %v50, %v52
      %vm54 = vcmp.lt.s32.totalorder %v50, 3
      %vm55 = vmand %vm53, %vm54
      %v56 = vsel %vm55, %v48, 0.0
      %v57 = vmul.f32 %v56, %v56
      %v58 = vrot.slane %v57, 4
      %v59 = vadd.f32 %v57, %v58
      %v60 = vrot.slane %v59, 2
      %v61 = vadd.f32 %v59, %v60
      %v62 = vrot.slane %v61, 1
      %v63 = vadd.f32 %v61, %v62
      %v64 = vrsqrt.pop %v63
      %v65 = vmul.f32 %v63, %v64
      %vm66 = vcmp.eq.f32.partialorder %v63, inf
      %v67 = vsel %vm66, %v63, %v65
      %vm68 = vcmp.eq.f32.partialorder %v63, 0.0
      %v69 = vand.u32 %v63, 2147483648
      %v70 = vsel %vm68, %v69, %v67
      %vm71 = vcmp.eq.f32.partialorder %v63, 0.0
      %s72 = sshrl.u32 %s43, 3
      %s73 = sand.u32 %s43, 7
      %s74 = smul.addr %s72, 8
      %s75 = sadd.s32 %s73, %s74
      %s76 = scalar_lea.vmem [#allocation2], %s75
      %v77 = vld [vmem:[%s76] ss:$0 sm:$0xff]
      %v78 = vand.u32 2147483647, %v77
      %v79 = vmax.f32 %v78, 0.0
      %v80 = vand.u32 2147483647, %v70
      %v81 = vmax.f32 %v79, %v80
      %v82 = vrcp.pop %v81
      %v83 = vmul.f32 %v78, %v82
      %v84 = vmul.f32 %v83, %v83
      %v85 = vrcp.pop %v81
      %v86 = vmul.f32 0.0, %v85
      %v87 = vmul.f32 %v86, %v86
      %v88 = vadd.f32 %v84, %v87
      %v89 = vrcp.pop %v81
      %v90 = vmul.f32 %v80, %v89
      %v91 = vmul.f32 %v90, %v90
      %v92 = vadd.f32 %v88, %v91
      %vm93 = vcmp.eq.f32.partialorder %v81, 0.0
      %v94 = vrsqrt.pop %v92
      %v95 = vmul.f32 %v92, %v94
      %vm96 = vcmp.eq.f32.partialorder %v92, inf
      %v97 = vsel %vm96, %v92, %v95
      %vm98 = vcmp.eq.f32.partialorder %v92, 0.0
      %v99 = vand.u32 %v92, 2147483648
      %v100 = vsel %vm98, %v99, %v97
      %v101 = vmul.f32 %v81, %v100
      %v102 = vsel %vm93, 0.0, %v101
      %vm103 = vcmp.lt.f32.partialorder %v77, 0.0
      %v104 = vxor.u32 %v102, 2147483648
      %v105 = vsel %vm103, %v102, %v104
      %v106 = vsub.f32 %v105, %v77
      %v107 = vrcp.pop %v105
      %v108 = vmul.f32 %v106, %v107
      %v109 = vsel %vm71, %v77, %v105
      %v110 = vsel %vm71, 0.0, %v108
      %v111 = vsub.f32 %v77, %v109
      %s112 = smov [#allocation2]
      %v113 = vlaneseq
      %v114 = vshrl.u32 %v113, 7
      %v115 = vmov %v114
      %v116 = vld [vmem:[%s112] sm:$0xff]
      %v118 = vstv %s43
      %vm119 = vcmp.gt.s32.totalorder %v115, %v118
      %vm120 = vcmp.lt.s32.totalorder %v115, 3
      %vm121 = vmand %vm119, %vm120
      %v122 = vsel %vm121, %v116, 0.0
      %v123 = vrcp.pop %v111
      %v124 = vmul.f32 %v122, %v123
      %v125 = vsel %vm71, 0.0, %v124
      %v126 = vstv %s43
      %v127 = vlaneseq
      %v128 = vand.u32 %v127, 127
      %vm129 = vcmp.eq.s32.totalorder %v128, %v126
      %v130 = vsel %vm129, %v125, 0.0
      %131 = vadd.xlane.f32.xlu0 %v130
      %v132 = vpop.xlane.xlu0 %131
      %133 = vst [vmem:[#allocation6] sm:$0xff] %v132
      %s134 = scalar_lea.vmem [#allocation6], %s43
      %135 = vst [vmem:[%s134] sm:$0x1] 1.0
      %v136 = vstv %s43
      %v137 = vlaneseq
      %v138 = vand.u32 %v137, 127
      %vm139 = vcmp.eq.s32.totalorder %v138, %v136
      %v140 = vsel %vm139, %v110, 0.0
      %141 = vadd.xlane.f32.xlu0 %v140
      %v142 = vpop.xlane.xlu0 %141
      %v143 = vstv %s43
      %v144 = vlaneseq
      %v145 = vand.u32 %v144, 127
      %vm146 = vcmp.eq.s32.totalorder %v145, %v143
      %v147 = vld [vmem:[#allocation4] ss:$0 sm:$0xff]
      %v148 = vsel %vm146, %v142, %v147
      %149 = vst [vmem:[#allocation4] sm:$0x1] %v148
      %s150 = smov [#allocation2]
      %s151 = smov [#allocation6]
      %v152 = vlaneseq
      %v153 = vshrl.u32 %v152, 7
      %v154 = vmov %v153
      %v156 = vld [vmem:[%s151] sm:$0xff]
      %v157 = vld [vmem:[%s150] sm:$0xff]
      %v158 = vmul.f32 %v156, %v157
      %vm159 = vcmp.lt.s32.totalorder %v154, 3
      %v160 = vsel %vm159, %v158, 0.0
      %v161 = vrot.slane %v160, 4
      %v162 = vadd.f32 %v160, %v161
      %v163 = vrot.slane %v162, 2
      %v164 = vadd.f32 %v162, %v163
      %v165 = vrot.slane %v164, 1
      %v166 = vadd.f32 %v164, %v165
      %s167 = smov %s150
      %s168 = smov %s151
      %v169 = vlaneseq
      %v170 = vshrl.u32 %v169, 7
      %v171 = vmov %v170
      %v172 = vmul.f32 %v166, %v142
      %v174 = vlaneseq
      %v175 = vand.u32 %v174, 127
      %v176 = vld [vmem:[%s168] sm:$0xff]
      %v177 = vmul.f32 %v176, %v172
      %v178 = vld [vmem:[%s167] sm:$0xff]
      %v179 = vstv %s43
      %vm180 = vcmp.gt.s32.totalorder %v175, %v179
      %v181 = vsub.f32 %v178, %v177
      %v182 = vsel %vm180, %v181, %v178
      %v183 = vstv %s43
      %v184 = vlaneseq
      %v185 = vand.u32 %v184, 127
      %vm186 = vcmp.eq.s32.totalorder %v185, %v183
      %v187 = vstv %s43
      %vm188 = vcmp.ge.s32.totalorder %v171, %v187
      %vm189 = vmand %vm186, %vm188
      %v190 = vsel %vm189, %v176, %v182
      %191 = vst [vmem:[%s167] sm:$0xff] %v190
      %s192 = scalar_lea.vmem %s167, %s43
      %v193 = vld [vmem:[%s192] ss:$0 sm:$0xff]
      %v194 = vstv %s43
      %v195 = vlaneseq
      %v196 = vand.u32 %v195, 127
      %vm197 = vcmp.eq.s32.totalorder %v196, %v194
      %v198 = vsel %vm197, %v109, %v193
      %199 = vst [vmem:[%s192] sm:$0x1] %v198
    $region36: #{custom-call.16} parent=1 // loop_footer
      %s47 = sadd.s32 1, %s43
    $region37: #{custom-call.16} parent=1 // loop_footer_branch
      %42 = sbr.rel target = $region33
    $region38: #{custom-call.16} parent=1 // loop_exit
      _
    %s201 = sshllo.u32 0, 4
    %v203 = vld [vmem:[#allocation2] sm:%s201]
    %s204 = sshllo.u32 0, 4
    %205 = vst [vmem:[#allocation3] sm:%s204] %v203
    %s207 = sshllo.u32 0, 1
    %v209 = vld [vmem:[#allocation4] sm:%s207]
    %s210 = sshllo.u32 0, 1
    %211 = vst [vmem:[#allocation5] sm:%s210] %v209
    // Predicated region
    $region39: #{custom-call.16} parent=1 // pred_check
      _
    $region40: #{custom-call.16} parent=1 // pred_check_branch
      %213 = sbr.rel (0) target = $region42
    $region41: #{custom-call.16} parent=1 // pred_region
      // Predicated region
      $region43: #{custom-call.16} parent=41 // pred_check
        _
      $region44: #{custom-call.16} parent=41 // pred_check_branch
        %215 = sbr.rel target = $region46
      $region45: #{custom-call.16} parent=41 // pred_region
        // Predicated region
        $region58: #{custom-call.16} parent=45 // pred_check
          _
        $region59: #{custom-call.16} parent=45 // pred_check_branch
          %230 = sbr.rel (0) target = $region61
        $region60: #{custom-call.16} parent=45 // pred_region
          loop: start=0, step=1, limit=1
          $region62: #{custom-call.16} parent=60 // loop_pre_header
            _
          $region63: #{custom-call.16} parent=60 // loop_header
            %s233 = sphi 0, %s237
            %p234 = scmp.ge.s32.totalorder %s233, 1
            %s238 = sphi [#allocation3], [#allocation3]
            %s239 = sphi %s1, %s1
          $region64: #{custom-call.16} parent=60 // loop_header_branch
            %236 = sbr.rel (%p234) target = $region68
          $region65: #{custom-call.16} parent=60 // loop_body
            %v240 = vld [vmem:[%s238] sm:$0xf]
            %241 = vst [vmem:[%s239] sm:$0xf] %v240
          $region66: #{custom-call.16} parent=60 // loop_footer
            %s237 = sadd.s32 1, %s233
          $region67: #{custom-call.16} parent=60 // loop_footer_branch
            %232 = sbr.rel target = $region63
          $region68: #{custom-call.16} parent=60 // loop_exit
            _
        $region61: #{custom-call.16} parent=45 // pred_fallthru
          _
      $region46: #{custom-call.16} parent=41 // pred_fallthru
        _
      // Predicated region
      $region47: #{custom-call.16} parent=41 // pred_check
        _
      $region48: #{custom-call.16} parent=41 // pred_check_branch
        %217 = sbr.rel (0) target = $region50
      $region49: #{custom-call.16} parent=41 // pred_region
        loop: start=0, step=1, limit=1
        $region51: #{custom-call.16} parent=49 // loop_pre_header
          _
        $region52: #{custom-call.16} parent=49 // loop_header
          %s220 = sphi 0, %s224
          %p221 = scmp.ge.s32.totalorder %s220, 1
          %s225 = sphi [#allocation3], [#allocation3]
          %s226 = sphi %s1, %s1
        $region53: #{custom-call.16} parent=49 // loop_header_branch
          %223 = sbr.rel (%p221) target = $region57
        $region54: #{custom-call.16} parent=49 // loop_body
          %v227 = vld [vmem:[%s225] sm:$0xf]
          %228 = vst [vmem:[%s226] sm:$0xf] %v227
        $region55: #{custom-call.16} parent=49 // loop_footer
          %s224 = sadd.s32 1, %s220
        $region56: #{custom-call.16} parent=49 // loop_footer_branch
          %219 = sbr.rel target = $region52
        $region57: #{custom-call.16} parent=49 // loop_exit
          _
      $region50: #{custom-call.16} parent=41 // pred_fallthru
        _
    $region42: #{custom-call.16} parent=1 // pred_fallthru
      _
    %242 = vnop
    // Predicated region
    $region69: #{custom-call.16} parent=1 // pred_check
      _
    $region70: #{custom-call.16} parent=1 // pred_check_branch
      %244 = sbr.rel (0) target = $region72
    $region71: #{custom-call.16} parent=1 // pred_region
      // Predicated region
      $region73: #{custom-call.16} parent=71 // pred_check
        _
      $region74: #{custom-call.16} parent=71 // pred_check_branch
        %246 = sbr.rel (0) target = $region76
      $region75: #{custom-call.16} parent=71 // pred_region
        // Predicated region
        $region77: #{custom-call.16} parent=75 // pred_check
          _
        $region78: #{custom-call.16} parent=75 // pred_check_branch
          %248 = sbr.rel target = $region80
        $region79: #{custom-call.16} parent=75 // pred_region
          // Predicated region
          $region92: #{custom-call.16} parent=79 // pred_check
            _
          $region93: #{custom-call.16} parent=79 // pred_check_branch
            %263 = sbr.rel (0) target = $region95
          $region94: #{custom-call.16} parent=79 // pred_region
            loop: start=0, step=1, limit=1
            $region96: #{custom-call.16} parent=94 // loop_pre_header
              _
            $region97: #{custom-call.16} parent=94 // loop_header
              %s266 = sphi 0, %s270
              %p267 = scmp.ge.s32.totalorder %s266, 1
              %s271 = sphi [#allocation5], [#allocation5]
              %s272 = sphi %s2, %s2
            $region98: #{custom-call.16} parent=94 // loop_header_branch
              %269 = sbr.rel (%p267) target = $region102
            $region99: #{custom-call.16} parent=94 // loop_body
              %v273 = vld [vmem:[%s271] sm:$0x1]
              %274 = vst [vmem:[%s272] sm:$0x1] %v273
            $region100: #{custom-call.16} parent=94 // loop_footer
              %s270 = sadd.s32 1, %s266
            $region101: #{custom-call.16} parent=94 // loop_footer_branch
              %265 = sbr.rel target = $region97
            $region102: #{custom-call.16} parent=94 // loop_exit
              _
          $region95: #{custom-call.16} parent=79 // pred_fallthru
            _
        $region80: #{custom-call.16} parent=75 // pred_fallthru
          _
        // Predicated region
        $region81: #{custom-call.16} parent=75 // pred_check
          _
        $region82: #{custom-call.16} parent=75 // pred_check_branch
          %250 = sbr.rel (0) target = $region84
        $region83: #{custom-call.16} parent=75 // pred_region
          loop: start=0, step=1, limit=1
          $region85: #{custom-call.16} parent=83 // loop_pre_header
            _
          $region86: #{custom-call.16} parent=83 // loop_header
            %s253 = sphi 0, %s257
            %p254 = scmp.ge.s32.totalorder %s253, 1
            %s258 = sphi [#allocation5], [#allocation5]
            %s259 = sphi %s2, %s2
          $region87: #{custom-call.16} parent=83 // loop_header_branch
            %256 = sbr.rel (%p254) target = $region91
          $region88: #{custom-call.16} parent=83 // loop_body
            %v260 = vld [vmem:[%s258] sm:$0x1]
            %261 = vst [vmem:[%s259] sm:$0x1] %v260
          $region89: #{custom-call.16} parent=83 // loop_footer
            %s257 = sadd.s32 1, %s253
          $region90: #{custom-call.16} parent=83 // loop_footer_branch
            %252 = sbr.rel target = $region86
          $region91: #{custom-call.16} parent=83 // loop_exit
            _
        $region84: #{custom-call.16} parent=75 // pred_fallthru
          _
      $region76: #{custom-call.16} parent=71 // pred_fallthru
        _
      %275 = vnop
    $region72: #{custom-call.16} parent=1 // pred_fallthru
      _
    // Predicated region
    $region103: #{custom-call.16} parent=1 // pred_check
      _
    $region104: #{custom-call.16} parent=1 // pred_check_branch
      %277 = sbr.rel (0) target = $region106
    $region105: #{custom-call.16} parent=1 // pred_region
      _
    $region106: #{custom-call.16} parent=1 // pred_fallthru
      _

// kernel: cast_forward.1
$region0: #{cast_forward.1}
  #allocation0 [shape = 'u32[]', space=smem, size = 0x4, offset = 0x4, fixed_abs, tag = 'smem constant byte address 0x4 - core index']
  #allocation1 [shape = 'u32[144,128]{1,0:T(1,128)}', space=vmem, size = 0x12000, scoped, tag = 'internal scratch']
  %s0 = inlined_call_operand.vmem [shape: f32[32,32], index: 0, kind: input, shape index: {}]
  %s1 = inlined_call_operand.vmem [shape: f32[32,4], index: 1, kind: input, shape index: {}]
  %s2 = inlined_call_operand.vmem [shape: f32[16,3], index: 2, kind: input, shape index: {}]
  %s3 = inlined_call_operand.vmem [shape: f32[3,16], index: 3, kind: input, shape index: {}]
  %s4 = inlined_call_operand.vmem [shape: f32[4,4], index: 4, kind: input, shape index: {}]
  %s5 = inlined_call_operand.vmem [shape: f32[48,128], index: 5, kind: input, shape index: {}]
  %s6 = inlined_call_operand.vmem [shape: f32[32,128], index: 6, kind: output, shape index: {}]
  %s7 = sld [smem:[#allocation0]]
  $region34: #{cast_forward.1} parent=0
    _
  %s9 = ssub.s32 1, %s7
  %s10 = scalar_select 0, %s9, %s7
  // Predicated region
  $region2: #{cast_forward.1} parent=0 // pred_check
    _
  $region3: #{cast_forward.1} parent=0 // pred_check_branch
    %12 = sbr.rel (0) target = $region5
  $region4: #{cast_forward.1} parent=0 // pred_region
    _
  $region5: #{cast_forward.1} parent=0 // pred_fallthru
    _
  // Predicated region
  $region6: #{cast_forward.1} parent=0 // pred_check
    _
  $region7: #{cast_forward.1} parent=0 // pred_check_branch
    %14 = sbr.rel (0) target = $region9
  $region8: #{cast_forward.1} parent=0 // pred_region
    _
  $region9: #{cast_forward.1} parent=0 // pred_fallthru
    _
  // Predicated region
  $region10: #{cast_forward.1} parent=0 // pred_check
    _
  $region11: #{cast_forward.1} parent=0 // pred_check_branch
    %16 = sbr.rel (0) target = $region13
  $region12: #{cast_forward.1} parent=0 // pred_region
    _
  $region13: #{cast_forward.1} parent=0 // pred_fallthru
    _
  // Predicated region
  $region14: #{cast_forward.1} parent=0 // pred_check
    _
  $region15: #{cast_forward.1} parent=0 // pred_check_branch
    %18 = sbr.rel (0) target = $region17
  $region16: #{cast_forward.1} parent=0 // pred_region
    _
  $region17: #{cast_forward.1} parent=0 // pred_fallthru
    _
  // Predicated region
  $region18: #{cast_forward.1} parent=0 // pred_check
    _
  $region19: #{cast_forward.1} parent=0 // pred_check_branch
    %20 = sbr.rel (0) target = $region21
  $region20: #{cast_forward.1} parent=0 // pred_region
    _
  $region21: #{cast_forward.1} parent=0 // pred_fallthru
    _
  // Predicated region
  $region22: #{cast_forward.1} parent=0 // pred_check
    _
  $region23: #{cast_forward.1} parent=0 // pred_check_branch
    %22 = sbr.rel (0) target = $region25
  $region24: #{cast_forward.1} parent=0 // pred_region
    _
  $region25: #{cast_forward.1} parent=0 // pred_fallthru
    _
  %v23 = vld [vmem:[%s0] sm:$0xff]
  %v24 = vld [vmem:[%s0 + $0x8] sm:$0xff]
  %v25 = vld [vmem:[%s0 + $0x10] sm:$0xff]
  %v26 = vld [vmem:[%s0 + $0x18] sm:$0xff]
  %v27 = vld [vmem:[%s5] sm:$0xff]
  %v28 = vld [vmem:[%s5 + $0x8] sm:$0xff]
  %v29 = vld [vmem:[%s5 + $0x10] sm:$0xff]
  %v30 = vld [vmem:[%s5 + $0x18] sm:$0xff]
  %v31 = vld [vmem:[%s5 + $0x28] sm:$0x1]
  %v32 = vld [vmem:[%s5 + $0x20] sm:$0xf]
  %v33 = vlaneseq
  %v34 = vshrl.u32 %v33, 7
  %v35 = vsub.s32 0, %v34
  %v36 = vrot.slane %v31, %v35
  %vm37 = vcmask 261120
  %v39 = vsel %vm37, %v23, 0
  %v42 = vsel %vm37, %v24, 0
  %v45 = vsel %vm37, %v25, 0
  %v48 = vsel %vm37, %v26, 0
  %50 = vmatprep.subr.mxu0 0.0
  %51 = vmatpush1.msra.mxu0 %v27
  %52 = vmatprep.subr.mxu0 0.0
  %53 = vmatpush1.msra.mxu0 %v28
  %54 = vmatprep.subr.mxu0 0.0
  %55 = vmatpush1.msra.mxu0 %v29
  %56 = vmatprep.subr.mxu0 0.0
  %57 = vmatpush1.msra.mxu0 %v30
  %58 = vmatprep.subr.mxu0 0.0
  %59 = vmatpush1.msra.mxu0 0.0
  %60 = vmatprep.subr.mxu0 0.0
  %61 = vmatpush1.msra.mxu0 0.0
  %62 = vmatprep.subr.mxu0 0.0
  %63 = vmatpush1.msra.mxu0 0.0
  %64 = vmatprep.subr.mxu0 0.0
  %65 = vmatpush1.msra.mxu0 0.0
  %66 = vmatprep.subr.mxu0 0.0
  %67 = vmatpush1.msra.mxu0 0.0
  %68 = vmatprep.subr.mxu0 0.0
  %69 = vmatpush1.msra.mxu0 0.0
  %70 = vmatprep.subr.mxu0 0.0
  %71 = vmatpush1.msra.mxu0 0.0
  %72 = vmatprep.subr.mxu0 0.0
  %73 = vmatpush1.msra.mxu0 0.0
  %74 = vmatprep.subr.mxu0 0.0
  %75 = vmatpush1.msra.mxu0 0.0
  %76 = vmatprep.subr.mxu0 0.0
  %77 = vmatpush1.msra.mxu0 0.0
  %78 = vmatprep.subr.mxu0 0.0
  %79 = vmatpush1.msra.mxu0 0.0
  %80 = vmatprep.subr.mxu0 0.0
  %81 = vmatpush1.msra.mxu0 0.0
  %82 = vmatprep.subr.mxu0 0.0
  %83 = vmatpush1.msra.mxu0 0.0
  %84 = vmatprep.subr.mxu0 0.0
  %85 = vmatpush1.msra.mxu0 0.0
  %86 = vmatprep.subr.mxu0 0.0
  %87 = vmatpush1.msra.mxu0 0.0
  %88 = vmatprep.subr.mxu0 0.0
  %89 = vmatpush1.msra.mxu0 0.0
  %90 = vmatprep.subr.mxu0 0.0
  %91 = vmatpush1.msra.mxu0 0.0
  %92 = vmatprep.subr.mxu0 0.0
  %93 = vmatpush1.msra.mxu0 0.0
  %94 = vmatprep.subr.mxu0 0.0
  %95 = vmatpush1.msra.mxu0 0.0
  %96 = vmatprep.subr.mxu0 0.0
  %97 = vmatpush1.msra.mxu0 0.0
  %98 = vmatprep.subr.mxu0 0.0
  %99 = vmatpush1.msra.mxu0 0.0
  %100 = vmatprep.subr.mxu0 0.0
  %101 = vmatpush1.msra.mxu0 0.0
  %102 = vmatprep.subr.mxu0 0.0
  %103 = vmatpush1.msra.mxu0 0.0
  %104 = vmatprep.subr.mxu0 0.0
  %105 = vmatpush1.msra.mxu0 0.0
  %106 = vmatprep.subr.mxu0 0.0
  %107 = vmatpush1.msra.mxu0 0.0
  %108 = vmatprep.subr.mxu0 0.0
  %109 = vmatpush1.msra.mxu0 0.0
  %110 = vmatprep.subr.mxu0 0.0
  %111 = vmatpush1.msra.mxu0 0.0
  %112 = vmatprep.subr.mxu0 0.0
  %113 = vmatpush1.msra.mxu0 0.0
  %114 = vmatprep.mubr.f32.mxu0 0.0
  %115 = vmatmul.mubr.f32.gmra.mrb[0].mxu0 %v39
  %v116 = vpop.f32.mrb[0].mxu0
  %v117 = vadd.f32 %v36, %v116
  %v118 = vpop.f32.mrb[0].mxu0
  %119 = vmatprep.mubr.f32.mxu0 0.0
  %120 = vmatmul.mubr.f32.gmra.mrb[0].mxu0 %v42
  %v121 = vpop.f32.mrb[0].mxu0
  %v122 = vadd.f32 %v36, %v121
  %v123 = vpop.f32.mrb[0].mxu0
  %124 = vmatprep.mubr.f32.mxu0 0.0
  %125 = vmatmul.mubr.f32.gmra.mrb[0].mxu0 %v45
  %v126 = vpop.f32.mrb[0].mxu0
  %v127 = vadd.f32 %v36, %v126
  %v128 = vpop.f32.mrb[0].mxu0
  %129 = vmatprep.mubr.f32.mxu0 0.0
  %130 = vmatmul.mubr.f32.gmra.mrb[0].mxu0 %v48
  %v131 = vpop.f32.mrb[0].mxu0
  %v132 = vadd.f32 %v36, %v131
  %v133 = vpop.f32.mrb[0].mxu0
  %134 = vdwg.mxu0
  %v135 = vld [vmem:[%s1] sm:$0xff]
  %v136 = vld [vmem:[%s1 + $0x8] sm:$0xff]
  %v137 = vld [vmem:[%s1 + $0x10] sm:$0xff]
  %v138 = vld [vmem:[%s1 + $0x18] sm:$0xff]
  %vm139 = vcmask 31744
  %v141 = vsel %vm139, %v135, 0
  %v144 = vsel %vm139, %v136, 0
  %v147 = vsel %vm139, %v137, 0
  %v150 = vsel %vm139, %v138, 0
  %vm152 = vcmask 1043456
  %v154 = vsel %vm152, %v32, 0
  %156 = vmatprep.subr.mxu0 0.0
  %157 = vmatpush1.msra.mxu0 %v154
  %158 = vmatprep.subr.mxu0 0.0
  %159 = vmatpush1.msra.mxu0 0.0
  %160 = vmatprep.subr.mxu0 0.0
  %161 = vmatpush1.msra.mxu0 0.0
  %162 = vmatprep.subr.mxu0 0.0
  %163 = vmatpush1.msra.mxu0 0.0
  %164 = vmatprep.subr.mxu0 0.0
  %165 = vmatpush1.msra.mxu0 0.0
  %166 = vmatprep.subr.mxu0 0.0
  %167 = vmatpush1.msra.mxu0 0.0
  %168 = vmatprep.subr.mxu0 0.0
  %169 = vmatpush1.msra.mxu0 0.0
  %170 = vmatprep.subr.mxu0 0.0
  %171 = vmatpush1.msra.mxu0 0.0
  %172 = vmatprep.subr.mxu0 0.0
  %173 = vmatpush1.msra.mxu0 0.0
  %174 = vmatprep.subr.mxu0 0.0
  %175 = vmatpush1.msra.mxu0 0.0
  %176 = vmatprep.subr.mxu0 0.0
  %177 = vmatpush1.msra.mxu0 0.0
  %178 = vmatprep.subr.mxu0 0.0
  %179 = vmatpush1.msra.mxu0 0.0
  %180 = vmatprep.subr.mxu0 0.0
  %181 = vmatpush1.msra.mxu0 0.0
  %182 = vmatprep.subr.mxu0 0.0
  %183 = vmatpush1.msra.mxu0 0.0
  %184 = vmatprep.subr.mxu0 0.0
  %185 = vmatpush1.msra.mxu0 0.0
  %186 = vmatprep.subr.mxu0 0.0
  %187 = vmatpush1.msra.mxu0 0.0
  %188 = vmatprep.subr.mxu0 0.0
  %189 = vmatpush1.msra.mxu0 0.0
  %190 = vmatprep.subr.mxu0 0.0
  %191 = vmatpush1.msra.mxu0 0.0
  %192 = vmatprep.subr.mxu0 0.0
  %193 = vmatpush1.msra.mxu0 0.0
  %194 = vmatprep.subr.mxu0 0.0
  %195 = vmatpush1.msra.mxu0 0.0
  %196 = vmatprep.subr.mxu0 0.0
  %197 = vmatpush1.msra.mxu0 0.0
  %198 = vmatprep.subr.mxu0 0.0
  %199 = vmatpush1.msra.mxu0 0.0
  %200 = vmatprep.subr.mxu0 0.0
  %201 = vmatpush1.msra.mxu0 0.0
  %202 = vmatprep.subr.mxu0 0.0
  %203 = vmatpush1.msra.mxu0 0.0
  %204 = vmatprep.subr.mxu0 0.0
  %205 = vmatpush1.msra.mxu0 0.0
  %206 = vmatprep.subr.mxu0 0.0
  %207 = vmatpush1.msra.mxu0 0.0
  %208 = vmatprep.subr.mxu0 0.0
  %209 = vmatpush1.msra.mxu0 0.0
  %210 = vmatprep.subr.mxu0 0.0
  %211 = vmatpush1.msra.mxu0 0.0
  %212 = vmatprep.subr.mxu0 0.0
  %213 = vmatpush1.msra.mxu0 0.0
  %214 = vmatprep.subr.mxu0 0.0
  %215 = vmatpush1.msra.mxu0 0.0
  %216 = vmatprep.subr.mxu0 0.0
  %217 = vmatpush1.msra.mxu0 0.0
  %218 = vmatprep.subr.mxu0 0.0
  %219 = vmatpush1.msra.mxu0 0.0
  %220 = vmatprep.mubr.f32.mxu0 0.0
  %221 = vmatmul.mubr.f32.gmra.mrb[0].mxu0 %v141
  %v222 = vpop.f32.mrb[0].mxu0
  %v223 = vadd.f32 0.0, %v222
  %v224 = vpop.f32.mrb[0].mxu0
  %225 = vmatprep.mubr.f32.mxu0 0.0
  %226 = vmatmul.mubr.f32.gmra.mrb[0].mxu0 %v144
  %v227 = vpop.f32.mrb[0].mxu0
  %v228 = vadd.f32 0.0, %v227
  %v229 = vpop.f32.mrb[0].mxu0
  %230 = vmatprep.mubr.f32.mxu0 0.0
  %231 = vmatmul.mubr.f32.gmra.mrb[0].mxu0 %v147
  %v232 = vpop.f32.mrb[0].mxu0
  %v233 = vadd.f32 0.0, %v232
  %v234 = vpop.f32.mrb[0].mxu0
  %235 = vmatprep.mubr.f32.mxu0 0.0
  %236 = vmatmul.mubr.f32.gmra.mrb[0].mxu0 %v150
  %v237 = vpop.f32.mrb[0].mxu0
  %v238 = vadd.f32 0.0, %v237
  %v239 = vpop.f32.mrb[0].mxu0
  %240 = vdwg.mxu0
  %v241 = vadd.f32 %v117, %v223
  %v242 = vadd.f32 %v122, %v228
  %v243 = vadd.f32 %v127, %v233
  %v244 = vadd.f32 %v132, %v238
  %v245 = vmul.f32 %v241, 0.1
  %v246 = vmul.f32 %v242, 0.1
  %v247 = vmul.f32 %v243, 0.1
  %v248 = vmul.f32 %v244, 0.1
  %v249 = vmax.f32 %v241, %v245
  %v250 = vmax.f32 %v242, %v246
  %v251 = vmax.f32 %v243, %v247
  %v252 = vmax.f32 %v244, %v248
  %257 = vrot.lane.b32.xlu0 %v27, 64
  %v258 = vpop.permute.xlu0 %257
  %259 = vrot.lane.b32.xlu0 %v28, 64
  %v260 = vpop.permute.xlu0 %259
  %261 = vrot.lane.b32.xlu0 %v29, 64
  %v262 = vpop.permute.xlu0 %261
  %263 = vrot.lane.b32.xlu0 %v30, 64
  %v264 = vpop.permute.xlu0 %263
  %270 = vrot.lane.b32.xlu0 %v36, 64
  %v271 = vpop.permute.xlu0 %270
  %v274 = vsel %vm37, %v249, 0
  %v277 = vsel %vm37, %v250, 0
  %v280 = vsel %vm37, %v251, 0
  %v283 = vsel %vm37, %v252, 0
  %285 = vmatprep.subr.mxu0 0.0
  %286 = vmatpush1.msra.mxu0 %v258
  %287 = vmatprep.subr.mxu0 0.0
  %288 = vmatpush1.msra.mxu0 %v260
  %289 = vmatprep.subr.mxu0 0.0
  %290 = vmatpush1.msra.mxu0 %v262
  %291 = vmatprep.subr.mxu0 0.0
  %292 = vmatpush1.msra.mxu0 %v264
  %293 = vmatprep.subr.mxu0 0.0
  %294 = vmatpush1.msra.mxu0 0.0
  %295 = vmatprep.subr.mxu0 0.0
  %296 = vmatpush1.msra.mxu0 0.0
  %297 = vmatprep.subr.mxu0 0.0
  %298 = vmatpush1.msra.mxu0 0.0
  %299 = vmatprep.subr.mxu0 0.0
  %300 = vmatpush1.msra.mxu0 0.0
  %301 = vmatprep.subr.mxu0 0.0
  %302 = vmatpush1.msra.mxu0 0.0
  %303 = vmatprep.subr.mxu0 0.0
  %304 = vmatpush1.msra.mxu0 0.0
  %305 = vmatprep.subr.mxu0 0.0
  %306 = vmatpush1.msra.mxu0 0.0
  %307 = vmatprep.subr.mxu0 0.0
  %308 = vmatpush1.msra.mxu0 0.0
  %309 = vmatprep.subr.mxu0 0.0
  %310 = vmatpush1.msra.mxu0 0.0
  %311 = vmatprep.subr.mxu0 0.0
  %312 = vmatpush1.msra.mxu0 0.0
  %313 = vmatprep.subr.mxu0 0.0
  %314 = vmatpush1.msra.mxu0 0.0
  %315 = vmatprep.subr.mxu0 0.0
  %316 = vmatpush1.msra.mxu0 0.0
  %317 = vmatprep.subr.mxu0 0.0
  %318 = vmatpush1.msra.mxu0 0.0
  %319 = vmatprep.subr.mxu0 0.0
  %320 = vmatpush1.msra.mxu0 0.0
  %321 = vmatprep.subr.mxu0 0.0
  %322 = vmatpush1.msra.mxu0 0.0
  %323 = vmatprep.subr.mxu0 0.0
  %324 = vmatpush1.msra.mxu0 0.0
  %325 = vmatprep.subr.mxu0 0.0
  %326 = vmatpush1.msra.mxu0 0.0
  %327 = vmatprep.subr.mxu0 0.0
  %328 = vmatpush1.msra.mxu0 0.0
  %329 = vmatprep.subr.mxu0 0.0
  %330 = vmatpush1.msra.mxu0 0.0
  %331 = vmatprep.subr.mxu0 0.0
  %332 = vmatpush1.msra.mxu0 0.0
  %333 = vmatprep.subr.mxu0 0.0
  %334 = vmatpush1.msra.mxu0 0.0
  %335 = vmatprep.subr.mxu0 0.0
  %336 = vmatpush1.msra.mxu0 0.0
  %337 = vmatprep.subr.mxu0 0.0
  %338 = vmatpush1.msra.mxu0 0.0
  %339 = vmatprep.subr.mxu0 0.0
  %340 = vmatpush1.msra.mxu0 0.0
  %341 = vmatprep.subr.mxu0 0.0
  %342 = vmatpush1.msra.mxu0 0.0
  %343 = vmatprep.subr.mxu0 0.0
  %344 = vmatpush1.msra.mxu0 0.0
  %345 = vmatprep.subr.mxu0 0.0
  %346 = vmatpush1.msra.mxu0 0.0
  %347 = vmatprep.subr.mxu0 0.0
  %348 = vmatpush1.msra.mxu0 0.0
  %349 = vmatprep.mubr.f32.mxu0 0.0
  %350 = vmatmul.mubr.f32.gmra.mrb[0].mxu0 %v274
  %v351 = vpop.f32.mrb[0].mxu0
  %v352 = vadd.f32 %v271, %v351
  %v353 = vpop.f32.mrb[0].mxu0
  %354 = vmatprep.mubr.f32.mxu0 0.0
  %355 = vmatmul.mubr.f32.gmra.mrb[0].mxu0 %v277
  %v356 = vpop.f32.mrb[0].mxu0
  %v357 = vadd.f32 %v271, %v356
  %v358 = vpop.f32.mrb[0].mxu0
  %359 = vmatprep.mubr.f32.mxu0 0.0
  %360 = vmatmul.mubr.f32.gmra.mrb[0].mxu0 %v280
  %v361 = vpop.f32.mrb[0].mxu0
  %v362 = vadd.f32 %v271, %v361
  %v363 = vpop.f32.mrb[0].mxu0
  %364 = vmatprep.mubr.f32.mxu0 0.0
  %365 = vmatmul.mubr.f32.gmra.mrb[0].mxu0 %v283
  %v366 = vpop.f32.mrb[0].mxu0
  %v367 = vadd.f32 %v271, %v366
  %v368 = vpop.f32.mrb[0].mxu0
  %369 = vdwg.mxu0
  %v370 = vmul.f32 %v352, 0.1
  %v371 = vmul.f32 %v357, 0.1
  %v372 = vmul.f32 %v362, 0.1
  %v373 = vmul.f32 %v367, 0.1
  %v374 = vmax.f32 %v352, %v370
  %v375 = vmax.f32 %v357, %v371
  %v376 = vmax.f32 %v362, %v372
  %v377 = vmax.f32 %v367, %v373
  %378 = vrot.lane.b32.xlu0 %v27, 32
  %v379 = vpop.permute.xlu0 %378
  %380 = vrot.lane.b32.xlu0 %v28, 32
  %v381 = vpop.permute.xlu0 %380
  %382 = vrot.lane.b32.xlu0 %v29, 32
  %v383 = vpop.permute.xlu0 %382
  %384 = vrot.lane.b32.xlu0 %v30, 32
  %v385 = vpop.permute.xlu0 %384
  %390 = vrot.lane.b32.xlu0 %v36, 32
  %v391 = vpop.permute.xlu0 %390
  %v394 = vsel %vm37, %v374, 0
  %v397 = vsel %vm37, %v375, 0
  %v400 = vsel %vm37, %v376, 0
  %v403 = vsel %vm37, %v377, 0
  %405 = vmatprep.subr.mxu0 0.0
  %406 = vmatpush1.msra.mxu0 %v379
  %407 = vmatprep.subr.mxu0 0.0
  %408 = vmatpush1.msra.mxu0 %v381
  %409 = vmatprep.subr.mxu0 0.0
  %410 = vmatpush1.msra.mxu0 %v383
  %411 = vmatprep.subr.mxu0 0.0
  %412 = vmatpush1.msra.mxu0 %v385
  %413 = vmatprep.subr.mxu0 0.0
  %414 = vmatpush1.msra.mxu0 0.0
  %415 = vmatprep.subr.mxu0 0.0
  %416 = vmatpush1.msra.mxu0 0.0
  %417 = vmatprep.subr.mxu0 0.0
  %418 = vmatpush1.msra.mxu0 0.0
  %419 = vmatprep.subr.mxu0 0.0
  %420 = vmatpush1.msra.mxu0 0.0
  %421 = vmatprep.subr.mxu0 0.0
  %422 = vmatpush1.msra.mxu0 0.0
  %423 = vmatprep.subr.mxu0 0.0
  %424 = vmatpush1.msra.mxu0 0.0
  %425 = vmatprep.subr.mxu0 0.0
  %426 = vmatpush1.msra.mxu0 0.0
  %427 = vmatprep.subr.mxu0 0.0
  %428 = vmatpush1.msra.mxu0 0.0
  %429 = vmatprep.subr.mxu0 0.0
  %430 = vmatpush1.msra.mxu0 0.0
  %431 = vmatprep.subr.mxu0 0.0
  %432 = vmatpush1.msra.mxu0 0.0
  %433 = vmatprep.subr.mxu0 0.0
  %434 = vmatpush1.msra.mxu0 0.0
  %435 = vmatprep.subr.mxu0 0.0
  %436 = vmatpush1.msra.mxu0 0.0
  %437 = vmatprep.subr.mxu0 0.0
  %438 = vmatpush1.msra.mxu0 0.0
  %439 = vmatprep.subr.mxu0 0.0
  %440 = vmatpush1.msra.mxu0 0.0
  %441 = vmatprep.subr.mxu0 0.0
  %442 = vmatpush1.msra.mxu0 0.0
  %443 = vmatprep.subr.mxu0 0.0
  %444 = vmatpush1.msra.mxu0 0.0
  %445 = vmatprep.subr.mxu0 0.0
  %446 = vmatpush1.msra.mxu0 0.0
  %447 = vmatprep.subr.mxu0 0.0
  %448 = vmatpush1.msra.mxu0 0.0
  %449 = vmatprep.subr.mxu0 0.0
  %450 = vmatpush1.msra.mxu0 0.0
  %451 = vmatprep.subr.mxu0 0.0
  %452 = vmatpush1.msra.mxu0 0.0
  %453 = vmatprep.subr.mxu0 0.0
  %454 = vmatpush1.msra.mxu0 0.0
  %455 = vmatprep.subr.mxu0 0.0
  %456 = vmatpush1.msra.mxu0 0.0
  %457 = vmatprep.subr.mxu0 0.0
  %458 = vmatpush1.msra.mxu0 0.0
  %459 = vmatprep.subr.mxu0 0.0
  %460 = vmatpush1.msra.mxu0 0.0
  %461 = vmatprep.subr.mxu0 0.0
  %462 = vmatpush1.msra.mxu0 0.0
  %463 = vmatprep.subr.mxu0 0.0
  %464 = vmatpush1.msra.mxu0 0.0
  %465 = vmatprep.subr.mxu0 0.0
  %466 = vmatpush1.msra.mxu0 0.0
  %467 = vmatprep.subr.mxu0 0.0
  %468 = vmatpush1.msra.mxu0 0.0
  %469 = vmatprep.mubr.f32.mxu0 0.0
  %470 = vmatmul.mubr.f32.gmra.mrb[0].mxu0 %v394
  %v471 = vpop.f32.mrb[0].mxu0
  %v472 = vadd.f32 %v391, %v471
  %v473 = vpop.f32.mrb[0].mxu0
  %474 = vmatprep.mubr.f32.mxu0 0.0
  %475 = vmatmul.mubr.f32.gmra.mrb[0].mxu0 %v397
  %v476 = vpop.f32.mrb[0].mxu0
  %v477 = vadd.f32 %v391, %v476
  %v478 = vpop.f32.mrb[0].mxu0
  %479 = vmatprep.mubr.f32.mxu0 0.0
  %480 = vmatmul.mubr.f32.gmra.mrb[0].mxu0 %v400
  %v481 = vpop.f32.mrb[0].mxu0
  %v482 = vadd.f32 %v391, %v481
  %v483 = vpop.f32.mrb[0].mxu0
  %484 = vmatprep.mubr.f32.mxu0 0.0
  %485 = vmatmul.mubr.f32.gmra.mrb[0].mxu0 %v403
  %v486 = vpop.f32.mrb[0].mxu0
  %v487 = vadd.f32 %v391, %v486
  %v488 = vpop.f32.mrb[0].mxu0
  %489 = vdwg.mxu0
  %v490 = vxor.u32 %v472, 2147483648
  %v491 = vxor.u32 %v477, 2147483648
  %v492 = vxor.u32 %v482, 2147483648
  %v493 = vxor.u32 %v487, 2147483648
  %v494 = vmul.f32 %v490, 1.442695
  %v495 = vpow.pop %v494
  %v496 = vmul.f32 %v491, 1.442695
  %v497 = vpow.pop %v496
  %v498 = vmul.f32 %v492, 1.442695
  %v499 = vpow.pop %v498
  %v500 = vmul.f32 %v493, 1.442695
  %v501 = vpow.pop %v500
  %v502 = vadd.f32 %v495, 1.0
  %v503 = vadd.f32 %v497, 1.0
  %v504 = vadd.f32 %v499, 1.0
  %v505 = vadd.f32 %v501, 1.0
  %v506 = vrcp.pop %v502
  %v507 = vmul.f32 1.0, %v506
  %v508 = vrcp.pop %v503
  %v509 = vmul.f32 1.0, %v508
  %v510 = vrcp.pop %v504
  %v511 = vmul.f32 1.0, %v510
  %v512 = vrcp.pop %v505
  %v513 = vmul.f32 1.0, %v512
  %v514 = vld [vmem:[%s2] sm:$0xff]
  %v515 = vld [vmem:[%s2 + $0x8] sm:$0xff]
  %v516 = vld [vmem:[%s3] sm:$0x7]
  %v517 = vld [vmem:[%s4] sm:$0xf]
  %519 = vset.pattern.permute.xlu0 3
  %520 = vperm.xlu0 %519, %v517
  %v521 = vpop.permute.xlu0 %520
  %vm523 = vcmask 23552
  %v524 = vsel %vm523, %v517, 0
  %vm526 = vcmask 1042432
  %v528 = vsel %vm526, %v516, 0
  %530 = vmatprep.subr.mxu0 0.0
  %531 = vmatpush1.msra.mxu0 %v528
  %532 = vmatprep.subr.mxu0 0.0
  %533 = vmatpush1.msra.mxu0 0.0
  %534 = vmatprep.subr.mxu0 0.0
  %535 = vmatpush1.msra.mxu0 0.0
  %536 = vmatprep.subr.mxu0 0.0
  %537 = vmatpush1.msra.mxu0 0.0
  %538 = vmatprep.subr.mxu0 0.0
  %539 = vmatpush1.msra.mxu0 0.0
  %540 = vmatprep.subr.mxu0 0.0
  %541 = vmatpush1.msra.mxu0 0.0
  %542 = vmatprep.subr.mxu0 0.0
  %543 = vmatpush1.msra.mxu0 0.0
  %544 = vmatprep.subr.mxu0 0.0
  %545 = vmatpush1.msra.mxu0 0.0
  %546 = vmatprep.subr.mxu0 0.0
  %547 = vmatpush1.msra.mxu0 0.0
  %548 = vmatprep.subr.mxu0 0.0
  %549 = vmatpush1.msra.mxu0 0.0
  %550 = vmatprep.subr.mxu0 0.0
  %551 = vmatpush1.msra.mxu0 0.0
  %552 = vmatprep.subr.mxu0 0.0
  %553 = vmatpush1.msra.mxu0 0.0
  %554 = vmatprep.subr.mxu0 0.0
  %555 = vmatpush1.msra.mxu0 0.0
  %556 = vmatprep.subr.mxu0 0.0
  %557 = vmatpush1.msra.mxu0 0.0
  %558 = vmatprep.subr.mxu0 0.0
  %559 = vmatpush1.msra.mxu0 0.0
  %560 = vmatprep.subr.mxu0 0.0
  %561 = vmatpush1.msra.mxu0 0.0
  %562 = vmatprep.subr.mxu0 0.0
  %563 = vmatpush1.msra.mxu0 0.0
  %564 = vmatprep.subr.mxu0 0.0
  %565 = vmatpush1.msra.mxu0 0.0
  %566 = vmatprep.subr.mxu0 0.0
  %567 = vmatpush1.msra.mxu0 0.0
  %568 = vmatprep.subr.mxu0 0.0
  %569 = vmatpush1.msra.mxu0 0.0
  %570 = vmatprep.subr.mxu0 0.0
  %571 = vmatpush1.msra.mxu0 0.0
  %572 = vmatprep.subr.mxu0 0.0
  %573 = vmatpush1.msra.mxu0 0.0
  %574 = vmatprep.subr.mxu0 0.0
  %575 = vmatpush1.msra.mxu0 0.0
  %576 = vmatprep.subr.mxu0 0.0
  %577 = vmatpush1.msra.mxu0 0.0
  %578 = vmatprep.subr.mxu0 0.0
  %579 = vmatpush1.msra.mxu0 0.0
  %580 = vmatprep.subr.mxu0 0.0
  %581 = vmatpush1.msra.mxu0 0.0
  %582 = vmatprep.subr.mxu0 0.0
  %583 = vmatpush1.msra.mxu0 0.0
  %584 = vmatprep.subr.mxu0 0.0
  %585 = vmatpush1.msra.mxu0 0.0
  %586 = vmatprep.subr.mxu0 0.0
  %587 = vmatpush1.msra.mxu0 0.0
  %588 = vmatprep.subr.mxu0 0.0
  %589 = vmatpush1.msra.mxu0 0.0
  %590 = vmatprep.subr.mxu0 0.0
  %591 = vmatpush1.msra.mxu0 0.0
  %592 = vmatprep.subr.mxu0 0.0
  %593 = vmatpush1.msra.mxu0 0.0
  %594 = vmatprep.mubr.f32.mxu0 0.0
  %595 = vmatmul.mubr.f32.gmra.mrb[0].mxu0 %v524
  %v596 = vpop.f32.mrb[0].mxu0
  %v597 = vadd.f32 %v521, %v596
  %v598 = vpop.f32.mrb[0].mxu0
  %599 = vdwg.mxu0
  %v600 = vmul.f32 %v514, %v514
  %v601 = vmul.f32 %v515, %v515
  %v602 = vsel %vm523, %v600, 0.0
  %603 = vadd.xlane.f32.xlu0 %v602
  %v604 = vpop.xlane.xlu0 %603
  %v605 = vsel %vm523, %v601, 0.0
  %606 = vadd.xlane.f32.xlu0 %v605
  %v607 = vpop.xlane.xlu0 %606
  %v608 = vmul.f32 %v597, %v597
  %vm609 = vcmask 124928
  %v610 = vsel %vm609, %v608, 0.0
  %v611 = vrot.slane %v610, 4
  %v612 = vadd.f32 %v610, %v611
  %v613 = vrot.slane %v612, 2
  %v614 = vadd.f32 %v612, %v613
  %v615 = vrot.slane %v614, 1
  %v616 = vadd.f32 %v614, %v615
  %v618 = vsel %vm523, %v514, 0
  %v621 = vsel %vm523, %v515, 0
  %v624 = vsel %vm526, %v597, 0
  %626 = vmatprep.subr.mxu0 0.0
  %627 = vmatpush1.msra.mxu0 %v624
  %628 = vmatprep.subr.mxu0 0.0
  %629 = vmatpush1.msra.mxu0 0.0
  %630 = vmatprep.subr.mxu0 0.0
  %631 = vmatpush1.msra.mxu0 0.0
  %632 = vmatprep.subr.mxu0 0.0
  %633 = vmatpush1.msra.mxu0 0.0
  %634 = vmatprep.subr.mxu0 0.0
  %635 = vmatpush1.msra.mxu0 0.0
  %636 = vmatprep.subr.mxu0 0.0
  %637 = vmatpush1.msra.mxu0 0.0
  %638 = vmatprep.subr.mxu0 0.0
  %639 = vmatpush1.msra.mxu0 0.0
  %640 = vmatprep.subr.mxu0 0.0
  %641 = vmatpush1.msra.mxu0 0.0
  %642 = vmatprep.subr.mxu0 0.0
  %643 = vmatpush1.msra.mxu0 0.0
  %644 = vmatprep.subr.mxu0 0.0
  %645 = vmatpush1.msra.mxu0 0.0
  %646 = vmatprep.subr.mxu0 0.0
  %647 = vmatpush1.msra.mxu0 0.0
  %648 = vmatprep.subr.mxu0 0.0
  %649 = vmatpush1.msra.mxu0 0.0
  %650 = vmatprep.subr.mxu0 0.0
  %651 = vmatpush1.msra.mxu0 0.0
  %652 = vmatprep.subr.mxu0 0.0
  %653 = vmatpush1.msra.mxu0 0.0
  %654 = vmatprep.subr.mxu0 0.0
  %655 = vmatpush1.msra.mxu0 0.0
  %656 = vmatprep.subr.mxu0 0.0
  %657 = vmatpush1.msra.mxu0 0.0
  %658 = vmatprep.subr.mxu0 0.0
  %659 = vmatpush1.msra.mxu0 0.0
  %660 = vmatprep.subr.mxu0 0.0
  %661 = vmatpush1.msra.mxu0 0.0
  %662 = vmatprep.subr.mxu0 0.0
  %663 = vmatpush1.msra.mxu0 0.0
  %664 = vmatprep.subr.mxu0 0.0
  %665 = vmatpush1.msra.mxu0 0.0
  %666 = vmatprep.subr.mxu0 0.0
  %667 = vmatpush1.msra.mxu0 0.0
  %668 = vmatprep.subr.mxu0 0.0
  %669 = vmatpush1.msra.mxu0 0.0
  %670 = vmatprep.subr.mxu0 0.0
  %671 = vmatpush1.msra.mxu0 0.0
  %672 = vmatprep.subr.mxu0 0.0
  %673 = vmatpush1.msra.mxu0 0.0
  %674 = vmatprep.subr.mxu0 0.0
  %675 = vmatpush1.msra.mxu0 0.0
  %676 = vmatprep.subr.mxu0 0.0
  %677 = vmatpush1.msra.mxu0 0.0
  %678 = vmatprep.subr.mxu0 0.0
  %679 = vmatpush1.msra.mxu0 0.0
  %680 = vmatprep.subr.mxu0 0.0
  %681 = vmatpush1.msra.mxu0 0.0
  %682 = vmatprep.subr.mxu0 0.0
  %683 = vmatpush1.msra.mxu0 0.0
  %684 = vmatprep.subr.mxu0 0.0
  %685 = vmatpush1.msra.mxu0 0.0
  %686 = vmatprep.subr.mxu0 0.0
  %687 = vmatpush1.msra.mxu0 0.0
  %688 = vmatprep.subr.mxu0 0.0
  %689 = vmatpush1.msra.mxu0 0.0
  %690 = vmatprep.mubr.f32.mxu0 0.0
  %691 = vmatmul.mubr.f32.gmra.mrb[0].mxu0 %v618
  %v692 = vpop.f32.mrb[0].mxu0
  %v693 = vadd.f32 0.0, %v692
  %v694 = vpop.f32.mrb[0].mxu0
  %695 = vmatprep.mubr.f32.mxu0 0.0
  %696 = vmatmul.mubr.f32.gmra.mrb[0].mxu0 %v621
  %v697 = vpop.f32.mrb[0].mxu0
  %v698 = vadd.f32 0.0, %v697
  %v699 = vpop.f32.mrb[0].mxu0
  %700 = vdwg.mxu0
  %v701 = vadd.f32 %v604, %v616
  %v702 = vadd.f32 %v607, %v616
  %v703 = vmul.f32 %v693, 2.0
  %v704 = vmul.f32 %v698, 2.0
  %v705 = vsub.f32 %v701, %v703
  %v706 = vsub.f32 %v702, %v704
  %v707 = vmax.f32 %v705, 0.0
  %v708 = vmax.f32 %v706, 0.0
  %v709 = vrsqrt.pop %v707
  %v710 = vmul.f32 %v707, %v709
  %vm711 = vcmp.eq.f32.partialorder %v707, inf
  %v712 = vsel %vm711, %v707, %v710
  %vm713 = vcmp.eq.f32.partialorder %v707, 0.0
  %v714 = vand.u32 %v707, 2147483648
  %v715 = vsel %vm713, %v714, %v712
  %v716 = vrsqrt.pop %v708
  %v717 = vmul.f32 %v708, %v716
  %vm718 = vcmp.eq.f32.partialorder %v708, inf
  %v719 = vsel %vm718, %v708, %v717
  %vm720 = vcmp.eq.f32.partialorder %v708, 0.0
  %v721 = vand.u32 %v708, 2147483648
  %v722 = vsel %vm720, %v721, %v719
  %v723 = vmul.f32 %v715, 5.0
  %v724 = vmul.f32 %v722, 5.0
  %v725 = vmin.f32 %v723, 2.0
  %v726 = vmin.f32 %v724, 2.0
  %v727 = vmul.f32 %v725, %v725
  %v728 = vmul.f32 %v726, %v726
  %v729 = vmul.f32 %v727, %v725
  %v730 = vmul.f32 %v728, %v726
  %v731 = vmul.f32 %v729, 0.0625
  %v732 = vmul.f32 %v730, 0.0625
  %v733 = vadd.f32 %v731, 1.0
  %v734 = vadd.f32 %v732, 1.0
  %v735 = vmul.f32 %v725, 0.75
  %v736 = vmul.f32 %v726, 0.75
  %v737 = vsub.f32 %v733, %v735
  %v738 = vsub.f32 %v734, %v736
  %v739 = vmax.f32 %v737, 0.0
  %v740 = vmax.f32 %v738, 0.0
  %v741 = vmul.f32 %v117, %v117
  %v742 = vmul.f32 %v122, %v122
  %745 = vrot.lane.b32.xlu0 %v741, 96
  %v746 = vpop.permute.xlu0 %745
  %747 = vrot.lane.b32.xlu0 %v742, 96
  %v748 = vpop.permute.xlu0 %747
  %v751 = vsel %vm37, %v746, 0.0
  %752 = vadd.xlane.f32.xlu0 %v751
  %v753 = vpop.xlane.xlu0 %752
  %v754 = vsel %vm37, %v748, 0.0
  %755 = vadd.xlane.f32.xlu0 %v754
  %v756 = vpop.xlane.xlu0 %755
  %v757 = vmax.f32 %v753, 1e-24
  %v758 = vmax.f32 %v756, 1e-24
  %v759 = vrsqrt.pop %v757
  %v760 = vrsqrt.pop %v758
  %v761 = vmul.f32 %v117, %v759
  %v762 = vmul.f32 %v122, %v760
  %v763 = vmul.f32 %v127, %v127
  %v764 = vmul.f32 %v132, %v132
  %767 = vrot.lane.b32.xlu0 %v763, 96
  %v768 = vpop.permute.xlu0 %767
  %769 = vrot.lane.b32.xlu0 %v764, 96
  %v770 = vpop.permute.xlu0 %769
  %v773 = vsel %vm37, %v768, 0.0
  %774 = vadd.xlane.f32.xlu0 %v773
  %v775 = vpop.xlane.xlu0 %774
  %v776 = vsel %vm37, %v770, 0.0
  %777 = vadd.xlane.f32.xlu0 %v776
  %v778 = vpop.xlane.xlu0 %777
  %v779 = vmax.f32 %v775, 1e-24
  %v780 = vmax.f32 %v778, 1e-24
  %v781 = vrsqrt.pop %v779
  %v782 = vrsqrt.pop %v780
  %v783 = vmul.f32 %v127, %v781
  %v784 = vmul.f32 %v132, %v782
  %787 = vrot.lane.b32.xlu0 %v761, 96
  %v788 = vpop.permute.xlu0 %787
  %789 = vrot.lane.b32.xlu0 %v762, 96
  %v790 = vpop.permute.xlu0 %789
  %793 = vrot.lane.b32.xlu0 %v783, 96
  %v794 = vpop.permute.xlu0 %793
  %795 = vrot.lane.b32.xlu0 %v784, 96
  %v796 = vpop.permute.xlu0 %795
  %v797 = vsel %vm37, %v788, 0
  %v799 = vsel %vm37, %v790, 0
  %v801 = vsel %vm37, %v794, 0
  %v803 = vsel %vm37, %v796, 0
  %805 = vmatprep.subr.mxu0 0.0
  %806 = vmatpush1.xpose.msra.mxu0 %v801
  %807 = vmatprep.subr.mxu0 0.0
  %808 = vmatpush1.xpose.msra.mxu0 %v803
  %809 = vmatprep.subr.mxu0 0.0
  %810 = vmatpush1.xpose.msra.mxu0 0.0
  %811 = vmatprep.subr.mxu0 0.0
  %812 = vmatpush1.xpose.msra.mxu0 0.0
  %813 = vmatprep.subr.mxu0 0.0
  %814 = vmatpush1.xpose.msra.mxu0 0.0
  %815 = vmatprep.subr.mxu0 0.0
  %816 = vmatpush1.xpose.msra.mxu0 0.0
  %817 = vmatprep.subr.mxu0 0.0
  %818 = vmatpush1.xpose.msra.mxu0 0.0
  %819 = vmatprep.subr.mxu0 0.0
  %820 = vmatpush1.xpose.msra.mxu0 0.0
  %821 = vmatprep.subr.mxu0 0.0
  %822 = vmatpush1.xpose.msra.mxu0 0.0
  %823 = vmatprep.subr.mxu0 0.0
  %824 = vmatpush1.xpose.msra.mxu0 0.0
  %825 = vmatprep.subr.mxu0 0.0
  %826 = vmatpush1.xpose.msra.mxu0 0.0
  %827 = vmatprep.subr.mxu0 0.0
  %828 = vmatpush1.xpose.msra.mxu0 0.0
  %829 = vmatprep.subr.mxu0 0.0
  %830 = vmatpush1.xpose.msra.mxu0 0.0
  %831 = vmatprep.subr.mxu0 0.0
  %832 = vmatpush1.xpose.msra.mxu0 0.0
  %833 = vmatprep.subr.mxu0 0.0
  %834 = vmatpush1.xpose.msra.mxu0 0.0
  %835 = vmatprep.subr.mxu0 0.0
  %836 = vmatpush1.xpose.msra.mxu0 0.0
  %837 = vmatprep.subr.mxu0 0.0
  %838 = vmatpush1.xpose.msra.mxu0 0.0
  %839 = vmatprep.subr.mxu0 0.0
  %840 = vmatpush1.xpose.msra.mxu0 0.0
  %841 = vmatprep.subr.mxu0 0.0
  %842 = vmatpush1.xpose.msra.mxu0 0.0
  %843 = vmatprep.subr.mxu0 0.0
  %844 = vmatpush1.xpose.msra.mxu0 0.0
  %845 = vmatprep.subr.mxu0 0.0
  %846 = vmatpush1.xpose.msra.mxu0 0.0
  %847 = vmatprep.subr.mxu0 0.0
  %848 = vmatpush1.xpose.msra.mxu0 0.0
  %849 = vmatprep.subr.mxu0 0.0
  %850 = vmatpush1.xpose.msra.mxu0 0.0
  %851 = vmatprep.subr.mxu0 0.0
  %852 = vmatpush1.xpose.msra.mxu0 0.0
  %853 = vmatprep.subr.mxu0 0.0
  %854 = vmatpush1.xpose.msra.mxu0 0.0
  %855 = vmatprep.subr.mxu0 0.0
  %856 = vmatpush1.xpose.msra.mxu0 0.0
  %857 = vmatprep.subr.mxu0 0.0
  %858 = vmatpush1.xpose.msra.mxu0 0.0
  %859 = vmatprep.subr.mxu0 0.0
  %860 = vmatpush1.xpose.msra.mxu0 0.0
  %861 = vmatprep.subr.mxu0 0.0
  %862 = vmatpush1.xpose.msra.mxu0 0.0
  %863 = vmatprep.subr.mxu0 0.0
  %864 = vmatpush1.xpose.msra.mxu0 0.0
  %865 = vmatprep.subr.mxu0 0.0
  %866 = vmatpush1.xpose.msra.mxu0 0.0
  %867 = vmatprep.subr.mxu0 0.0
  %868 = vmatpush1.xpose.msra.mxu0 0.0
  %869 = vmatprep.mubr.f32.mxu0 0.0
  %870 = vmatmul.mubr.f32.gmra.mrb[0].mxu0 %v797
  %v871 = vpop.f32.mrb[0].mxu0
  %v872 = vadd.f32 0.0, %v871
  %v873 = vpop.f32.mrb[0].mxu0
  %874 = vmatprep.mubr.f32.mxu0 0.0
  %875 = vmatmul.mubr.f32.gmra.mrb[0].mxu0 %v799
  %v876 = vpop.f32.mrb[0].mxu0
  %v877 = vadd.f32 0.0, %v876
  %v878 = vpop.f32.mrb[0].mxu0
  %879 = vdwg.mxu0
  %v880 = vmul.f32 %v872, 2.0
  %v881 = vmul.f32 %v877, 2.0
  %v882 = vsub.f32 2.0, %v880
  %v883 = vsub.f32 2.0, %v881
  %v884 = vmax.f32 %v882, 0.0
  %v885 = vmax.f32 %v883, 0.0
  %v886 = vsub.f32 0.0, %v884
  %v887 = vsub.f32 0.0, %v885
  %v888 = vmul.f32 %v886, 1.442695
  %v889 = vpow.pop %v888
  %v890 = vmul.f32 %v887, 1.442695
  %v891 = vpow.pop %v890
  %v892 = vlaneseq
  %v893 = vshrl.u32 %v892, 7
  %v894 = vadd.s32 %v893, 8
  %v895 = vlaneseq
  %v896 = vand.u32 %v895, 127
  %vm897 = vcmp.eq.s32.totalorder %v893, %v896
  %vm898 = vcmp.eq.s32.totalorder %v894, %v896
  %v899 = vsel %vm897, 1, 0
  %v900 = vsel %vm898, 1, 0
  %v901 = vcvt.s32.f32 %v899
  %v902 = vcvt.s32.f32 %v900
  %904 = vset.pattern.permute.xlu0 0
  %905 = vperm.xlu0 %904, %v511
  %v906 = vpop.permute.xlu0 %905
  %909 = vset.pattern.permute.xlu0 0
  %910 = vperm.xlu0 %909, %v513
  %v911 = vpop.permute.xlu0 %910
  %v913 = vmul.f32 %v906, %v901
  %v914 = vmul.f32 %v911, %v902
  %vm915 = vcmask 130048
  %v916 = vsel %vm915, %v913, 0.0
  %v917 = vsel %vm915, %v914, 0.0
  %v918 = vadd.f32 %v916, %v917
  %v919 = vrot.slane %v918, 4
  %v920 = vadd.f32 %v918, %v919
  %v921 = vrot.slane %v920, 2
  %v922 = vadd.f32 %v920, %v921
  %v923 = vrot.slane %v922, 1
  %v924 = vadd.f32 %v922, %v923
  %926 = vset.pattern.permute.xlu0 0
  %927 = vperm.xlu0 %926, %v507
  %v928 = vpop.permute.xlu0 %927
  %931 = vset.pattern.permute.xlu0 0
  %932 = vperm.xlu0 %931, %v509
  %v933 = vpop.permute.xlu0 %932
  %v935 = vmul.f32 %v889, %v928
  %v936 = vmul.f32 %v891, %v933
  %v937 = vmul.f32 %v935, %v924
  %v938 = vmul.f32 %v936, %v924
  %v939 = vcvt.s32.f32 %v896
  %v940 = vcvt.s32.f32 %v893
  %v941 = vcvt.s32.f32 %v894
  %v942 = vsel %vm915, %v937, -inf
  %943 = vmax.xlane.f32.xlu0 %v942
  %v944 = vpop.xlane.xlu0 %943
  %v945 = vsel %vm915, %v938, -inf
  %946 = vmax.xlane.f32.xlu0 %v945
  %v947 = vpop.xlane.xlu0 %946
  %v948 = vmax.f32 %v942, %v945
  %v949 = vrot.slane %v948, 4
  %v950 = vmax.f32 %v948, %v949
  %v951 = vrot.slane %v950, 2
  %v952 = vmax.f32 %v950, %v951
  %v953 = vrot.slane %v952, 1
  %v954 = vmax.f32 %v952, %v953
  %vm955 = vcmp.ge.f32.partialorder %v937, %v944
  %vm956 = vcmp.ge.f32.partialorder %v938, %v947
  %v957 = vsel %vm955, %v939, 16.0
  %v958 = vsel %vm956, %v939, 16.0
  %v959 = vsel %vm915, %v957, inf
  %960 = vmin.xlane.f32.xlu0 %v959
  %v961 = vpop.xlane.xlu0 %960
  %v962 = vsel %vm915, %v958, inf
  %963 = vmin.xlane.f32.xlu0 %v962
  %v964 = vpop.xlane.xlu0 %963
  %vm965 = vcmp.ge.f32.partialorder %v937, %v954
  %vm966 = vcmp.ge.f32.partialorder %v938, %v954
  %v967 = vsel %vm965, %v940, 16.0
  %v968 = vsel %vm966, %v941, 16.0
  %v969 = vsel %vm915, %v967, inf
  %v970 = vsel %vm915, %v968, inf
  %v971 = vmin.f32 %v969, %v970
  %v972 = vrot.slane %v971, 4
  %v973 = vmin.f32 %v971, %v972
  %v974 = vrot.slane %v973, 2
  %v975 = vmin.f32 %v973, %v974
  %v976 = vrot.slane %v975, 1
  %v977 = vmin.f32 %v975, %v976
  %vm978 = vcmp.eq.f32.partialorder %v939, %v961
  %vm979 = vcmp.eq.f32.partialorder %v939, %v964
  %v980 = vsel %vm978, 1, 0
  %v981 = vsel %vm979, 1, 0
  %v982 = vcvt.s32.f32 %v980
  %v983 = vcvt.s32.f32 %v981
  %vm984 = vcmp.eq.f32.partialorder %v940, %v977
  %vm985 = vcmp.eq.f32.partialorder %v941, %v977
  %v986 = vsel %vm984, 1, 0
  %v987 = vsel %vm985, 1, 0
  %v988 = vcvt.s32.f32 %v986
  %v989 = vcvt.s32.f32 %v987
  %v990 = vmul.f32 %v982, %v988
  %v991 = vmul.f32 %v983, %v989
  %v993 = vsel %vm915, %v982, 0
  %v996 = vsel %vm915, %v983, 0
  %v998 = vsel %vm915, %v516, 0
  %1000 = vmatprep.subr.mxu0 0.0
  %1001 = vmatpush1.xpose.msra.mxu0 %v998
  %1002 = vmatprep.subr.mxu0 0.0
  %1003 = vmatpush1.xpose.msra.mxu0 0.0
  %1004 = vmatprep.subr.mxu0 0.0
  %1005 = vmatpush1.xpose.msra.mxu0 0.0
  %1006 = vmatprep.subr.mxu0 0.0
  %1007 = vmatpush1.xpose.msra.mxu0 0.0
  %1008 = vmatprep.subr.mxu0 0.0
  %1009 = vmatpush1.xpose.msra.mxu0 0.0
  %1010 = vmatprep.subr.mxu0 0.0
  %1011 = vmatpush1.xpose.msra.mxu0 0.0
  %1012 = vmatprep.subr.mxu0 0.0
  %1013 = vmatpush1.xpose.msra.mxu0 0.0
  %1014 = vmatprep.subr.mxu0 0.0
  %1015 = vmatpush1.xpose.msra.mxu0 0.0
  %1016 = vmatprep.subr.mxu0 0.0
  %1017 = vmatpush1.xpose.msra.mxu0 0.0
  %1018 = vmatprep.subr.mxu0 0.0
  %1019 = vmatpush1.xpose.msra.mxu0 0.0
  %1020 = vmatprep.subr.mxu0 0.0
  %1021 = vmatpush1.xpose.msra.mxu0 0.0
  %1022 = vmatprep.subr.mxu0 0.0
  %1023 = vmatpush1.xpose.msra.mxu0 0.0
  %1024 = vmatprep.subr.mxu0 0.0
  %1025 = vmatpush1.xpose.msra.mxu0 0.0
  %1026 = vmatprep.subr.mxu0 0.0
  %1027 = vmatpush1.xpose.msra.mxu0 0.0
  %1028 = vmatprep.subr.mxu0 0.0
  %1029 = vmatpush1.xpose.msra.mxu0 0.0
  %1030 = vmatprep.subr.mxu0 0.0
  %1031 = vmatpush1.xpose.msra.mxu0 0.0
  %1032 = vmatprep.subr.mxu0 0.0
  %1033 = vmatpush1.xpose.msra.mxu0 0.0
  %1034 = vmatprep.subr.mxu0 0.0
  %1035 = vmatpush1.xpose.msra.mxu0 0.0
  %1036 = vmatprep.subr.mxu0 0.0
  %1037 = vmatpush1.xpose.msra.mxu0 0.0
  %1038 = vmatprep.subr.mxu0 0.0
  %1039 = vmatpush1.xpose.msra.mxu0 0.0
  %1040 = vmatprep.subr.mxu0 0.0
  %1041 = vmatpush1.xpose.msra.mxu0 0.0
  %1042 = vmatprep.subr.mxu0 0.0
  %1043 = vmatpush1.xpose.msra.mxu0 0.0
  %1044 = vmatprep.subr.mxu0 0.0
  %1045 = vmatpush1.xpose.msra.mxu0 0.0
  %1046 = vmatprep.subr.mxu0 0.0
  %1047 = vmatpush1.xpose.msra.mxu0 0.0
  %1048 = vmatprep.subr.mxu0 0.0
  %1049 = vmatpush1.xpose.msra.mxu0 0.0
  %1050 = vmatprep.subr.mxu0 0.0
  %1051 = vmatpush1.xpose.msra.mxu0 0.0
  %1052 = vmatprep.subr.mxu0 0.0
  %1053 = vmatpush1.xpose.msra.mxu0 0.0
  %1054 = vmatprep.subr.mxu0 0.0
  %1055 = vmatpush1.xpose.msra.mxu0 0.0
  %1056 = vmatprep.subr.mxu0 0.0
  %1057 = vmatpush1.xpose.msra.mxu0 0.0
  %1058 = vmatprep.subr.mxu0 0.0
  %1059 = vmatpush1.xpose.msra.mxu0 0.0
  %1060 = vmatprep.subr.mxu0 0.0
  %1061 = vmatpush1.xpose.msra.mxu0 0.0
  %1062 = vmatprep.subr.mxu0 0.0
  %1063 = vmatpush1.xpose.msra.mxu0 0.0
  %1064 = vmatprep.mubr.f32.mxu0 0.0
  %1065 = vmatmul.mubr.f32.gmra.mrb[0].mxu0 %v993
  %v1066 = vpop.f32.mrb[0].mxu0
  %v1067 = vadd.f32 0.0, %v1066
  %v1068 = vpop.f32.mrb[0].mxu0
  %1069 = vmatprep.mubr.f32.mxu0 0.0
  %1070 = vmatmul.mubr.f32.gmra.mrb[0].mxu0 %v996
  %v1071 = vpop.f32.mrb[0].mxu0
  %v1072 = vadd.f32 0.0, %v1071
  %v1073 = vpop.f32.mrb[0].mxu0
  %1074 = vdwg.mxu0
  %1075 = vmatprep.subr.mxu0 0.0
  %1076 = vmatpush1.xpose.msra.mxu0 %v618
  %1077 = vmatprep.subr.mxu0 0.0
  %1078 = vmatpush1.xpose.msra.mxu0 %v621
  %1079 = vmatprep.subr.mxu0 0.0
  %1080 = vmatpush1.xpose.msra.mxu0 0.0
  %1081 = vmatprep.subr.mxu0 0.0
  %1082 = vmatpush1.xpose.msra.mxu0 0.0
  %1083 = vmatprep.subr.mxu0 0.0
  %1084 = vmatpush1.xpose.msra.mxu0 0.0
  %1085 = vmatprep.subr.mxu0 0.0
  %1086 = vmatpush1.xpose.msra.mxu0 0.0
  %1087 = vmatprep.subr.mxu0 0.0
  %1088 = vmatpush1.xpose.msra.mxu0 0.0
  %1089 = vmatprep.subr.mxu0 0.0
  %1090 = vmatpush1.xpose.msra.mxu0 0.0
  %1091 = vmatprep.subr.mxu0 0.0
  %1092 = vmatpush1.xpose.msra.mxu0 0.0
  %1093 = vmatprep.subr.mxu0 0.0
  %1094 = vmatpush1.xpose.msra.mxu0 0.0
  %1095 = vmatprep.subr.mxu0 0.0
  %1096 = vmatpush1.xpose.msra.mxu0 0.0
  %1097 = vmatprep.subr.mxu0 0.0
  %1098 = vmatpush1.xpose.msra.mxu0 0.0
  %1099 = vmatprep.subr.mxu0 0.0
  %1100 = vmatpush1.xpose.msra.mxu0 0.0
  %1101 = vmatprep.subr.mxu0 0.0
  %1102 = vmatpush1.xpose.msra.mxu0 0.0
  %1103 = vmatprep.subr.mxu0 0.0
  %1104 = vmatpush1.xpose.msra.mxu0 0.0
  %1105 = vmatprep.subr.mxu0 0.0
  %1106 = vmatpush1.xpose.msra.mxu0 0.0
  %1107 = vmatprep.subr.mxu0 0.0
  %1108 = vmatpush1.xpose.msra.mxu0 0.0
  %1109 = vmatprep.subr.mxu0 0.0
  %1110 = vmatpush1.xpose.msra.mxu0 0.0
  %1111 = vmatprep.subr.mxu0 0.0
  %1112 = vmatpush1.xpose.msra.mxu0 0.0
  %1113 = vmatprep.subr.mxu0 0.0
  %1114 = vmatpush1.xpose.msra.mxu0 0.0
  %1115 = vmatprep.subr.mxu0 0.0
  %1116 = vmatpush1.xpose.msra.mxu0 0.0
  %1117 = vmatprep.subr.mxu0 0.0
  %1118 = vmatpush1.xpose.msra.mxu0 0.0
  %1119 = vmatprep.subr.mxu0 0.0
  %1120 = vmatpush1.xpose.msra.mxu0 0.0
  %1121 = vmatprep.subr.mxu0 0.0
  %1122 = vmatpush1.xpose.msra.mxu0 0.0
  %1123 = vmatprep.subr.mxu0 0.0
  %1124 = vmatpush1.xpose.msra.mxu0 0.0
  %1125 = vmatprep.subr.mxu0 0.0
  %1126 = vmatpush1.xpose.msra.mxu0 0.0
  %1127 = vmatprep.subr.mxu0 0.0
  %1128 = vmatpush1.xpose.msra.mxu0 0.0
  %1129 = vmatprep.subr.mxu0 0.0
  %1130 = vmatpush1.xpose.msra.mxu0 0.0
  %1131 = vmatprep.subr.mxu0 0.0
  %1132 = vmatpush1.xpose.msra.mxu0 0.0
  %1133 = vmatprep.subr.mxu0 0.0
  %1134 = vmatpush1.xpose.msra.mxu0 0.0
  %1135 = vmatprep.subr.mxu0 0.0
  %1136 = vmatpush1.xpose.msra.mxu0 0.0
  %1137 = vmatprep.subr.mxu0 0.0
  %1138 = vmatpush1.xpose.msra.mxu0 0.0
  %1139 = vmatprep.mubr.f32.mxu0 0.0
  %1140 = vmatmul.mubr.f32.gmra.mrb[0].mxu0 %v618
  %v1141 = vpop.f32.mrb[0].mxu0
  %v1142 = vadd.f32 0.0, %v1141
  %v1143 = vpop.f32.mrb[0].mxu0
  %1144 = vmatprep.mubr.f32.mxu0 0.0
  %1145 = vmatmul.mubr.f32.gmra.mrb[0].mxu0 %v621
  %v1146 = vpop.f32.mrb[0].mxu0
  %v1147 = vadd.f32 0.0, %v1146
  %v1148 = vpop.f32.mrb[0].mxu0
  %1149 = vdwg.mxu0
  %v1150 = vmul.f32 %v1142, %v901
  %v1151 = vmul.f32 %v1147, %v902
  %v1152 = vsel %vm915, %v1150, 0.0
  %v1153 = vsel %vm915, %v1151, 0.0
  %v1154 = vadd.f32 %v1152, %v1153
  %v1155 = vrot.slane %v1154, 4
  %v1156 = vadd.f32 %v1154, %v1155
  %v1157 = vrot.slane %v1156, 2
  %v1158 = vadd.f32 %v1156, %v1157
  %v1159 = vrot.slane %v1158, 1
  %v1160 = vadd.f32 %v1158, %v1159
  %v1161 = vadd.f32 %v604, %v1160
  %v1162 = vadd.f32 %v607, %v1160
  %v1163 = vmul.f32 %v1142, 2.0
  %v1164 = vmul.f32 %v1147, 2.0
  %v1165 = vsub.f32 %v1161, %v1163
  %v1166 = vsub.f32 %v1162, %v1164
  %v1167 = vmax.f32 %v1165, 0.0
  %v1168 = vmax.f32 %v1166, 0.0
  %v1169 = vrsqrt.pop %v1167
  %v1170 = vmul.f32 %v1167, %v1169
  %vm1171 = vcmp.eq.f32.partialorder %v1167, inf
  %v1172 = vsel %vm1171, %v1167, %v1170
  %vm1173 = vcmp.eq.f32.partialorder %v1167, 0.0
  %v1174 = vand.u32 %v1167, 2147483648
  %v1175 = vsel %vm1173, %v1174, %v1172
  %v1176 = vrsqrt.pop %v1168
  %v1177 = vmul.f32 %v1168, %v1176
  %vm1178 = vcmp.eq.f32.partialorder %v1168, inf
  %v1179 = vsel %vm1178, %v1168, %v1177
  %vm1180 = vcmp.eq.f32.partialorder %v1168, 0.0
  %v1181 = vand.u32 %v1168, 2147483648
  %v1182 = vsel %vm1180, %v1181, %v1179
  %v1184 = vsel %vm523, %v1067, 0
  %v1187 = vsel %vm523, %v1072, 0
  %1189 = vmatprep.subr.mxu0 0.0
  %1190 = vmatpush1.xpose.msra.mxu0 %v1184
  %1191 = vmatprep.subr.mxu0 0.0
  %1192 = vmatpush1.xpose.msra.mxu0 %v1187
  %1193 = vmatprep.subr.mxu0 0.0
  %1194 = vmatpush1.xpose.msra.mxu0 0.0
  %1195 = vmatprep.subr.mxu0 0.0
  %1196 = vmatpush1.xpose.msra.mxu0 0.0
  %1197 = vmatprep.subr.mxu0 0.0
  %1198 = vmatpush1.xpose.msra.mxu0 0.0
  %1199 = vmatprep.subr.mxu0 0.0
  %1200 = vmatpush1.xpose.msra.mxu0 0.0
  %1201 = vmatprep.subr.mxu0 0.0
  %1202 = vmatpush1.xpose.msra.mxu0 0.0
  %1203 = vmatprep.subr.mxu0 0.0
  %1204 = vmatpush1.xpose.msra.mxu0 0.0
  %1205 = vmatprep.subr.mxu0 0.0
  %1206 = vmatpush1.xpose.msra.mxu0 0.0
  %1207 = vmatprep.subr.mxu0 0.0
  %1208 = vmatpush1.xpose.msra.mxu0 0.0
  %1209 = vmatprep.subr.mxu0 0.0
  %1210 = vmatpush1.xpose.msra.mxu0 0.0
  %1211 = vmatprep.subr.mxu0 0.0
  %1212 = vmatpush1.xpose.msra.mxu0 0.0
  %1213 = vmatprep.subr.mxu0 0.0
  %1214 = vmatpush1.xpose.msra.mxu0 0.0
  %1215 = vmatprep.subr.mxu0 0.0
  %1216 = vmatpush1.xpose.msra.mxu0 0.0
  %1217 = vmatprep.subr.mxu0 0.0
  %1218 = vmatpush1.xpose.msra.mxu0 0.0
  %1219 = vmatprep.subr.mxu0 0.0
  %1220 = vmatpush1.xpose.msra.mxu0 0.0
  %1221 = vmatprep.subr.mxu0 0.0
  %1222 = vmatpush1.xpose.msra.mxu0 0.0
  %1223 = vmatprep.subr.mxu0 0.0
  %1224 = vmatpush1.xpose.msra.mxu0 0.0
  %1225 = vmatprep.subr.mxu0 0.0
  %1226 = vmatpush1.xpose.msra.mxu0 0.0
  %1227 = vmatprep.subr.mxu0 0.0
  %1228 = vmatpush1.xpose.msra.mxu0 0.0
  %1229 = vmatprep.subr.mxu0 0.0
  %1230 = vmatpush1.xpose.msra.mxu0 0.0
  %1231 = vmatprep.subr.mxu0 0.0
  %1232 = vmatpush1.xpose.msra.mxu0 0.0
  %1233 = vmatprep.subr.mxu0 0.0
  %1234 = vmatpush1.xpose.msra.mxu0 0.0
  %1235 = vmatprep.subr.mxu0 0.0
  %1236 = vmatpush1.xpose.msra.mxu0 0.0
  %1237 = vmatprep.subr.mxu0 0.0
  %1238 = vmatpush1.xpose.msra.mxu0 0.0
  %1239 = vmatprep.subr.mxu0 0.0
  %1240 = vmatpush1.xpose.msra.mxu0 0.0
  %1241 = vmatprep.subr.mxu0 0.0
  %1242 = vmatpush1.xpose.msra.mxu0 0.0
  %1243 = vmatprep.subr.mxu0 0.0
  %1244 = vmatpush1.xpose.msra.mxu0 0.0
  %1245 = vmatprep.subr.mxu0 0.0
  %1246 = vmatpush1.xpose.msra.mxu0 0.0
  %1247 = vmatprep.subr.mxu0 0.0
  %1248 = vmatpush1.xpose.msra.mxu0 0.0
  %1249 = vmatprep.subr.mxu0 0.0
  %1250 = vmatpush1.xpose.msra.mxu0 0.0
  %1251 = vmatprep.subr.mxu0 0.0
  %1252 = vmatpush1.xpose.msra.mxu0 0.0
  %1253 = vmatprep.mubr.f32.mxu0 0.0
  %1254 = vmatmul.mubr.f32.gmra.mrb[0].mxu0 %v1184
  %v1255 = vpop.f32.mrb[0].mxu0
  %v1256 = vadd.f32 0.0, %v1255
  %v1257 = vpop.f32.mrb[0].mxu0
  %1258 = vmatprep.mubr.f32.mxu0 0.0
  %1259 = vmatmul.mubr.f32.gmra.mrb[0].mxu0 %v1187
  %v1260 = vpop.f32.mrb[0].mxu0
  %v1261 = vadd.f32 0.0, %v1260
  %v1262 = vpop.f32.mrb[0].mxu0
  %1263 = vdwg.mxu0
  %v1264 = vmul.f32 %v1067, %v1067
  %v1265 = vmul.f32 %v1072, %v1072
  %v1266 = vsel %vm523, %v1264, 0.0
  %1267 = vadd.xlane.f32.xlu0 %v1266
  %v1268 = vpop.xlane.xlu0 %1267
  %v1269 = vsel %vm523, %v1265, 0.0
  %1270 = vadd.xlane.f32.xlu0 %v1269
  %v1271 = vpop.xlane.xlu0 %1270
  %v1272 = vmul.f32 %v1256, %v901
  %v1273 = vmul.f32 %v1261, %v902
  %v1274 = vsel %vm915, %v1272, 0.0
  %v1275 = vsel %vm915, %v1273, 0.0
  %v1276 = vadd.f32 %v1274, %v1275
  %v1277 = vrot.slane %v1276, 4
  %v1278 = vadd.f32 %v1276, %v1277
  %v1279 = vrot.slane %v1278, 2
  %v1280 = vadd.f32 %v1278, %v1279
  %v1281 = vrot.slane %v1280, 1
  %v1282 = vadd.f32 %v1280, %v1281
  %v1283 = vadd.f32 %v1268, %v1282
  %v1284 = vadd.f32 %v1271, %v1282
  %v1285 = vmul.f32 %v1256, 2.0
  %v1286 = vmul.f32 %v1261, 2.0
  %v1287 = vsub.f32 %v1283, %v1285
  %v1288 = vsub.f32 %v1284, %v1286
  %v1289 = vmax.f32 %v1287, 0.0
  %v1290 = vmax.f32 %v1288, 0.0
  %v1291 = vrsqrt.pop %v1289
  %v1292 = vmul.f32 %v1289, %v1291
  %vm1293 = vcmp.eq.f32.partialorder %v1289, inf
  %v1294 = vsel %vm1293, %v1289, %v1292
  %vm1295 = vcmp.eq.f32.partialorder %v1289, 0.0
  %v1296 = vand.u32 %v1289, 2147483648
  %v1297 = vsel %vm1295, %v1296, %v1294
  %v1298 = vrsqrt.pop %v1290
  %v1299 = vmul.f32 %v1290, %v1298
  %vm1300 = vcmp.eq.f32.partialorder %v1290, inf
  %v1301 = vsel %vm1300, %v1290, %v1299
  %vm1302 = vcmp.eq.f32.partialorder %v1290, 0.0
  %v1303 = vand.u32 %v1290, 2147483648
  %v1304 = vsel %vm1302, %v1303, %v1301
  %v1305 = vsub.f32 %v1175, %v1297
  %v1306 = vsub.f32 %v1182, %v1304
  %v1307 = vmul.f32 %v1305, 10.0
  %v1308 = vmul.f32 %v1306, 10.0
  %v1309 = vmul.f32 %v1307, %v1307
  %v1310 = vmul.f32 %v1308, %v1308
  %v1311 = vsub.f32 1.0, %v1309
  %v1312 = vsub.f32 1.0, %v1310
  %v1313 = vmax.f32 %v1311, 0.0
  %v1314 = vmax.f32 %v1312, 0.0
  %v1316 = vsel %vm915, %v1313, 0
  %v1319 = vsel %vm915, %v1314, 0
  %1321 = vmatprep.subr.mxu0 0.0
  %1322 = vmatpush1.msra.mxu0 %v1313
  %1323 = vmatprep.subr.mxu0 0.0
  %1324 = vmatpush1.msra.mxu0 %v1314
  %1325 = vmatprep.subr.mxu0 0.0
  %1326 = vmatpush1.msra.mxu0 0.0
  %1327 = vmatprep.subr.mxu0 0.0
  %1328 = vmatpush1.msra.mxu0 0.0
  %1329 = vmatprep.subr.mxu0 0.0
  %1330 = vmatpush1.msra.mxu0 0.0
  %1331 = vmatprep.subr.mxu0 0.0
  %1332 = vmatpush1.msra.mxu0 0.0
  %1333 = vmatprep.subr.mxu0 0.0
  %1334 = vmatpush1.msra.mxu0 0.0
  %1335 = vmatprep.subr.mxu0 0.0
  %1336 = vmatpush1.msra.mxu0 0.0
  %1337 = vmatprep.subr.mxu0 0.0
  %1338 = vmatpush1.msra.mxu0 0.0
  %1339 = vmatprep.subr.mxu0 0.0
  %1340 = vmatpush1.msra.mxu0 0.0
  %1341 = vmatprep.subr.mxu0 0.0
  %1342 = vmatpush1.msra.mxu0 0.0
  %1343 = vmatprep.subr.mxu0 0.0
  %1344 = vmatpush1.msra.mxu0 0.0
  %1345 = vmatprep.subr.mxu0 0.0
  %1346 = vmatpush1.msra.mxu0 0.0
  %1347 = vmatprep.subr.mxu0 0.0
  %1348 = vmatpush1.msra.mxu0 0.0
  %1349 = vmatprep.subr.mxu0 0.0
  %1350 = vmatpush1.msra.mxu0 0.0
  %1351 = vmatprep.subr.mxu0 0.0
  %1352 = vmatpush1.msra.mxu0 0.0
  %1353 = vmatprep.subr.mxu0 0.0
  %1354 = vmatpush1.msra.mxu0 0.0
  %1355 = vmatprep.subr.mxu0 0.0
  %1356 = vmatpush1.msra.mxu0 0.0
  %1357 = vmatprep.subr.mxu0 0.0
  %1358 = vmatpush1.msra.mxu0 0.0
  %1359 = vmatprep.subr.mxu0 0.0
  %1360 = vmatpush1.msra.mxu0 0.0
  %1361 = vmatprep.subr.mxu0 0.0
  %1362 = vmatpush1.msra.mxu0 0.0
  %1363 = vmatprep.subr.mxu0 0.0
  %1364 = vmatpush1.msra.mxu0 0.0
  %1365 = vmatprep.subr.mxu0 0.0
  %1366 = vmatpush1.msra.mxu0 0.0
  %1367 = vmatprep.subr.mxu0 0.0
  %1368 = vmatpush1.msra.mxu0 0.0
  %1369 = vmatprep.subr.mxu0 0.0
  %1370 = vmatpush1.msra.mxu0 0.0
  %1371 = vmatprep.subr.mxu0 0.0
  %1372 = vmatpush1.msra.mxu0 0.0
  %1373 = vmatprep.subr.mxu0 0.0
  %1374 = vmatpush1.msra.mxu0 0.0
  %1375 = vmatprep.subr.mxu0 0.0
  %1376 = vmatpush1.msra.mxu0 0.0
  %1377 = vmatprep.subr.mxu0 0.0
  %1378 = vmatpush1.msra.mxu0 0.0
  %1379 = vmatprep.subr.mxu0 0.0
  %1380 = vmatpush1.msra.mxu0 0.0
  %1381 = vmatprep.subr.mxu0 0.0
  %1382 = vmatpush1.msra.mxu0 0.0
  %1383 = vmatprep.subr.mxu0 0.0
  %1384 = vmatpush1.msra.mxu0 0.0
  %1385 = vmatprep.mubr.f32.mxu0 0.0
  %1386 = vmatmul.mubr.f32.gmra.mrb[0].mxu0 %v1316
  %v1387 = vpop.f32.mrb[0].mxu0
  %v1388 = vadd.f32 0.0, %v1387
  %v1389 = vpop.f32.mrb[0].mxu0
  %1390 = vmatprep.mubr.f32.mxu0 0.0
  %1391 = vmatmul.mubr.f32.gmra.mrb[0].mxu0 %v1319
  %v1392 = vpop.f32.mrb[0].mxu0
  %v1393 = vadd.f32 0.0, %v1392
  %v1394 = vpop.f32.mrb[0].mxu0
  %1395 = vdwg.mxu0
  %v1397 = vsel %vm915, %v1388, 0
  %v1400 = vsel %vm915, %v1393, 0
  %1402 = vmatprep.subr.mxu0 0.0
  %1403 = vmatpush1.msra.mxu0 %v1388
  %1404 = vmatprep.subr.mxu0 0.0
  %1405 = vmatpush1.msra.mxu0 %v1393
  %1406 = vmatprep.subr.mxu0 0.0
  %1407 = vmatpush1.msra.mxu0 0.0
  %1408 = vmatprep.subr.mxu0 0.0
  %1409 = vmatpush1.msra.mxu0 0.0
  %1410 = vmatprep.subr.mxu0 0.0
  %1411 = vmatpush1.msra.mxu0 0.0
  %1412 = vmatprep.subr.mxu0 0.0
  %1413 = vmatpush1.msra.mxu0 0.0
  %1414 = vmatprep.subr.mxu0 0.0
  %1415 = vmatpush1.msra.mxu0 0.0
  %1416 = vmatprep.subr.mxu0 0.0
  %1417 = vmatpush1.msra.mxu0 0.0
  %1418 = vmatprep.subr.mxu0 0.0
  %1419 = vmatpush1.msra.mxu0 0.0
  %1420 = vmatprep.subr.mxu0 0.0
  %1421 = vmatpush1.msra.mxu0 0.0
  %1422 = vmatprep.subr.mxu0 0.0
  %1423 = vmatpush1.msra.mxu0 0.0
  %1424 = vmatprep.subr.mxu0 0.0
  %1425 = vmatpush1.msra.mxu0 0.0
  %1426 = vmatprep.subr.mxu0 0.0
  %1427 = vmatpush1.msra.mxu0 0.0
  %1428 = vmatprep.subr.mxu0 0.0
  %1429 = vmatpush1.msra.mxu0 0.0
  %1430 = vmatprep.subr.mxu0 0.0
  %1431 = vmatpush1.msra.mxu0 0.0
  %1432 = vmatprep.subr.mxu0 0.0
  %1433 = vmatpush1.msra.mxu0 0.0
  %1434 = vmatprep.subr.mxu0 0.0
  %1435 = vmatpush1.msra.mxu0 0.0
  %1436 = vmatprep.subr.mxu0 0.0
  %1437 = vmatpush1.msra.mxu0 0.0
  %1438 = vmatprep.subr.mxu0 0.0
  %1439 = vmatpush1.msra.mxu0 0.0
  %1440 = vmatprep.subr.mxu0 0.0
  %1441 = vmatpush1.msra.mxu0 0.0
  %1442 = vmatprep.subr.mxu0 0.0
  %1443 = vmatpush1.msra.mxu0 0.0
  %1444 = vmatprep.subr.mxu0 0.0
  %1445 = vmatpush1.msra.mxu0 0.0
  %1446 = vmatprep.subr.mxu0 0.0
  %1447 = vmatpush1.msra.mxu0 0.0
  %1448 = vmatprep.subr.mxu0 0.0
  %1449 = vmatpush1.msra.mxu0 0.0
  %1450 = vmatprep.subr.mxu0 0.0
  %1451 = vmatpush1.msra.mxu0 0.0
  %1452 = vmatprep.subr.mxu0 0.0
  %1453 = vmatpush1.msra.mxu0 0.0
  %1454 = vmatprep.subr.mxu0 0.0
  %1455 = vmatpush1.msra.mxu0 0.0
  %1456 = vmatprep.subr.mxu0 0.0
  %1457 = vmatpush1.msra.mxu0 0.0
  %1458 = vmatprep.subr.mxu0 0.0
  %1459 = vmatpush1.msra.mxu0 0.0
  %1460 = vmatprep.subr.mxu0 0.0
  %1461 = vmatpush1.msra.mxu0 0.0
  %1462 = vmatprep.subr.mxu0 0.0
  %1463 = vmatpush1.msra.mxu0 0.0
  %1464 = vmatprep.subr.mxu0 0.0
  %1465 = vmatpush1.msra.mxu0 0.0
  %1466 = vmatprep.mubr.f32.mxu0 0.0
  %1467 = vmatmul.mubr.f32.gmra.mrb[0].mxu0 %v1397
  %v1468 = vpop.f32.mrb[0].mxu0
  %v1469 = vadd.f32 0.0, %v1468
  %v1470 = vpop.f32.mrb[0].mxu0
  %1471 = vmatprep.mubr.f32.mxu0 0.0
  %1472 = vmatmul.mubr.f32.gmra.mrb[0].mxu0 %v1400
  %v1473 = vpop.f32.mrb[0].mxu0
  %v1474 = vadd.f32 0.0, %v1473
  %v1475 = vpop.f32.mrb[0].mxu0
  %1476 = vdwg.mxu0
  %v1478 = vsel %vm915, %v1469, 0
  %v1481 = vsel %vm915, %v1474, 0
  %1483 = vmatprep.subr.mxu0 0.0
  %1484 = vmatpush1.msra.mxu0 %v1469
  %1485 = vmatprep.subr.mxu0 0.0
  %1486 = vmatpush1.msra.mxu0 %v1474
  %1487 = vmatprep.subr.mxu0 0.0
  %1488 = vmatpush1.msra.mxu0 0.0
  %1489 = vmatprep.subr.mxu0 0.0
  %1490 = vmatpush1.msra.mxu0 0.0
  %1491 = vmatprep.subr.mxu0 0.0
  %1492 = vmatpush1.msra.mxu0 0.0
  %1493 = vmatprep.subr.mxu0 0.0
  %1494 = vmatpush1.msra.mxu0 0.0
  %1495 = vmatprep.subr.mxu0 0.0
  %1496 = vmatpush1.msra.mxu0 0.0
  %1497 = vmatprep.subr.mxu0 0.0
  %1498 = vmatpush1.msra.mxu0 0.0
  %1499 = vmatprep.subr.mxu0 0.0
  %1500 = vmatpush1.msra.mxu0 0.0
  %1501 = vmatprep.subr.mxu0 0.0
  %1502 = vmatpush1.msra.mxu0 0.0
  %1503 = vmatprep.subr.mxu0 0.0
  %1504 = vmatpush1.msra.mxu0 0.0
  %1505 = vmatprep.subr.mxu0 0.0
  %1506 = vmatpush1.msra.mxu0 0.0
  %1507 = vmatprep.subr.mxu0 0.0
  %1508 = vmatpush1.msra.mxu0 0.0
  %1509 = vmatprep.subr.mxu0 0.0
  %1510 = vmatpush1.msra.mxu0 0.0
  %1511 = vmatprep.subr.mxu0 0.0
  %1512 = vmatpush1.msra.mxu0 0.0
  %1513 = vmatprep.subr.mxu0 0.0
  %1514 = vmatpush1.msra.mxu0 0.0
  %1515 = vmatprep.subr.mxu0 0.0
  %1516 = vmatpush1.msra.mxu0 0.0
  %1517 = vmatprep.subr.mxu0 0.0
  %1518 = vmatpush1.msra.mxu0 0.0
  %1519 = vmatprep.subr.mxu0 0.0
  %1520 = vmatpush1.msra.mxu0 0.0
  %1521 = vmatprep.subr.mxu0 0.0
  %1522 = vmatpush1.msra.mxu0 0.0
  %1523 = vmatprep.subr.mxu0 0.0
  %1524 = vmatpush1.msra.mxu0 0.0
  %1525 = vmatprep.subr.mxu0 0.0
  %1526 = vmatpush1.msra.mxu0 0.0
  %1527 = vmatprep.subr.mxu0 0.0
  %1528 = vmatpush1.msra.mxu0 0.0
  %1529 = vmatprep.subr.mxu0 0.0
  %1530 = vmatpush1.msra.mxu0 0.0
  %1531 = vmatprep.subr.mxu0 0.0
  %1532 = vmatpush1.msra.mxu0 0.0
  %1533 = vmatprep.subr.mxu0 0.0
  %1534 = vmatpush1.msra.mxu0 0.0
  %1535 = vmatprep.subr.mxu0 0.0
  %1536 = vmatpush1.msra.mxu0 0.0
  %1537 = vmatprep.subr.mxu0 0.0
  %1538 = vmatpush1.msra.mxu0 0.0
  %1539 = vmatprep.subr.mxu0 0.0
  %1540 = vmatpush1.msra.mxu0 0.0
  %1541 = vmatprep.subr.mxu0 0.0
  %1542 = vmatpush1.msra.mxu0 0.0
  %1543 = vmatprep.subr.mxu0 0.0
  %1544 = vmatpush1.msra.mxu0 0.0
  %1545 = vmatprep.subr.mxu0 0.0
  %1546 = vmatpush1.msra.mxu0 0.0
  %1547 = vmatprep.mubr.f32.mxu0 0.0
  %1548 = vmatmul.mubr.f32.gmra.mrb[0].mxu0 %v1478
  %v1549 = vpop.f32.mrb[0].mxu0
  %v1550 = vadd.f32 0.0, %v1549
  %v1551 = vpop.f32.mrb[0].mxu0
  %1552 = vmatprep.mubr.f32.mxu0 0.0
  %1553 = vmatmul.mubr.f32.gmra.mrb[0].mxu0 %v1481
  %v1554 = vpop.f32.mrb[0].mxu0
  %v1555 = vadd.f32 0.0, %v1554
  %v1556 = vpop.f32.mrb[0].mxu0
  %1557 = vdwg.mxu0
  %1558 = vmatprep.subr.mxu0 0.0
  %1559 = vmatpush1.msra.mxu0 1.0
  %1560 = vmatprep.subr.mxu0 0.0
  %1561 = vmatpush1.msra.mxu0 1.0
  %1562 = vmatprep.subr.mxu0 0.0
  %1563 = vmatpush1.msra.mxu0 0.0
  %1564 = vmatprep.subr.mxu0 0.0
  %1565 = vmatpush1.msra.mxu0 0.0
  %1566 = vmatprep.subr.mxu0 0.0
  %1567 = vmatpush1.msra.mxu0 0.0
  %1568 = vmatprep.subr.mxu0 0.0
  %1569 = vmatpush1.msra.mxu0 0.0
  %1570 = vmatprep.subr.mxu0 0.0
  %1571 = vmatpush1.msra.mxu0 0.0
  %1572 = vmatprep.subr.mxu0 0.0
  %1573 = vmatpush1.msra.mxu0 0.0
  %1574 = vmatprep.subr.mxu0 0.0
  %1575 = vmatpush1.msra.mxu0 0.0
  %1576 = vmatprep.subr.mxu0 0.0
  %1577 = vmatpush1.msra.mxu0 0.0
  %1578 = vmatprep.subr.mxu0 0.0
  %1579 = vmatpush1.msra.mxu0 0.0
  %1580 = vmatprep.subr.mxu0 0.0
  %1581 = vmatpush1.msra.mxu0 0.0
  %1582 = vmatprep.subr.mxu0 0.0
  %1583 = vmatpush1.msra.mxu0 0.0
  %1584 = vmatprep.subr.mxu0 0.0
  %1585 = vmatpush1.msra.mxu0 0.0
  %1586 = vmatprep.subr.mxu0 0.0
  %1587 = vmatpush1.msra.mxu0 0.0
  %1588 = vmatprep.subr.mxu0 0.0
  %1589 = vmatpush1.msra.mxu0 0.0
  %1590 = vmatprep.subr.mxu0 0.0
  %1591 = vmatpush1.msra.mxu0 0.0
  %1592 = vmatprep.subr.mxu0 0.0
  %1593 = vmatpush1.msra.mxu0 0.0
  %1594 = vmatprep.subr.mxu0 0.0
  %1595 = vmatpush1.msra.mxu0 0.0
  %1596 = vmatprep.subr.mxu0 0.0
  %1597 = vmatpush1.msra.mxu0 0.0
  %1598 = vmatprep.subr.mxu0 0.0
  %1599 = vmatpush1.msra.mxu0 0.0
  %1600 = vmatprep.subr.mxu0 0.0
  %1601 = vmatpush1.msra.mxu0 0.0
  %1602 = vmatprep.subr.mxu0 0.0
  %1603 = vmatpush1.msra.mxu0 0.0
  %1604 = vmatprep.subr.mxu0 0.0
  %1605 = vmatpush1.msra.mxu0 0.0
  %1606 = vmatprep.subr.mxu0 0.0
  %1607 = vmatpush1.msra.mxu0 0.0
  %1608 = vmatprep.subr.mxu0 0.0
  %1609 = vmatpush1.msra.mxu0 0.0
  %1610 = vmatprep.subr.mxu0 0.0
  %1611 = vmatpush1.msra.mxu0 0.0
  %1612 = vmatprep.subr.mxu0 0.0
  %1613 = vmatpush1.msra.mxu0 0.0
  %1614 = vmatprep.subr.mxu0 0.0
  %1615 = vmatpush1.msra.mxu0 0.0
  %1616 = vmatprep.subr.mxu0 0.0
  %1617 = vmatpush1.msra.mxu0 0.0
  %1618 = vmatprep.subr.mxu0 0.0
  %1619 = vmatpush1.msra.mxu0 0.0
  %1620 = vmatprep.subr.mxu0 0.0
  %1621 = vmatpush1.msra.mxu0 0.0
  %1622 = vmatprep.mubr.f32.mxu0 0.0
  %1623 = vmatmul.mubr.f32.gmra.mrb[0].mxu0 %v1397
  %v1624 = vpop.f32.mrb[0].mxu0
  %v1625 = vadd.f32 0.0, %v1624
  %v1626 = vpop.f32.mrb[0].mxu0
  %1627 = vmatprep.mubr.f32.mxu0 0.0
  %1628 = vmatmul.mubr.f32.gmra.mrb[0].mxu0 %v1400
  %v1629 = vpop.f32.mrb[0].mxu0
  %v1630 = vadd.f32 0.0, %v1629
  %v1631 = vpop.f32.mrb[0].mxu0
  %1632 = vdwg.mxu0
  %v1634 = vsel %vm915, %v1550, 0
  %v1637 = vsel %vm915, %v1555, 0
  %1639 = vmatprep.subr.mxu0 0.0
  %1640 = vmatpush1.msra.mxu0 %v1625
  %1641 = vmatprep.subr.mxu0 0.0
  %1642 = vmatpush1.msra.mxu0 %v1630
  %1643 = vmatprep.subr.mxu0 0.0
  %1644 = vmatpush1.msra.mxu0 0.0
  %1645 = vmatprep.subr.mxu0 0.0
  %1646 = vmatpush1.msra.mxu0 0.0
  %1647 = vmatprep.subr.mxu0 0.0
  %1648 = vmatpush1.msra.mxu0 0.0
  %1649 = vmatprep.subr.mxu0 0.0
  %1650 = vmatpush1.msra.mxu0 0.0
  %1651 = vmatprep.subr.mxu0 0.0
  %1652 = vmatpush1.msra.mxu0 0.0
  %1653 = vmatprep.subr.mxu0 0.0
  %1654 = vmatpush1.msra.mxu0 0.0
  %1655 = vmatprep.subr.mxu0 0.0
  %1656 = vmatpush1.msra.mxu0 0.0
  %1657 = vmatprep.subr.mxu0 0.0
  %1658 = vmatpush1.msra.mxu0 0.0
  %1659 = vmatprep.subr.mxu0 0.0
  %1660 = vmatpush1.msra.mxu0 0.0
  %1661 = vmatprep.subr.mxu0 0.0
  %1662 = vmatpush1.msra.mxu0 0.0
  %1663 = vmatprep.subr.mxu0 0.0
  %1664 = vmatpush1.msra.mxu0 0.0
  %1665 = vmatprep.subr.mxu0 0.0
  %1666 = vmatpush1.msra.mxu0 0.0
  %1667 = vmatprep.subr.mxu0 0.0
  %1668 = vmatpush1.msra.mxu0 0.0
  %1669 = vmatprep.subr.mxu0 0.0
  %1670 = vmatpush1.msra.mxu0 0.0
  %1671 = vmatprep.subr.mxu0 0.0
  %1672 = vmatpush1.msra.mxu0 0.0
  %1673 = vmatprep.subr.mxu0 0.0
  %1674 = vmatpush1.msra.mxu0 0.0
  %1675 = vmatprep.subr.mxu0 0.0
  %1676 = vmatpush1.msra.mxu0 0.0
  %1677 = vmatprep.subr.mxu0 0.0
  %1678 = vmatpush1.msra.mxu0 0.0
  %1679 = vmatprep.subr.mxu0 0.0
  %1680 = vmatpush1.msra.mxu0 0.0
  %1681 = vmatprep.subr.mxu0 0.0
  %1682 = vmatpush1.msra.mxu0 0.0
  %1683 = vmatprep.subr.mxu0 0.0
  %1684 = vmatpush1.msra.mxu0 0.0
  %1685 = vmatprep.subr.mxu0 0.0
  %1686 = vmatpush1.msra.mxu0 0.0
  %1687 = vmatprep.subr.mxu0 0.0
  %1688 = vmatpush1.msra.mxu0 0.0
  %1689 = vmatprep.subr.mxu0 0.0
  %1690 = vmatpush1.msra.mxu0 0.0
  %1691 = vmatprep.subr.mxu0 0.0
  %1692 = vmatpush1.msra.mxu0 0.0
  %1693 = vmatprep.subr.mxu0 0.0
  %1694 = vmatpush1.msra.mxu0 0.0
  %1695 = vmatprep.subr.mxu0 0.0
  %1696 = vmatpush1.msra.mxu0 0.0
  %1697 = vmatprep.subr.mxu0 0.0
  %1698 = vmatpush1.msra.mxu0 0.0
  %1699 = vmatprep.subr.mxu0 0.0
  %1700 = vmatpush1.msra.mxu0 0.0
  %1701 = vmatprep.subr.mxu0 0.0
  %1702 = vmatpush1.msra.mxu0 0.0
  %1703 = vmatprep.mubr.f32.mxu0 0.0
  %1704 = vmatmul.mubr.f32.gmra.mrb[0].mxu0 %v1634
  %v1705 = vpop.f32.mrb[0].mxu0
  %v1706 = vadd.f32 0.0, %v1705
  %v1707 = vpop.f32.mrb[0].mxu0
  %1708 = vmatprep.mubr.f32.mxu0 0.0
  %1709 = vmatmul.mubr.f32.gmra.mrb[0].mxu0 %v1637
  %v1710 = vpop.f32.mrb[0].mxu0
  %v1711 = vadd.f32 0.0, %v1710
  %v1712 = vpop.f32.mrb[0].mxu0
  %1713 = vdwg.mxu0
  %v1714 = vmul.f32 %v1706, %v1706
  %v1715 = vmul.f32 %v1711, %v1711
  %vm1716 = vcmask 7168
  %v1717 = vsel %vm1716, %v1714, 0.0
  %v1718 = vsel %vm1716, %v1715, 0.0
  %v1719 = vadd.f32 %v1717, %v1718
  %1720 = vadd.xlane.f32.xlu0 %v1719
  %v1721 = vpop.xlane.xlu0 %1720
  %v1722 = vrot.slane %v1721, 4
  %v1723 = vadd.f32 %v1721, %v1722
  %v1724 = vrot.slane %v1723, 2
  %v1725 = vadd.f32 %v1723, %v1724
  %v1726 = vrot.slane %v1725, 1
  %v1727 = vadd.f32 %v1725, %v1726
  %s1728 = vtos %v1727
  %s1729 = smax.f32 %s1728, 1e-24
  %v1730 = vstv %s1729
  %v1731 = vrsqrt.pop %v1730
  %s1732 = vtos %v1731
  %v1733 = vstv %s1732
  %v1734 = vmul.f32 %v1706, %v1733
  %v1735 = vmul.f32 %v1711, %v1733
  %1736 = vst [vmem:[%s6] sm:$0xff] 0.0
  %1737 = vst [vmem:[%s6 + $0x8] sm:$0xff] 0.0
  %1738 = vst [vmem:[%s6 + $0x10] sm:$0xff] 0.0
  %1739 = vst [vmem:[%s6 + $0x18] sm:$0xff] 0.0
  %1744 = vrot.lane.b32.xlu0 %v117, 96
  %v1745 = vpop.permute.xlu0 %1744
  %1746 = vrot.lane.b32.xlu0 %v122, 96
  %v1747 = vpop.permute.xlu0 %1746
  %1748 = vrot.lane.b32.xlu0 %v127, 96
  %v1749 = vpop.permute.xlu0 %1748
  %1750 = vrot.lane.b32.xlu0 %v132, 96
  %v1751 = vpop.permute.xlu0 %1750
  %1756 = vst.msk [vmem:[%s6] sm:$0xff] %vm37, %v1745
  %1757 = vst.msk [vmem:[%s6 + $0x8] sm:$0xff] %vm37, %v1747
  %1758 = vst.msk [vmem:[%s6 + $0x10] sm:$0xff] %vm37, %v1749
  %1759 = vst.msk [vmem:[%s6 + $0x18] sm:$0xff] %vm37, %v1751
  %1760 = vrot.lane.b32.xlu0 %v507, 32
  %v1761 = vpop.permute.xlu0 %1760
  %1762 = vrot.lane.b32.xlu0 %v509, 32
  %v1763 = vpop.permute.xlu0 %1762
  %1764 = vrot.lane.b32.xlu0 %v511, 32
  %v1765 = vpop.permute.xlu0 %1764
  %1766 = vrot.lane.b32.xlu0 %v513, 32
  %v1767 = vpop.permute.xlu0 %1766
  %vm1772 = vcmask 269568
  %1773 = vst.msk [vmem:[%s6] sm:$0xff] %vm1772, %v1761
  %1774 = vst.msk [vmem:[%s6 + $0x8] sm:$0xff] %vm1772, %v1763
  %1775 = vst.msk [vmem:[%s6 + $0x10] sm:$0xff] %vm1772, %v1765
  %1776 = vst.msk [vmem:[%s6 + $0x18] sm:$0xff] %vm1772, %v1767
  %1779 = vrot.lane.b32.xlu0 %v739, 64
  %v1780 = vpop.permute.xlu0 %1779
  %1781 = vrot.lane.b32.xlu0 %v740, 64
  %v1782 = vpop.permute.xlu0 %1781
  %vm1785 = vcmask 654848
  %1786 = vst.msk [vmem:[%s6] sm:$0xff] %vm1785, %v1780
  %1787 = vst.msk [vmem:[%s6 + $0x8] sm:$0xff] %vm1785, %v1782
  %1790 = vrot.lane.b32.xlu0 %v937, 80
  %v1791 = vpop.permute.xlu0 %1790
  %1792 = vrot.lane.b32.xlu0 %v938, 80
  %v1793 = vpop.permute.xlu0 %1792
  %vm1796 = vcmask 786048
  %1797 = vst.msk [vmem:[%s6] sm:$0xff] %vm1796, %v1791
  %1798 = vst.msk [vmem:[%s6 + $0x8] sm:$0xff] %vm1796, %v1793
  %1801 = vrot.lane.b32.xlu0 %v990, 96
  %v1802 = vpop.permute.xlu0 %1801
  %1803 = vrot.lane.b32.xlu0 %v991, 96
  %v1804 = vpop.permute.xlu0 %1803
  %vm1807 = vcmask 917248
  %1808 = vst.msk [vmem:[%s6] sm:$0xff] %vm1807, %v1802
  %1809 = vst.msk [vmem:[%s6 + $0x8] sm:$0xff] %vm1807, %v1804
  %1812 = vrot.lane.b32.xlu0 %v1734, 112
  %v1813 = vpop.permute.xlu0 %1812
  %1814 = vrot.lane.b32.xlu0 %v1735, 112
  %v1815 = vpop.permute.xlu0 %1814
  %vm1818 = vcmask 925568
  %1819 = vst.msk [vmem:[%s6] sm:$0xff] %vm1818, %v1813
  %1820 = vst.msk [vmem:[%s6 + $0x8] sm:$0xff] %vm1818, %v1815
  %1821 = vrot.lane.b32.xlu0 %v1067, 113
  %v1822 = vpop.permute.xlu0 %1821
  %1823 = vrot.lane.b32.xlu0 %v1072, 113
  %v1824 = vpop.permute.xlu0 %1823
  %vm1827 = vcmask 950152
  %1828 = vst.msk [vmem:[%s6] sm:$0xff] %vm1827, %v1822
  %1829 = vst.msk [vmem:[%s6 + $0x8] sm:$0xff] %vm1827, %v1824
  // Predicated region
  $region26: #{cast_forward.1} parent=0 // pred_check
    _
  $region27: #{cast_forward.1} parent=0 // pred_check_branch
    %1831 = sbr.rel (0) target = $region29
  $region28: #{cast_forward.1} parent=0 // pred_region
    _
  $region29: #{cast_forward.1} parent=0 // pred_fallthru
    _
  // Predicated region
  $region30: #{cast_forward.1} parent=0 // pred_check
    _
  $region31: #{cast_forward.1} parent=0 // pred_check_branch
    %1833 = sbr.rel (0) target = $region33
  $region32: #{cast_forward.1} parent=0 // pred_region
    _
  $region33: #{cast_forward.1} parent=0 // pred_fallthru
    _

</llo_original>
